<compile_context>
chip_gen: v5e
topology: v5e:2x2
jax: 0.10.0
libtpu: 0.0.40
codegen_flags: <defaults>
</compile_context>

<pallas_src>
import jax
import jax.numpy as jnp
from jax.experimental import pallas as pl
from jax.experimental.pallas import tpu as pltpu

_MiB = 1024 * 1024


# ------------------------------- kernels -----------------------------------

def _blockdiag_kernel(q_ref, rhs_ref, o_ref):
    """Primary path.  One grid step handles BN batch*head rows.

    q_ref  : (BN, h*w*d)    queries, row-major (x, y, d) on the lane axis
    rhs_ref: (h, w*d, w*L)  per-row-x block-diagonal RHS (height+width fused)
    o_ref  : (BN, h*w*L)    output, row-major (x, y, u, v) on the lane axis
    """
    h, wd, wl = rhs_ref.shape
    # Static unroll: each per-x result is stored immediately, so at most one
    # (BN, w*L) f32 matmul result is live at a time (no vreg-spill pressure).
    # TODO(synk): switch to lax.fori_loop + pl.ds for very large h.
    for x in range(h):
        qx = q_ref[:, x * wd:(x + 1) * wd]                        # (BN, w*d)
        row = jax.lax.dot_general(
            qx, rhs_ref[x],
            dimension_numbers=(((1,), (0,)), ((), ())),
            preferred_element_type=jnp.float32)                   # (BN, w*L)
        o_ref[:, x * wl:(x + 1) * wl] = row.astype(o_ref.dtype)   # dense vst


def _two_pass_kernel(q_ref, he_ref, we_ref, o_ref, ws_ref):
    """Fallback path (block-diagonal RHS would not fit VMEM).

    q_ref : (BN, h, w, d)
    he_ref: (h, d, L)   he_exp[x, d, u*w+v] = he[x, u, d]
    we_ref: (w, d, L)   we_exp[y, d, u*w+v] = we[y, v, d]
    o_ref : (BN, h, w, L)
    ws_ref: (BN, h, w, L) f32 scratch holding the width score
    """
    bn, h, w, d = q_ref.shape
    # Pass 1: width score into f32 VMEM scratch (keeps accumulation in f32,
    # avoids the HBM-block RMW of v1).
    for y in range(w):
        ws_ref[:, :, y, :] = jax.lax.dot_general(
            q_ref[:, :, y, :], we_ref[y],
            dimension_numbers=(((2,), (0,)), ((), ())),
            preferred_element_type=jnp.float32)
    # Pass 2: height score + scratch, ONE dense (BN, w, L) store per row x;
    # o_ref is written exactly once per element, in out_dtype.
    for x in range(h):
        hs_x = jax.lax.dot_general(
            q_ref[:, x, :, :], he_ref[x],
            dimension_numbers=(((2,), (0,)), ((), ())),
            preferred_element_type=jnp.float32)                   # (BN, w, L)
        o_ref[:, x, :, :] = (hs_x + ws_ref[:, x, :, :]).astype(o_ref.dtype)


# ------------------------------- helpers ------------------------------------

def _vmem_budget():
    """(vmem_limit_bytes, sizing_budget_bytes, two_tensorcores)."""
    cap = 64 * _MiB                       # conservative default (v7x per-core)
    try:
        info = pltpu.get_tpu_info()
        c = getattr(info, "vmem_capacity_bytes", None)
        if c:
            cap = int(c)
    except Exception:
        pass
    # Heuristic generation gate: 64 MiB/core => v7x (2 TensorCores/chip);
    # 128 MiB => v5e/v6e (single TensorCore).
    two_cores = cap <= 80 * _MiB
    vmem_limit = max(32 * _MiB, min(cap - 12 * _MiB, 108 * _MiB))
    budget = vmem_limit - 6 * _MiB        # headroom for Mosaic internal scratch
    return vmem_limit, budget, two_cores


def _pick_bn_block(bn, per_slice_bytes, resident_bytes, budget_bytes,
                   want_two_steps, multiple_of_8):
    """Largest feasible batch*head block size (a divisor of bn)."""
    avail = max(budget_bytes - resident_bytes, per_slice_bytes)
    max_blk = max(1, avail // per_slice_bytes)
    if multiple_of_8:
        # (bn_blk, lanes) 2-D blocks: the sublane dim must be a multiple of 8
        # unless it spans the whole array.
        cands = [bn] + [blk for blk in range(8, bn, 8) if bn % blk == 0]
    else:
        cands = [blk for blk in range(1, bn + 1) if bn % blk == 0]
    cands = sorted(set(cands))
    if want_two_steps and bn > 1:
        half = [c for c in cands if c <= max_blk and c <= bn // 2]
        if half:
            return max(half)              # >=2 grid steps -> both v7x cores
    feas = [c for c in cands if c <= max_blk]
    if feas:
        return max(feas)
    return None if multiple_of_8 else 1


def _resident_spec(shape, single_buffer):
    index_map = lambda i: (0,) * len(shape)
    if single_buffer:
        # Grid-invariant input: single-buffer it to reclaim VMEM.
        return pl.BlockSpec(shape, index_map, pipeline_mode=pl.Buffered(1))
    return pl.BlockSpec(shape, index_map)


# ------------------------------- wrapper ------------------------------------

def rel_pos_emb(q, rel_height_weight, rel_width_weight, max_pos_size,
                *, compute_dtype=None, out_dtype=jnp.float32,
                force_general=False):
    """q: (b, heads, h, w, d); weights: (2*max_pos_size-1, d).

    compute_dtype: jnp.bfloat16 recommended on v5e/v6e (native MXU rate, half
                   the q/embedding DMA bytes); accumulation stays f32.
    out_dtype:     jnp.bfloat16 on v5e halves the dominant HBM store stream.
    """
    b, heads, h, w, d = q.shape
    bn = b * heads
    L = h * w
    cdtype = jnp.dtype(compute_dtype) if compute_dtype is not None else jnp.dtype(q.dtype)
    odtype = jnp.dtype(out_dtype)
    in_item, out_item = cdtype.itemsize, odtype.itemsize

    # --- embedding gather + lane expansion (tiny; plain XLA glue) -----------
    deltas = jnp.arange(max_pos_size)[None, :] - jnp.arange(max_pos_size)[:, None]
    rel_ind = deltas + max_pos_size - 1                        # (P, P)
    he = rel_height_weight[rel_ind[:h, :h]]                    # (h, h, d): [x, u, d]
    we = rel_width_weight[rel_ind[:w, :w]]                     # (w, w, d): [y, v, d]
    # he_exp[x, d, u*w+v] = he[x, u, d];  we_exp[y, d, u*w+v] = we[y, v, d]
    he_exp = jnp.repeat(jnp.transpose(he, (0, 2, 1)), w, axis=-1)   # (h, d, L)
    we_exp = jnp.tile(jnp.transpose(we, (0, 2, 1)), (1, 1, h))      # (w, d, L)

    vmem_limit, budget, two_cores = _vmem_budget()

    rhs_bytes = h * (w * d) * (w * L) * in_item
    use_blockdiag = (not force_general) and rhs_bytes <= min(16 * _MiB, budget // 3)

    bn_blk = None
    if use_blockdiag:
        per_slice = 2 * h * w * (d * in_item + L * out_item)   # dbl-buffered q + out
        bn_blk = _pick_bn_block(bn, per_slice, 2 * rhs_bytes, budget,
                                two_cores, multiple_of_8=True)
        if bn_blk is None:
            use_blockdiag = False

    if use_blockdiag:
        # RHS_x = blockdiag_y(he_exp[x] + we_exp[y]) of shape (w*d, w*L).
        blk = (he_exp[:, None].astype(jnp.float32)
               + we_exp[None, :].astype(jnp.float32))           # (h, y, d, L)
        blk = jnp.transpose(blk, (0, 2, 1, 3))                  # (h, d, y, L)
        eye = jnp.eye(w, dtype=jnp.float32)                     # (y', y)
        rhs = eye[None, :, None, :, None] * blk[:, None]        # (h, y', d, y, L)
        rhs = rhs.reshape(h, w * d, w * L).astype(cdtype)

        qf = q.reshape(bn, h * w * d).astype(cdtype)

        cost = pl.CostEstimate(
            flops=2 * bn * h * (w * d) * (w * L),
            transcendentals=0,
            bytes_accessed=(qf.size + rhs.size) * in_item
                           + bn * h * w * L * out_item)

        def run(single_buffer):
            return pl.pallas_call(
                _blockdiag_kernel,
                out_shape=jax.ShapeDtypeStruct((bn, h * w * L), odtype),
                grid_spec=pltpu.PrefetchScalarGridSpec(
                    num_scalar_prefetch=0,
                    grid=(bn // bn_blk,),
                    in_specs=[
                        pl.BlockSpec((bn_blk, h * w * d), lambda i: (i, 0)),
                        _resident_spec((h, w * d, w * L), single_buffer),
                    ],
                    out_specs=pl.BlockSpec((bn_blk, h * w * L), lambda i: (i, 0)),
                ),
                compiler_params=pltpu.CompilerParams(
                    dimension_semantics=("parallel",),
                    vmem_limit_bytes=vmem_limit),
                cost_estimate=cost,
            )(qf, rhs)

        try:
            out = run(True)
        except Exception:
            out = run(False)     # retry without single-buffered resident input
        return out.reshape(b, heads, h, w, h, w)

    # ---------------- fallback: two-pass with f32 scratch -------------------
    # TODO(synk): for very large h*w (e.g. optical-flow feature maps) even the
    # expanded embeddings outgrow VMEM; that regime needs the (u,v) lane axis
    # tiled over the grid as well.
    he_exp = he_exp.astype(cdtype)
    we_exp = we_exp.astype(cdtype)
    qf = q.reshape(bn, h, w, d).astype(cdtype)

    per_slice = (2 * h * w * (d * in_item + L * out_item)       # dbl-buffered q + out
                 + h * w * L * 4)                               # f32 width-score scratch
    resident = 2 * (h + w) * d * L * in_item
    bn_blk = _pick_bn_block(bn, per_slice, resident, budget,
                            two_cores, multiple_of_8=False)

    cost = pl.CostEstimate(
        flops=4 * bn * h * w * d * L,
        transcendentals=0,
        bytes_accessed=(qf.size + he_exp.size + we_exp.size) * in_item
                       + bn * h * w * L * out_item)

    def run_fb(single_buffer):
        return pl.pallas_call(
            _two_pass_kernel,
            out_shape=jax.ShapeDtypeStruct((bn, h, w, L), odtype),
            grid_spec=pltpu.PrefetchScalarGridSpec(
                num_scalar_prefetch=0,
                grid=(bn // bn_blk,),
                in_specs=[
                    pl.BlockSpec((bn_blk, h, w, d), lambda i: (i, 0, 0, 0)),
                    _resident_spec((h, d, L), single_buffer),
                    _resident_spec((w, d, L), single_buffer),
                ],
                out_specs=pl.BlockSpec((bn_blk, h, w, L), lambda i: (i, 0, 0, 0)),
                scratch_shapes=[pltpu.VMEM((bn_blk, h, w, L), jnp.float32)],
            ),
            compiler_params=pltpu.CompilerParams(
                dimension_semantics=("parallel",),
                vmem_limit_bytes=vmem_limit),
            cost_estimate=cost,
        )(qf, he_exp, we_exp)

    try:
        out = run_fb(True)
    except Exception:
        out = run_fb(False)
    return out.reshape(b, heads, h, w, h, w)


# ------------------------------- reference ----------------------------------

def _reference(q, rel_height_weight, rel_width_weight, max_pos_size):
    b, heads, h, w, d = q.shape
    deltas = jnp.arange(max_pos_size)[None, :] - jnp.arange(max_pos_size)[:, None]
    rel_ind = deltas + max_pos_size - 1
    he = rel_height_weight[rel_ind[:h, :h]]        # (h, h, d): x u d
    we = rel_width_weight[rel_ind[:w, :w]]         # (w, w, d): y v d
    hs = jnp.einsum('bhxyd,xud->bhxyu', q, he)
    ws = jnp.einsum('bhxyd,yvd->bhxyv', q, we)
    return hs[..., :, None] + ws[..., None, :]


if __name__ == "__main__":
    batch, heads, h, w, dim_head = 2, 2, 8, 8, 32
    max_pos_size = 16    # only rel_ind[:h,:h] / [:w,:w] is used

    key = jax.random.PRNGKey(0)
    kq, kh, kw = jax.random.split(key, 3)
    q = jax.random.normal(kq, (batch, heads, h, w, dim_head), dtype=jnp.float32)
    rel_height_weight = jax.random.normal(kh, (2 * max_pos_size - 1, dim_head),
                                          dtype=jnp.float32)
    rel_width_weight = jax.random.normal(kw, (2 * max_pos_size - 1, dim_head),
                                         dtype=jnp.float32)

    ref = _reference(q, rel_height_weight, rel_width_weight, max_pos_size)

    # Primary (block-diagonal, fully dense store) path, f32.
    out = rel_pos_emb(q, rel_height_weight, rel_width_weight, max_pos_size)
    out = jax.block_until_ready(out)
    assert out.shape == (batch, heads, h, w, h, w)
    err = float(jnp.max(jnp.abs(out - ref)))
    assert jnp.allclose(out, ref, atol=5e-3, rtol=1e-3), f"blockdiag err = {err}"

    # General fallback path (f32 scratch accumulation, dense per-row stores).
    out_fb = rel_pos_emb(q, rel_height_weight, rel_width_weight, max_pos_size,
                         force_general=True)
    out_fb = jax.block_until_ready(out_fb)
    err_fb = float(jnp.max(jnp.abs(out_fb - ref)))
    assert jnp.allclose(out_fb, ref, atol=5e-3, rtol=1e-3), f"fallback err = {err_fb}"

    # bf16-compute variant (f32 accumulation) -- the v5e/v6e recommendation.
    out_bf = rel_pos_emb(q, rel_height_weight, rel_width_weight, max_pos_size,
                         compute_dtype=jnp.bfloat16)
    out_bf = jax.block_until_ready(out_bf)
    err_bf = float(jnp.max(jnp.abs(out_bf - ref)))
    assert jnp.allclose(out_bf, ref, atol=0.5, rtol=0.05), f"bf16 err = {err_bf}"

    print("KERNEL_OK")
</pallas_src>

<mosaic_0001>
module attributes {stable_mosaic.version = 11 : i64} {
  func.func @_blockdiag_kernel(%arg0: i32, %arg1: memref<4x2048xf32, #tpu.memory_space<vmem>>, %arg2: memref<8x256x512xf32, #tpu.memory_space<vmem>>, %arg3: memref<4x4096xf32, #tpu.memory_space<vmem>>) attributes {dimension_semantics = [#tpu.dimension_semantics<parallel>], iteration_bounds = array<i64: 1>, scalar_prefetch = 0 : i64, scratch_operands = 0 : i64, tpu.core_type = #tpu.core_type<tc>, window_params = [{transform_indices = @transform_0, window_bounds = array<i64: 4, 2048>}, {pipeline_mode = #tpu.pipeline_mode<synchronous>, transform_indices = @transform_1, window_bounds = array<i64: 8, 256, 512>}, {transform_indices = @transform_2, window_bounds = array<i64: 4, 4096>}]} {
    %c0 = arith.constant 0 : index
    %c0_0 = arith.constant 0 : index
    %0 = vector.load %arg1[%c0, %c0_0] : memref<4x2048xf32, #tpu.memory_space<vmem>>, vector<4x256xf32>
    %c0_1 = arith.constant 0 : index
    %c0_2 = arith.constant 0 : index
    %c0_3 = arith.constant 0 : index
    %1 = vector.load %arg2[%c0_1, %c0_2, %c0_3] : memref<8x256x512xf32, #tpu.memory_space<vmem>>, vector<1x256x512xf32>
    %2 = vector.shape_cast %1 : vector<1x256x512xf32> to vector<256x512xf32>
    %cst = arith.constant dense<0.000000e+00> : vector<4x512xf32>
    %3 = tpu.matmul %0, %2, %cst {dimension_numbers = #tpu.dot_dimension_numbers<[1], [0], [0], [1], [0, 0, 1, 1], [], []>} : vector<4x256xf32>, vector<256x512xf32>, vector<4x512xf32> -> vector<4x512xf32>
    %c0_4 = arith.constant 0 : index
    %c0_5 = arith.constant 0 : index
    %4 = vector.load %arg3[%c0_4, %c0_5] : memref<4x4096xf32, #tpu.memory_space<vmem>>, vector<4x512xf32>
    tpu.vector_store %arg3[%c0_4, %c0_5], %3 {strides = array<i32>} : memref<4x4096xf32, #tpu.memory_space<vmem>>, vector<4x512xf32>,
    %c0_6 = arith.constant 0 : index
    %c256 = arith.constant 256 : index
    %5 = vector.load %arg1[%c0_6, %c256] : memref<4x2048xf32, #tpu.memory_space<vmem>>, vector<4x256xf32>
    %c1 = arith.constant 1 : index
    %c0_7 = arith.constant 0 : index
    %c0_8 = arith.constant 0 : index
    %6 = vector.load %arg2[%c1, %c0_7, %c0_8] : memref<8x256x512xf32, #tpu.memory_space<vmem>>, vector<1x256x512xf32>
    %7 = vector.shape_cast %6 : vector<1x256x512xf32> to vector<256x512xf32>
    %cst_9 = arith.constant dense<0.000000e+00> : vector<4x512xf32>
    %8 = tpu.matmul %5, %7, %cst_9 {dimension_numbers = #tpu.dot_dimension_numbers<[1], [0], [0], [1], [0, 0, 1, 1], [], []>} : vector<4x256xf32>, vector<256x512xf32>, vector<4x512xf32> -> vector<4x512xf32>
    %c0_10 = arith.constant 0 : index
    %c512 = arith.constant 512 : index
    %9 = vector.load %arg3[%c0_10, %c512] : memref<4x4096xf32, #tpu.memory_space<vmem>>, vector<4x512xf32>
    tpu.vector_store %arg3[%c0_10, %c512], %8 {strides = array<i32>} : memref<4x4096xf32, #tpu.memory_space<vmem>>, vector<4x512xf32>,
    %c0_11 = arith.constant 0 : index
    %c512_12 = arith.constant 512 : index
    %10 = vector.load %arg1[%c0_11, %c512_12] : memref<4x2048xf32, #tpu.memory_space<vmem>>, vector<4x256xf32>
    %c2 = arith.constant 2 : index
    %c0_13 = arith.constant 0 : index
    %c0_14 = arith.constant 0 : index
    %11 = vector.load %arg2[%c2, %c0_13, %c0_14] : memref<8x256x512xf32, #tpu.memory_space<vmem>>, vector<1x256x512xf32>
    %12 = vector.shape_cast %11 : vector<1x256x512xf32> to vector<256x512xf32>
    %cst_15 = arith.constant dense<0.000000e+00> : vector<4x512xf32>
    %13 = tpu.matmul %10, %12, %cst_15 {dimension_numbers = #tpu.dot_dimension_numbers<[1], [0], [0], [1], [0, 0, 1, 1], [], []>} : vector<4x256xf32>, vector<256x512xf32>, vector<4x512xf32> -> vector<4x512xf32>
    %c0_16 = arith.constant 0 : index
    %c1024 = arith.constant 1024 : index
    %14 = vector.load %arg3[%c0_16, %c1024] : memref<4x4096xf32, #tpu.memory_space<vmem>>, vector<4x512xf32>
    tpu.vector_store %arg3[%c0_16, %c1024], %13 {strides = array<i32>} : memref<4x4096xf32, #tpu.memory_space<vmem>>, vector<4x512xf32>,
    %c0_17 = arith.constant 0 : index
    %c768 = arith.constant 768 : index
    %15 = vector.load %arg1[%c0_17, %c768] : memref<4x2048xf32, #tpu.memory_space<vmem>>, vector<4x256xf32>
    %c3 = arith.constant 3 : index
    %c0_18 = arith.constant 0 : index
    %c0_19 = arith.constant 0 : index
    %16 = vector.load %arg2[%c3, %c0_18, %c0_19] : memref<8x256x512xf32, #tpu.memory_space<vmem>>, vector<1x256x512xf32>
    %17 = vector.shape_cast %16 : vector<1x256x512xf32> to vector<256x512xf32>
    %cst_20 = arith.constant dense<0.000000e+00> : vector<4x512xf32>
    %18 = tpu.matmul %15, %17, %cst_20 {dimension_numbers = #tpu.dot_dimension_numbers<[1], [0], [0], [1], [0, 0, 1, 1], [], []>} : vector<4x256xf32>, vector<256x512xf32>, vector<4x512xf32> -> vector<4x512xf32>
    %c0_21 = arith.constant 0 : index
    %c1536 = arith.constant 1536 : index
    %19 = vector.load %arg3[%c0_21, %c1536] : memref<4x4096xf32, #tpu.memory_space<vmem>>, vector<4x512xf32>
    tpu.vector_store %arg3[%c0_21, %c1536], %18 {strides = array<i32>} : memref<4x4096xf32, #tpu.memory_space<vmem>>, vector<4x512xf32>,
    %c0_22 = arith.constant 0 : index
    %c1024_23 = arith.constant 1024 : index
    %20 = vector.load %arg1[%c0_22, %c1024_23] : memref<4x2048xf32, #tpu.memory_space<vmem>>, vector<4x256xf32>
    %c4 = arith.constant 4 : index
    %c0_24 = arith.constant 0 : index
    %c0_25 = arith.constant 0 : index
    %21 = vector.load %arg2[%c4, %c0_24, %c0_25] : memref<8x256x512xf32, #tpu.memory_space<vmem>>, vector<1x256x512xf32>
    %22 = vector.shape_cast %21 : vector<1x256x512xf32> to vector<256x512xf32>
    %cst_26 = arith.constant dense<0.000000e+00> : vector<4x512xf32>
    %23 = tpu.matmul %20, %22, %cst_26 {dimension_numbers = #tpu.dot_dimension_numbers<[1], [0], [0], [1], [0, 0, 1, 1], [], []>} : vector<4x256xf32>, vector<256x512xf32>, vector<4x512xf32> -> vector<4x512xf32>
    %c0_27 = arith.constant 0 : index
    %c2048 = arith.constant 2048 : index
    %24 = vector.load %arg3[%c0_27, %c2048] : memref<4x4096xf32, #tpu.memory_space<vmem>>, vector<4x512xf32>
    tpu.vector_store %arg3[%c0_27, %c2048], %23 {strides = array<i32>} : memref<4x4096xf32, #tpu.memory_space<vmem>>, vector<4x512xf32>,
    %c0_28 = arith.constant 0 : index
    %c1280 = arith.constant 1280 : index
    %25 = vector.load %arg1[%c0_28, %c1280] : memref<4x2048xf32, #tpu.memory_space<vmem>>, vector<4x256xf32>
    %c5 = arith.constant 5 : index
    %c0_29 = arith.constant 0 : index
    %c0_30 = arith.constant 0 : index
    %26 = vector.load %arg2[%c5, %c0_29, %c0_30] : memref<8x256x512xf32, #tpu.memory_space<vmem>>, vector<1x256x512xf32>
    %27 = vector.shape_cast %26 : vector<1x256x512xf32> to vector<256x512xf32>
    %cst_31 = arith.constant dense<0.000000e+00> : vector<4x512xf32>
    %28 = tpu.matmul %25, %27, %cst_31 {dimension_numbers = #tpu.dot_dimension_numbers<[1], [0], [0], [1], [0, 0, 1, 1], [], []>} : vector<4x256xf32>, vector<256x512xf32>, vector<4x512xf32> -> vector<4x512xf32>
    %c0_32 = arith.constant 0 : index
    %c2560 = arith.constant 2560 : index
    %29 = vector.load %arg3[%c0_32, %c2560] : memref<4x4096xf32, #tpu.memory_space<vmem>>, vector<4x512xf32>
    tpu.vector_store %arg3[%c0_32, %c2560], %28 {strides = array<i32>} : memref<4x4096xf32, #tpu.memory_space<vmem>>, vector<4x512xf32>,
    %c0_33 = arith.constant 0 : index
    %c1536_34 = arith.constant 1536 : index
    %30 = vector.load %arg1[%c0_33, %c1536_34] : memref<4x2048xf32, #tpu.memory_space<vmem>>, vector<4x256xf32>
    %c6 = arith.constant 6 : index
    %c0_35 = arith.constant 0 : index
    %c0_36 = arith.constant 0 : index
    %31 = vector.load %arg2[%c6, %c0_35, %c0_36] : memref<8x256x512xf32, #tpu.memory_space<vmem>>, vector<1x256x512xf32>
    %32 = vector.shape_cast %31 : vector<1x256x512xf32> to vector<256x512xf32>
    %cst_37 = arith.constant dense<0.000000e+00> : vector<4x512xf32>
    %33 = tpu.matmul %30, %32, %cst_37 {dimension_numbers = #tpu.dot_dimension_numbers<[1], [0], [0], [1], [0, 0, 1, 1], [], []>} : vector<4x256xf32>, vector<256x512xf32>, vector<4x512xf32> -> vector<4x512xf32>
    %c0_38 = arith.constant 0 : index
    %c3072 = arith.constant 3072 : index
    %34 = vector.load %arg3[%c0_38, %c3072] : memref<4x4096xf32, #tpu.memory_space<vmem>>, vector<4x512xf32>
    tpu.vector_store %arg3[%c0_38, %c3072], %33 {strides = array<i32>} : memref<4x4096xf32, #tpu.memory_space<vmem>>, vector<4x512xf32>,
    %c0_39 = arith.constant 0 : index
    %c1792 = arith.constant 1792 : index
    %35 = vector.load %arg1[%c0_39, %c1792] : memref<4x2048xf32, #tpu.memory_space<vmem>>, vector<4x256xf32>
    %c7 = arith.constant 7 : index
    %c0_40 = arith.constant 0 : index
    %c0_41 = arith.constant 0 : index
    %36 = vector.load %arg2[%c7, %c0_40, %c0_41] : memref<8x256x512xf32, #tpu.memory_space<vmem>>, vector<1x256x512xf32>
    %37 = vector.shape_cast %36 : vector<1x256x512xf32> to vector<256x512xf32>
    %cst_42 = arith.constant dense<0.000000e+00> : vector<4x512xf32>
    %38 = tpu.matmul %35, %37, %cst_42 {dimension_numbers = #tpu.dot_dimension_numbers<[1], [0], [0], [1], [0, 0, 1, 1], [], []>} : vector<4x256xf32>, vector<256x512xf32>, vector<4x512xf32> -> vector<4x512xf32>
    %c0_43 = arith.constant 0 : index
    %c3584 = arith.constant 3584 : index
    %39 = vector.load %arg3[%c0_43, %c3584] : memref<4x4096xf32, #tpu.memory_space<vmem>>, vector<4x512xf32>
    tpu.vector_store %arg3[%c0_43, %c3584], %38 {strides = array<i32>} : memref<4x4096xf32, #tpu.memory_space<vmem>>, vector<4x512xf32>,
    return
  }
  func.func @transform_0(%arg0: i32) -> (i32, i32) {
    %c0_i32 = arith.constant 0 : i32
    %c0_i32_0 = arith.constant 0 : i32
    return %arg0, %c0_i32 : i32, i32
  }
  func.func @transform_1(%arg0: i32) -> (i32, i32, i32) {
    %c0_i32 = arith.constant 0 : i32
    %c0_i32_0 = arith.constant 0 : i32
    %c0_i32_1 = arith.constant 0 : i32
    %c0_i32_2 = arith.constant 0 : i32
    return %c0_i32, %c0_i32_0, %c0_i32_1 : i32, i32, i32
  }
  func.func @transform_2(%arg0: i32) -> (i32, i32) {
    %c0_i32 = arith.constant 0 : i32
    %c0_i32_0 = arith.constant 0 : i32
    return %arg0, %c0_i32 : i32, i32
  }
}

module attributes {stable_mosaic.version = 11 : i64} {
  func.func @_blockdiag_kernel(%arg0: i32, %arg1: memref<4x2048xf32, #tpu.memory_space<vmem>>, %arg2: memref<8x256x512xf32, #tpu.memory_space<vmem>>, %arg3: memref<4x4096xf32, #tpu.memory_space<vmem>>) attributes {dimension_semantics = [#tpu.dimension_semantics<parallel>], iteration_bounds = array<i64: 1>, scalar_prefetch = 0 : i64, scratch_operands = 0 : i64, tpu.core_type = #tpu.core_type<tc>, window_params = [{transform_indices = @transform_0, window_bounds = array<i64: 4, 2048>}, {pipeline_mode = #tpu.pipeline_mode<synchronous>, transform_indices = @transform_1, window_bounds = array<i64: 8, 256, 512>}, {transform_indices = @transform_2, window_bounds = array<i64: 4, 4096>}]} {
    %c0 = arith.constant 0 : index
    %c0_0 = arith.constant 0 : index
    %0 = vector.load %arg1[%c0, %c0_0] : memref<4x2048xf32, #tpu.memory_space<vmem>>, vector<4x256xf32>
    %c0_1 = arith.constant 0 : index
    %c0_2 = arith.constant 0 : index
    %c0_3 = arith.constant 0 : index
    %1 = vector.load %arg2[%c0_1, %c0_2, %c0_3] : memref<8x256x512xf32, #tpu.memory_space<vmem>>, vector<1x256x512xf32>
    %2 = vector.shape_cast %1 : vector<1x256x512xf32> to vector<256x512xf32>
    %cst = arith.constant dense<0.000000e+00> : vector<4x512xf32>
    %3 = tpu.matmul %0, %2, %cst {dimension_numbers = #tpu.dot_dimension_numbers<[1], [0], [0], [1], [0, 0, 1, 1], [], []>} : vector<4x256xf32>, vector<256x512xf32>, vector<4x512xf32> -> vector<4x512xf32>
    %c0_4 = arith.constant 0 : index
    %c0_5 = arith.constant 0 : index
    %4 = vector.load %arg3[%c0_4, %c0_5] : memref<4x4096xf32, #tpu.memory_space<vmem>>, vector<4x512xf32>
    tpu.vector_store %arg3[%c0_4, %c0_5], %3 {strides = array<i32>} : memref<4x4096xf32, #tpu.memory_space<vmem>>, vector<4x512xf32>,
    %c0_6 = arith.constant 0 : index
    %c256 = arith.constant 256 : index
    %5 = vector.load %arg1[%c0_6, %c256] : memref<4x2048xf32, #tpu.memory_space<vmem>>, vector<4x256xf32>
    %c1 = arith.constant 1 : index
    %c0_7 = arith.constant 0 : index
    %c0_8 = arith.constant 0 : index
    %6 = vector.load %arg2[%c1, %c0_7, %c0_8] : memref<8x256x512xf32, #tpu.memory_space<vmem>>, vector<1x256x512xf32>
    %7 = vector.shape_cast %6 : vector<1x256x512xf32> to vector<256x512xf32>
    %cst_9 = arith.constant dense<0.000000e+00> : vector<4x512xf32>
    %8 = tpu.matmul %5, %7, %cst_9 {dimension_numbers = #tpu.dot_dimension_numbers<[1], [0], [0], [1], [0, 0, 1, 1], [], []>} : vector<4x256xf32>, vector<256x512xf32>, vector<4x512xf32> -> vector<4x512xf32>
    %c0_10 = arith.constant 0 : index
    %c512 = arith.constant 512 : index
    %9 = vector.load %arg3[%c0_10, %c512] : memref<4x4096xf32, #tpu.memory_space<vmem>>, vector<4x512xf32>
    tpu.vector_store %arg3[%c0_10, %c512], %8 {strides = array<i32>} : memref<4x4096xf32, #tpu.memory_space<vmem>>, vector<4x512xf32>,
    %c0_11 = arith.constant 0 : index
    %c512_12 = arith.constant 512 : index
    %10 = vector.load %arg1[%c0_11, %c512_12] : memref<4x2048xf32, #tpu.memory_space<vmem>>, vector<4x256xf32>
    %c2 = arith.constant 2 : index
    %c0_13 = arith.constant 0 : index
    %c0_14 = arith.constant 0 : index
    %11 = vector.load %arg2[%c2, %c0_13, %c0_14] : memref<8x256x512xf32, #tpu.memory_space<vmem>>, vector<1x256x512xf32>
    %12 = vector.shape_cast %11 : vector<1x256x512xf32> to vector<256x512xf32>
    %cst_15 = arith.constant dense<0.000000e+00> : vector<4x512xf32>
    %13 = tpu.matmul %10, %12, %cst_15 {dimension_numbers = #tpu.dot_dimension_numbers<[1], [0], [0], [1], [0, 0, 1, 1], [], []>} : vector<4x256xf32>, vector<256x512xf32>, vector<4x512xf32> -> vector<4x512xf32>
    %c0_16 = arith.constant 0 : index
    %c1024 = arith.constant 1024 : index
    %14 = vector.load %arg3[%c0_16, %c1024] : memref<4x4096xf32, #tpu.memory_space<vmem>>, vector<4x512xf32>
    tpu.vector_store %arg3[%c0_16, %c1024], %13 {strides = array<i32>} : memref<4x4096xf32, #tpu.memory_space<vmem>>, vector<4x512xf32>,
    %c0_17 = arith.constant 0 : index
    %c768 = arith.constant 768 : index
    %15 = vector.load %arg1[%c0_17, %c768] : memref<4x2048xf32, #tpu.memory_space<vmem>>, vector<4x256xf32>
    %c3 = arith.constant 3 : index
    %c0_18 = arith.constant 0 : index
    %c0_19 = arith.constant 0 : index
    %16 = vector.load %arg2[%c3, %c0_18, %c0_19] : memref<8x256x512xf32, #tpu.memory_space<vmem>>, vector<1x256x512xf32>
    %17 = vector.shape_cast %16 : vector<1x256x512xf32> to vector<256x512xf32>
    %cst_20 = arith.constant dense<0.000000e+00> : vector<4x512xf32>
    %18 = tpu.matmul %15, %17, %cst_20 {dimension_numbers = #tpu.dot_dimension_numbers<[1], [0], [0], [1], [0, 0, 1, 1], [], []>} : vector<4x256xf32>, vector<256x512xf32>, vector<4x512xf32> -> vector<4x512xf32>
    %c0_21 = arith.constant 0 : index
    %c1536 = arith.constant 1536 : index
    %19 = vector.load %arg3[%c0_21, %c1536] : memref<4x4096xf32, #tpu.memory_space<vmem>>, vector<4x512xf32>
    tpu.vector_store %arg3[%c0_21, %c1536], %18 {strides = array<i32>} : memref<4x4096xf32, #tpu.memory_space<vmem>>, vector<4x512xf32>,
    %c0_22 = arith.constant 0 : index
    %c1024_23 = arith.constant 1024 : index
    %20 = vector.load %arg1[%c0_22, %c1024_23] : memref<4x2048xf32, #tpu.memory_space<vmem>>, vector<4x256xf32>
    %c4 = arith.constant 4 : index
    %c0_24 = arith.constant 0 : index
    %c0_25 = arith.constant 0 : index
    %21 = vector.load %arg2[%c4, %c0_24, %c0_25] : memref<8x256x512xf32, #tpu.memory_space<vmem>>, vector<1x256x512xf32>
    %22 = vector.shape_cast %21 : vector<1x256x512xf32> to vector<256x512xf32>
    %cst_26 = arith.constant dense<0.000000e+00> : vector<4x512xf32>
    %23 = tpu.matmul %20, %22, %cst_26 {dimension_numbers = #tpu.dot_dimension_numbers<[1], [0], [0], [1], [0, 0, 1, 1], [], []>} : vector<4x256xf32>, vector<256x512xf32>, vector<4x512xf32> -> vector<4x512xf32>
    %c0_27 = arith.constant 0 : index
    %c2048 = arith.constant 2048 : index
    %24 = vector.load %arg3[%c0_27, %c2048] : memref<4x4096xf32, #tpu.memory_space<vmem>>, vector<4x512xf32>
    tpu.vector_store %arg3[%c0_27, %c2048], %23 {strides = array<i32>} : memref<4x4096xf32, #tpu.memory_space<vmem>>, vector<4x512xf32>,
    %c0_28 = arith.constant 0 : index
    %c1280 = arith.constant 1280 : index
    %25 = vector.load %arg1[%c0_28, %c1280] : memref<4x2048xf32, #tpu.memory_space<vmem>>, vector<4x256xf32>
    %c5 = arith.constant 5 : index
    %c0_29 = arith.constant 0 : index
    %c0_30 = arith.constant 0 : index
    %26 = vector.load %arg2[%c5, %c0_29, %c0_30] : memref<8x256x512xf32, #tpu.memory_space<vmem>>, vector<1x256x512xf32>
    %27 = vector.shape_cast %26 : vector<1x256x512xf32> to vector<256x512xf32>
    %cst_31 = arith.constant dense<0.000000e+00> : vector<4x512xf32>
    %28 = tpu.matmul %25, %27, %cst_31 {dimension_numbers = #tpu.dot_dimension_numbers<[1], [0], [0], [1], [0, 0, 1, 1], [], []>} : vector<4x256xf32>, vector<256x512xf32>, vector<4x512xf32> -> vector<4x512xf32>
    %c0_32 = arith.constant 0 : index
    %c2560 = arith.constant 2560 : index
    %29 = vector.load %arg3[%c0_32, %c2560] : memref<4x4096xf32, #tpu.memory_space<vmem>>, vector<4x512xf32>
    tpu.vector_store %arg3[%c0_32, %c2560], %28 {strides = array<i32>} : memref<4x4096xf32, #tpu.memory_space<vmem>>, vector<4x512xf32>,
    %c0_33 = arith.constant 0 : index
    %c1536_34 = arith.constant 1536 : index
    %30 = vector.load %arg1[%c0_33, %c1536_34] : memref<4x2048xf32, #tpu.memory_space<vmem>>, vector<4x256xf32>
    %c6 = arith.constant 6 : index
    %c0_35 = arith.constant 0 : index
    %c0_36 = arith.constant 0 : index
    %31 = vector.load %arg2[%c6, %c0_35, %c0_36] : memref<8x256x512xf32, #tpu.memory_space<vmem>>, vector<1x256x512xf32>
    %32 = vector.shape_cast %31 : vector<1x256x512xf32> to vector<256x512xf32>
    %cst_37 = arith.constant dense<0.000000e+00> : vector<4x512xf32>
    %33 = tpu.matmul %30, %32, %cst_37 {dimension_numbers = #tpu.dot_dimension_numbers<[1], [0], [0], [1], [0, 0, 1, 1], [], []>} : vector<4x256xf32>, vector<256x512xf32>, vector<4x512xf32> -> vector<4x512xf32>
    %c0_38 = arith.constant 0 : index
    %c3072 = arith.constant 3072 : index
    %34 = vector.load %arg3[%c0_38, %c3072] : memref<4x4096xf32, #tpu.memory_space<vmem>>, vector<4x512xf32>
    tpu.vector_store %arg3[%c0_38, %c3072], %33 {strides = array<i32>} : memref<4x4096xf32, #tpu.memory_space<vmem>>, vector<4x512xf32>,
    %c0_39 = arith.constant 0 : index
    %c1792 = arith.constant 1792 : index
    %35 = vector.load %arg1[%c0_39, %c1792] : memref<4x2048xf32, #tpu.memory_space<vmem>>, vector<4x256xf32>
    %c7 = arith.constant 7 : index
    %c0_40 = arith.constant 0 : index
    %c0_41 = arith.constant 0 : index
    %36 = vector.load %arg2[%c7, %c0_40, %c0_41] : memref<8x256x512xf32, #tpu.memory_space<vmem>>, vector<1x256x512xf32>
    %37 = vector.shape_cast %36 : vector<1x256x512xf32> to vector<256x512xf32>
    %cst_42 = arith.constant dense<0.000000e+00> : vector<4x512xf32>
    %38 = tpu.matmul %35, %37, %cst_42 {dimension_numbers = #tpu.dot_dimension_numbers<[1], [0], [0], [1], [0, 0, 1, 1], [], []>} : vector<4x256xf32>, vector<256x512xf32>, vector<4x512xf32> -> vector<4x512xf32>
    %c0_43 = arith.constant 0 : index
    %c3584 = arith.constant 3584 : index
    %39 = vector.load %arg3[%c0_43, %c3584] : memref<4x4096xf32, #tpu.memory_space<vmem>>, vector<4x512xf32>
    tpu.vector_store %arg3[%c0_43, %c3584], %38 {strides = array<i32>} : memref<4x4096xf32, #tpu.memory_space<vmem>>, vector<4x512xf32>,
    return
  }
  func.func @transform_0(%arg0: i32) -> (i32, i32) {
    %c0_i32 = arith.constant 0 : i32
    %c0_i32_0 = arith.constant 0 : i32
    return %arg0, %c0_i32 : i32, i32
  }
  func.func @transform_1(%arg0: i32) -> (i32, i32, i32) {
    %c0_i32 = arith.constant 0 : i32
    %c0_i32_0 = arith.constant 0 : i32
    %c0_i32_1 = arith.constant 0 : i32
    %c0_i32_2 = arith.constant 0 : i32
    return %c0_i32, %c0_i32_0, %c0_i32_1 : i32, i32, i32
  }
  func.func @transform_2(%arg0: i32) -> (i32, i32) {
    %c0_i32 = arith.constant 0 : i32
    %c0_i32_0 = arith.constant 0 : i32
    return %arg0, %c0_i32 : i32, i32
  }
}

</mosaic_0001>

<llo_original>
// kernel: tpu_custom_call.1
$region0: #{tpu_custom_call.1}
  #allocation0 [shape = 'u32[]', space=smem, size = 0x4, offset = 0x4, fixed_abs, tag = 'smem constant byte address 0x4 - core index']
  #allocation1 [shape = 'u32[72,128]{1,0:T(1,128)}', space=vmem, size = 0x9000, scoped, tag = 'internal scratch']
  %s0 = inlined_call_operand.hbm [shape: f32[4,2048], index: 0, kind: input, shape index: {}]
  %s1 = inlined_call_operand.hbm [shape: f32[8,256,512], index: 1, kind: input, shape index: {}]
  %s2 = inlined_call_operand.hbm [shape: f32[4,4096], index: 2, kind: output, shape index: {}]
  %s3 = sld [smem:[#allocation0]]
  $region26: #{tpu_custom_call.1} parent=0
    _
  %s5 = ssub.s32 1, %s3
  %s6 = scalar_select 0, %s5, %s3
  $region1: #{tpu_custom_call.1} parent=0
    #allocation2 [shape = 'u8[32768]{0}', space=vmem, size = 0x8000, scoped, tag = 'input window, operand 0, single buffered']
    #allocation3 [shape = 's32[1]{0}', space=sflag, size = 0x4, scoped, tag = 'scoped memory for tpu_custom_call.1']
    #allocation4 [shape = 's32[1]{0}', space=sflag, size = 0x4, scoped, tag = 'scoped memory for tpu_custom_call.1']
    #allocation5 [shape = 'u8[4194304]{0}', space=vmem, size = 0x400000, scoped, tag = 'input window, operand 1, single buffered']
    #allocation6 [shape = 's32[1]{0}', space=sflag, size = 0x4, scoped, tag = 'scoped memory for tpu_custom_call.1']
    #allocation7 [shape = 'u8[65536]{0}', space=vmem, size = 0x10000, scoped, tag = 'output window, operand 0, single buffered']
    %7 = vsyncpa [#allocation3], 0
    %8 = vsyncpa [#allocation6], 0
    %9 = vsyncpa [#allocation4], 0
    // Predicated region
    $region2: #{tpu_custom_call.1} parent=1 // pred_check
      _
    $region3: #{tpu_custom_call.1} parent=1 // pred_check_branch
      %11 = sbr.rel (0) target = $region5
    $region4: #{tpu_custom_call.1} parent=1 // pred_region
      %13 = vsyncadd [#allocation3], 0
      %s15 = sshll.u32 %s0, 4
      %s16 = int_to_ptr.hbm [resolvable:$true] %s15
      %s17 = sshll.u32 [#allocation2], 4
      %s18 = int_to_ptr.vmem [resolvable:$true] %s17
      %20 = dma.hbm_to_vmem [thread:$0]  %s16, 1024, %s18, [#allocation3]
    $region5: #{tpu_custom_call.1} parent=1 // pred_fallthru
      _
    // Predicated region
    $region6: #{tpu_custom_call.1} parent=1 // pred_check
      _
    $region7: #{tpu_custom_call.1} parent=1 // pred_check_branch
      %22 = sbr.rel (0) target = $region9
    $region8: #{tpu_custom_call.1} parent=1 // pred_region
      %24 = vsyncadd [#allocation6], 0
      %s25 = sshll.u32 %s1, 4
      %s26 = int_to_ptr.hbm [resolvable:$true] %s25
      %s27 = sshll.u32 [#allocation5], 4
      %s28 = int_to_ptr.vmem [resolvable:$true] %s27
      %33 = dma.hbm_to_vmem [thread:$0]  %s26, 131072, %s28, [#allocation6], 512, 512, 32
    $region9: #{tpu_custom_call.1} parent=1 // pred_fallthru
      _
    // Predicated region
    $region10: #{tpu_custom_call.1} parent=1 // pred_check
      _
    $region11: #{tpu_custom_call.1} parent=1 // pred_check_branch
      %35 = sbr.rel (0) target = $region13
    $region12: #{tpu_custom_call.1} parent=1 // pred_region
      %37 = dma.done [#allocation3], 1024
    $region13: #{tpu_custom_call.1} parent=1 // pred_fallthru
      _
    // Predicated region
    $region14: #{tpu_custom_call.1} parent=1 // pred_check
      _
    $region15: #{tpu_custom_call.1} parent=1 // pred_check_branch
      %39 = sbr.rel (0) target = $region17
    $region16: #{tpu_custom_call.1} parent=1 // pred_region
      %41 = dma.done [#allocation6], 131072
    $region17: #{tpu_custom_call.1} parent=1 // pred_fallthru
      _
    %v42 = vld [vmem:[#allocation2] sm:$0xff]
    %v43 = vld [vmem:[#allocation5] sm:$0xff]
    %v44 = vld [vmem:[#allocation5 + $0x8] sm:$0xff]
    %v45 = vld [vmem:[#allocation5 + $0x10] sm:$0xff]
    %v46 = vld [vmem:[#allocation5 + $0x18] sm:$0xff]
    %v47 = vld [vmem:[#allocation5 + $0x20] sm:$0xff]
    %v48 = vld [vmem:[#allocation5 + $0x28] sm:$0xff]
    %v49 = vld [vmem:[#allocation5 + $0x30] sm:$0xff]
    %v50 = vld [vmem:[#allocation5 + $0x38] sm:$0xff]
    %v51 = vld [vmem:[#allocation5 + $0x40] sm:$0xff]
    %v52 = vld [vmem:[#allocation5 + $0x48] sm:$0xff]
    %v53 = vld [vmem:[#allocation5 + $0x50] sm:$0xff]
    %v54 = vld [vmem:[#allocation5 + $0x58] sm:$0xff]
    %v55 = vld [vmem:[#allocation5 + $0x60] sm:$0xff]
    %v56 = vld [vmem:[#allocation5 + $0x68] sm:$0xff]
    %v57 = vld [vmem:[#allocation5 + $0x70] sm:$0xff]
    %v58 = vld [vmem:[#allocation5 + $0x78] sm:$0xff]
    %v59 = vld [vmem:[#allocation5 + $0x80] sm:$0xff]
    %v60 = vld [vmem:[#allocation5 + $0x88] sm:$0xff]
    %v61 = vld [vmem:[#allocation5 + $0x90] sm:$0xff]
    %v62 = vld [vmem:[#allocation5 + $0x98] sm:$0xff]
    %v63 = vld [vmem:[#allocation5 + $0xa0] sm:$0xff]
    %v64 = vld [vmem:[#allocation5 + $0xa8] sm:$0xff]
    %v65 = vld [vmem:[#allocation5 + $0xb0] sm:$0xff]
    %v66 = vld [vmem:[#allocation5 + $0xb8] sm:$0xff]
    %v67 = vld [vmem:[#allocation5 + $0xc0] sm:$0xff]
    %v68 = vld [vmem:[#allocation5 + $0xc8] sm:$0xff]
    %v69 = vld [vmem:[#allocation5 + $0xd0] sm:$0xff]
    %v70 = vld [vmem:[#allocation5 + $0xd8] sm:$0xff]
    %v71 = vld [vmem:[#allocation5 + $0xe0] sm:$0xff]
    %v72 = vld [vmem:[#allocation5 + $0xe8] sm:$0xff]
    %v73 = vld [vmem:[#allocation5 + $0xf0] sm:$0xff]
    %v74 = vld [vmem:[#allocation5 + $0xf8] sm:$0xff]
    %v75 = vld [vmem:[#allocation5 + $0x100] sm:$0xff]
    %v76 = vld [vmem:[#allocation5 + $0x108] sm:$0xff]
    %v77 = vld [vmem:[#allocation5 + $0x110] sm:$0xff]
    %v78 = vld [vmem:[#allocation5 + $0x118] sm:$0xff]
    %v79 = vld [vmem:[#allocation5 + $0x120] sm:$0xff]
    %v80 = vld [vmem:[#allocation5 + $0x128] sm:$0xff]
    %v81 = vld [vmem:[#allocation5 + $0x130] sm:$0xff]
    %v82 = vld [vmem:[#allocation5 + $0x138] sm:$0xff]
    %v83 = vld [vmem:[#allocation5 + $0x140] sm:$0xff]
    %v84 = vld [vmem:[#allocation5 + $0x148] sm:$0xff]
    %v85 = vld [vmem:[#allocation5 + $0x150] sm:$0xff]
    %v86 = vld [vmem:[#allocation5 + $0x158] sm:$0xff]
    %v87 = vld [vmem:[#allocation5 + $0x160] sm:$0xff]
    %v88 = vld [vmem:[#allocation5 + $0x168] sm:$0xff]
    %v89 = vld [vmem:[#allocation5 + $0x170] sm:$0xff]
    %v90 = vld [vmem:[#allocation5 + $0x178] sm:$0xff]
    %v91 = vld [vmem:[#allocation5 + $0x180] sm:$0xff]
    %v92 = vld [vmem:[#allocation5 + $0x188] sm:$0xff]
    %v93 = vld [vmem:[#allocation5 + $0x190] sm:$0xff]
    %v94 = vld [vmem:[#allocation5 + $0x198] sm:$0xff]
    %v95 = vld [vmem:[#allocation5 + $0x1a0] sm:$0xff]
    %v96 = vld [vmem:[#allocation5 + $0x1a8] sm:$0xff]
    %v97 = vld [vmem:[#allocation5 + $0x1b0] sm:$0xff]
    %v98 = vld [vmem:[#allocation5 + $0x1b8] sm:$0xff]
    %v99 = vld [vmem:[#allocation5 + $0x1c0] sm:$0xff]
    %v100 = vld [vmem:[#allocation5 + $0x1c8] sm:$0xff]
    %v101 = vld [vmem:[#allocation5 + $0x1d0] sm:$0xff]
    %v102 = vld [vmem:[#allocation5 + $0x1d8] sm:$0xff]
    %v103 = vld [vmem:[#allocation5 + $0x1e0] sm:$0xff]
    %v104 = vld [vmem:[#allocation5 + $0x1e8] sm:$0xff]
    %v105 = vld [vmem:[#allocation5 + $0x1f0] sm:$0xff]
    %v106 = vld [vmem:[#allocation5 + $0x1f8] sm:$0xff]
    %v107 = vld [vmem:[#allocation5 + $0x200] sm:$0xff]
    %v108 = vld [vmem:[#allocation5 + $0x208] sm:$0xff]
    %v109 = vld [vmem:[#allocation5 + $0x210] sm:$0xff]
    %v110 = vld [vmem:[#allocation5 + $0x218] sm:$0xff]
    %v111 = vld [vmem:[#allocation5 + $0x220] sm:$0xff]
    %v112 = vld [vmem:[#allocation5 + $0x228] sm:$0xff]
    %v113 = vld [vmem:[#allocation5 + $0x230] sm:$0xff]
    %v114 = vld [vmem:[#allocation5 + $0x238] sm:$0xff]
    %v115 = vld [vmem:[#allocation5 + $0x240] sm:$0xff]
    %v116 = vld [vmem:[#allocation5 + $0x248] sm:$0xff]
    %v117 = vld [vmem:[#allocation5 + $0x250] sm:$0xff]
    %v118 = vld [vmem:[#allocation5 + $0x258] sm:$0xff]
    %v119 = vld [vmem:[#allocation5 + $0x260] sm:$0xff]
    %v120 = vld [vmem:[#allocation5 + $0x268] sm:$0xff]
    %v121 = vld [vmem:[#allocation5 + $0x270] sm:$0xff]
    %v122 = vld [vmem:[#allocation5 + $0x278] sm:$0xff]
    %v123 = vld [vmem:[#allocation5 + $0x280] sm:$0xff]
    %v124 = vld [vmem:[#allocation5 + $0x288] sm:$0xff]
    %v125 = vld [vmem:[#allocation5 + $0x290] sm:$0xff]
    %v126 = vld [vmem:[#allocation5 + $0x298] sm:$0xff]
    %v127 = vld [vmem:[#allocation5 + $0x2a0] sm:$0xff]
    %v128 = vld [vmem:[#allocation5 + $0x2a8] sm:$0xff]
    %v129 = vld [vmem:[#allocation5 + $0x2b0] sm:$0xff]
    %v130 = vld [vmem:[#allocation5 + $0x2b8] sm:$0xff]
    %v131 = vld [vmem:[#allocation5 + $0x2c0] sm:$0xff]
    %v132 = vld [vmem:[#allocation5 + $0x2c8] sm:$0xff]
    %v133 = vld [vmem:[#allocation5 + $0x2d0] sm:$0xff]
    %v134 = vld [vmem:[#allocation5 + $0x2d8] sm:$0xff]
    %v135 = vld [vmem:[#allocation5 + $0x2e0] sm:$0xff]
    %v136 = vld [vmem:[#allocation5 + $0x2e8] sm:$0xff]
    %v137 = vld [vmem:[#allocation5 + $0x2f0] sm:$0xff]
    %v138 = vld [vmem:[#allocation5 + $0x2f8] sm:$0xff]
    %v139 = vld [vmem:[#allocation5 + $0x300] sm:$0xff]
    %v140 = vld [vmem:[#allocation5 + $0x308] sm:$0xff]
    %v141 = vld [vmem:[#allocation5 + $0x310] sm:$0xff]
    %v142 = vld [vmem:[#allocation5 + $0x318] sm:$0xff]
    %v143 = vld [vmem:[#allocation5 + $0x320] sm:$0xff]
    %v144 = vld [vmem:[#allocation5 + $0x328] sm:$0xff]
    %v145 = vld [vmem:[#allocation5 + $0x330] sm:$0xff]
    %v146 = vld [vmem:[#allocation5 + $0x338] sm:$0xff]
    %v147 = vld [vmem:[#allocation5 + $0x340] sm:$0xff]
    %v148 = vld [vmem:[#allocation5 + $0x348] sm:$0xff]
    %v149 = vld [vmem:[#allocation5 + $0x350] sm:$0xff]
    %v150 = vld [vmem:[#allocation5 + $0x358] sm:$0xff]
    %v151 = vld [vmem:[#allocation5 + $0x360] sm:$0xff]
    %v152 = vld [vmem:[#allocation5 + $0x368] sm:$0xff]
    %v153 = vld [vmem:[#allocation5 + $0x370] sm:$0xff]
    %v154 = vld [vmem:[#allocation5 + $0x378] sm:$0xff]
    %v155 = vld [vmem:[#allocation5 + $0x380] sm:$0xff]
    %v156 = vld [vmem:[#allocation5 + $0x388] sm:$0xff]
    %v157 = vld [vmem:[#allocation5 + $0x390] sm:$0xff]
    %v158 = vld [vmem:[#allocation5 + $0x398] sm:$0xff]
    %v159 = vld [vmem:[#allocation5 + $0x3a0] sm:$0xff]
    %v160 = vld [vmem:[#allocation5 + $0x3a8] sm:$0xff]
    %v161 = vld [vmem:[#allocation5 + $0x3b0] sm:$0xff]
    %v162 = vld [vmem:[#allocation5 + $0x3b8] sm:$0xff]
    %v163 = vld [vmem:[#allocation5 + $0x3c0] sm:$0xff]
    %v164 = vld [vmem:[#allocation5 + $0x3c8] sm:$0xff]
    %v165 = vld [vmem:[#allocation5 + $0x3d0] sm:$0xff]
    %v166 = vld [vmem:[#allocation5 + $0x3d8] sm:$0xff]
    %v167 = vld [vmem:[#allocation5 + $0x3e0] sm:$0xff]
    %v168 = vld [vmem:[#allocation5 + $0x3e8] sm:$0xff]
    %v169 = vld [vmem:[#allocation5 + $0x3f0] sm:$0xff]
    %v170 = vld [vmem:[#allocation5 + $0x3f8] sm:$0xff]
    %172 = vst [vmem:[#allocation1] ss:$2 sm:$0xff] %v42
    %v173 = vld.sshfl [vmem:[#allocation1] sm:$0xff pattern:$0x75316420]
    %v174 = vld.sshfl [vmem:[#allocation1 + $0x8] sm:$0xff pattern:$0x75316420]
    %177 = vmatpush.msra.mxu0 %v103
    %178 = vmatpush.msra.mxu0 %v99
    %179 = vmatpush.msra.mxu0 %v95
    %180 = vmatpush.msra.mxu0 %v91
    %181 = vmatpush.msra.mxu0 %v87
    %182 = vmatpush.msra.mxu0 %v83
    %183 = vmatpush.msra.mxu0 %v79
    %184 = vmatpush.msra.mxu0 %v75
    %185 = vmatpush.msra.mxu0 %v71
    %186 = vmatpush.msra.mxu0 %v67
    %187 = vmatpush.msra.mxu0 %v63
    %188 = vmatpush.msra.mxu0 %v59
    %189 = vmatpush.msra.mxu0 %v55
    %190 = vmatpush.msra.mxu0 %v51
    %191 = vmatpush.msra.mxu0 %v47
    %192 = vmatpush.msra.mxu0 %v43
    %193 = vmatmul.f32.gmra.mxu0 %v173
    %v194 = vpop.f32.mrf.mxu0
    %v195 = vadd.f32 0.0, %v194
    %196 = vdwg.mxu0
    %197 = vmatpush.msra.mxu0 %v167
    %198 = vmatpush.msra.mxu0 %v163
    %199 = vmatpush.msra.mxu0 %v159
    %200 = vmatpush.msra.mxu0 %v155
    %201 = vmatpush.msra.mxu0 %v151
    %202 = vmatpush.msra.mxu0 %v147
    %203 = vmatpush.msra.mxu0 %v143
    %204 = vmatpush.msra.mxu0 %v139
    %205 = vmatpush.msra.mxu0 %v135
    %206 = vmatpush.msra.mxu0 %v131
    %207 = vmatpush.msra.mxu0 %v127
    %208 = vmatpush.msra.mxu0 %v123
    %209 = vmatpush.msra.mxu0 %v119
    %210 = vmatpush.msra.mxu0 %v115
    %211 = vmatpush.msra.mxu0 %v111
    %212 = vmatpush.msra.mxu0 %v107
    %213 = vmatmul.f32.gmra.mxu0 %v174
    %v214 = vpop.f32.mrf.mxu0
    %v215 = vadd.f32 %v195, %v214
    %216 = vdwg.mxu0
    %217 = vmatpush.msra.mxu0 %v104
    %218 = vmatpush.msra.mxu0 %v100
    %219 = vmatpush.msra.mxu0 %v96
    %220 = vmatpush.msra.mxu0 %v92
    %221 = vmatpush.msra.mxu0 %v88
    %222 = vmatpush.msra.mxu0 %v84
    %223 = vmatpush.msra.mxu0 %v80
    %224 = vmatpush.msra.mxu0 %v76
    %225 = vmatpush.msra.mxu0 %v72
    %226 = vmatpush.msra.mxu0 %v68
    %227 = vmatpush.msra.mxu0 %v64
    %228 = vmatpush.msra.mxu0 %v60
    %229 = vmatpush.msra.mxu0 %v56
    %230 = vmatpush.msra.mxu0 %v52
    %231 = vmatpush.msra.mxu0 %v48
    %232 = vmatpush.msra.mxu0 %v44
    %233 = vmatmul.f32.gmra.mxu0 %v173
    %v234 = vpop.f32.mrf.mxu0
    %v235 = vadd.f32 0.0, %v234
    %236 = vdwg.mxu0
    %237 = vmatpush.msra.mxu0 %v168
    %238 = vmatpush.msra.mxu0 %v164
    %239 = vmatpush.msra.mxu0 %v160
    %240 = vmatpush.msra.mxu0 %v156
    %241 = vmatpush.msra.mxu0 %v152
    %242 = vmatpush.msra.mxu0 %v148
    %243 = vmatpush.msra.mxu0 %v144
    %244 = vmatpush.msra.mxu0 %v140
    %245 = vmatpush.msra.mxu0 %v136
    %246 = vmatpush.msra.mxu0 %v132
    %247 = vmatpush.msra.mxu0 %v128
    %248 = vmatpush.msra.mxu0 %v124
    %249 = vmatpush.msra.mxu0 %v120
    %250 = vmatpush.msra.mxu0 %v116
    %251 = vmatpush.msra.mxu0 %v112
    %252 = vmatpush.msra.mxu0 %v108
    %253 = vmatmul.f32.gmra.mxu0 %v174
    %v254 = vpop.f32.mrf.mxu0
    %v255 = vadd.f32 %v235, %v254
    %256 = vdwg.mxu0
    %257 = vmatpush.msra.mxu0 %v105
    %258 = vmatpush.msra.mxu0 %v101
    %259 = vmatpush.msra.mxu0 %v97
    %260 = vmatpush.msra.mxu0 %v93
    %261 = vmatpush.msra.mxu0 %v89
    %262 = vmatpush.msra.mxu0 %v85
    %263 = vmatpush.msra.mxu0 %v81
    %264 = vmatpush.msra.mxu0 %v77
    %265 = vmatpush.msra.mxu0 %v73
    %266 = vmatpush.msra.mxu0 %v69
    %267 = vmatpush.msra.mxu0 %v65
    %268 = vmatpush.msra.mxu0 %v61
    %269 = vmatpush.msra.mxu0 %v57
    %270 = vmatpush.msra.mxu0 %v53
    %271 = vmatpush.msra.mxu0 %v49
    %272 = vmatpush.msra.mxu0 %v45
    %273 = vmatmul.f32.gmra.mxu0 %v173
    %v274 = vpop.f32.mrf.mxu0
    %v275 = vadd.f32 0.0, %v274
    %276 = vdwg.mxu0
    %277 = vmatpush.msra.mxu0 %v169
    %278 = vmatpush.msra.mxu0 %v165
    %279 = vmatpush.msra.mxu0 %v161
    %280 = vmatpush.msra.mxu0 %v157
    %281 = vmatpush.msra.mxu0 %v153
    %282 = vmatpush.msra.mxu0 %v149
    %283 = vmatpush.msra.mxu0 %v145
    %284 = vmatpush.msra.mxu0 %v141
    %285 = vmatpush.msra.mxu0 %v137
    %286 = vmatpush.msra.mxu0 %v133
    %287 = vmatpush.msra.mxu0 %v129
    %288 = vmatpush.msra.mxu0 %v125
    %289 = vmatpush.msra.mxu0 %v121
    %290 = vmatpush.msra.mxu0 %v117
    %291 = vmatpush.msra.mxu0 %v113
    %292 = vmatpush.msra.mxu0 %v109
    %293 = vmatmul.f32.gmra.mxu0 %v174
    %v294 = vpop.f32.mrf.mxu0
    %v295 = vadd.f32 %v275, %v294
    %296 = vdwg.mxu0
    %297 = vmatpush.msra.mxu0 %v106
    %298 = vmatpush.msra.mxu0 %v102
    %299 = vmatpush.msra.mxu0 %v98
    %300 = vmatpush.msra.mxu0 %v94
    %301 = vmatpush.msra.mxu0 %v90
    %302 = vmatpush.msra.mxu0 %v86
    %303 = vmatpush.msra.mxu0 %v82
    %304 = vmatpush.msra.mxu0 %v78
    %305 = vmatpush.msra.mxu0 %v74
    %306 = vmatpush.msra.mxu0 %v70
    %307 = vmatpush.msra.mxu0 %v66
    %308 = vmatpush.msra.mxu0 %v62
    %309 = vmatpush.msra.mxu0 %v58
    %310 = vmatpush.msra.mxu0 %v54
    %311 = vmatpush.msra.mxu0 %v50
    %312 = vmatpush.msra.mxu0 %v46
    %313 = vmatmul.f32.gmra.mxu0 %v173
    %v314 = vpop.f32.mrf.mxu0
    %v315 = vadd.f32 0.0, %v314
    %316 = vdwg.mxu0
    %317 = vmatpush.msra.mxu0 %v170
    %318 = vmatpush.msra.mxu0 %v166
    %319 = vmatpush.msra.mxu0 %v162
    %320 = vmatpush.msra.mxu0 %v158
    %321 = vmatpush.msra.mxu0 %v154
    %322 = vmatpush.msra.mxu0 %v150
    %323 = vmatpush.msra.mxu0 %v146
    %324 = vmatpush.msra.mxu0 %v142
    %325 = vmatpush.msra.mxu0 %v138
    %326 = vmatpush.msra.mxu0 %v134
    %327 = vmatpush.msra.mxu0 %v130
    %328 = vmatpush.msra.mxu0 %v126
    %329 = vmatpush.msra.mxu0 %v122
    %330 = vmatpush.msra.mxu0 %v118
    %331 = vmatpush.msra.mxu0 %v114
    %332 = vmatpush.msra.mxu0 %v110
    %333 = vmatmul.f32.gmra.mxu0 %v174
    %v334 = vpop.f32.mrf.mxu0
    %v335 = vadd.f32 %v315, %v334
    %336 = vdwg.mxu0
    %v341 = vrot.slane %v255, 4
    %v342 = vrot.slane %v335, 4
    %vm343 = vcmask 1043456
    %v344 = vsel %vm343, %v215, %v341
    %v345 = vsel %vm343, %v295, %v342
    %348 = vst [vmem:[#allocation7] sm:$0xff] %v344
    %349 = vst [vmem:[#allocation7 + $0x8] sm:$0xff] %v345
    %v350 = vld [vmem:[#allocation2 + $0x8] sm:$0xff]
    %s351 = scalar_lea.vmem [#allocation5], 1024
    %v352 = vld [vmem:[%s351] sm:$0xff]
    %v353 = vld [vmem:[%s351 + $0x8] sm:$0xff]
    %v354 = vld [vmem:[%s351 + $0x10] sm:$0xff]
    %v355 = vld [vmem:[%s351 + $0x18] sm:$0xff]
    %v356 = vld [vmem:[%s351 + $0x20] sm:$0xff]
    %v357 = vld [vmem:[%s351 + $0x28] sm:$0xff]
    %v358 = vld [vmem:[%s351 + $0x30] sm:$0xff]
    %v359 = vld [vmem:[%s351 + $0x38] sm:$0xff]
    %v360 = vld [vmem:[%s351 + $0x40] sm:$0xff]
    %v361 = vld [vmem:[%s351 + $0x48] sm:$0xff]
    %v362 = vld [vmem:[%s351 + $0x50] sm:$0xff]
    %v363 = vld [vmem:[%s351 + $0x58] sm:$0xff]
    %v364 = vld [vmem:[%s351 + $0x60] sm:$0xff]
    %v365 = vld [vmem:[%s351 + $0x68] sm:$0xff]
    %v366 = vld [vmem:[%s351 + $0x70] sm:$0xff]
    %v367 = vld [vmem:[%s351 + $0x78] sm:$0xff]
    %v368 = vld [vmem:[%s351 + $0x80] sm:$0xff]
    %v369 = vld [vmem:[%s351 + $0x88] sm:$0xff]
    %v370 = vld [vmem:[%s351 + $0x90] sm:$0xff]
    %v371 = vld [vmem:[%s351 + $0x98] sm:$0xff]
    %v372 = vld [vmem:[%s351 + $0xa0] sm:$0xff]
    %v373 = vld [vmem:[%s351 + $0xa8] sm:$0xff]
    %v374 = vld [vmem:[%s351 + $0xb0] sm:$0xff]
    %v375 = vld [vmem:[%s351 + $0xb8] sm:$0xff]
    %v376 = vld [vmem:[%s351 + $0xc0] sm:$0xff]
    %v377 = vld [vmem:[%s351 + $0xc8] sm:$0xff]
    %v378 = vld [vmem:[%s351 + $0xd0] sm:$0xff]
    %v379 = vld [vmem:[%s351 + $0xd8] sm:$0xff]
    %v380 = vld [vmem:[%s351 + $0xe0] sm:$0xff]
    %v381 = vld [vmem:[%s351 + $0xe8] sm:$0xff]
    %v382 = vld [vmem:[%s351 + $0xf0] sm:$0xff]
    %v383 = vld [vmem:[%s351 + $0xf8] sm:$0xff]
    %v384 = vld [vmem:[%s351 + $0x100] sm:$0xff]
    %v385 = vld [vmem:[%s351 + $0x108] sm:$0xff]
    %v386 = vld [vmem:[%s351 + $0x110] sm:$0xff]
    %v387 = vld [vmem:[%s351 + $0x118] sm:$0xff]
    %v388 = vld [vmem:[%s351 + $0x120] sm:$0xff]
    %v389 = vld [vmem:[%s351 + $0x128] sm:$0xff]
    %v390 = vld [vmem:[%s351 + $0x130] sm:$0xff]
    %v391 = vld [vmem:[%s351 + $0x138] sm:$0xff]
    %v392 = vld [vmem:[%s351 + $0x140] sm:$0xff]
    %v393 = vld [vmem:[%s351 + $0x148] sm:$0xff]
    %v394 = vld [vmem:[%s351 + $0x150] sm:$0xff]
    %v395 = vld [vmem:[%s351 + $0x158] sm:$0xff]
    %v396 = vld [vmem:[%s351 + $0x160] sm:$0xff]
    %v397 = vld [vmem:[%s351 + $0x168] sm:$0xff]
    %v398 = vld [vmem:[%s351 + $0x170] sm:$0xff]
    %v399 = vld [vmem:[%s351 + $0x178] sm:$0xff]
    %v400 = vld [vmem:[%s351 + $0x180] sm:$0xff]
    %v401 = vld [vmem:[%s351 + $0x188] sm:$0xff]
    %v402 = vld [vmem:[%s351 + $0x190] sm:$0xff]
    %v403 = vld [vmem:[%s351 + $0x198] sm:$0xff]
    %v404 = vld [vmem:[%s351 + $0x1a0] sm:$0xff]
    %v405 = vld [vmem:[%s351 + $0x1a8] sm:$0xff]
    %v406 = vld [vmem:[%s351 + $0x1b0] sm:$0xff]
    %v407 = vld [vmem:[%s351 + $0x1b8] sm:$0xff]
    %v408 = vld [vmem:[%s351 + $0x1c0] sm:$0xff]
    %v409 = vld [vmem:[%s351 + $0x1c8] sm:$0xff]
    %v410 = vld [vmem:[%s351 + $0x1d0] sm:$0xff]
    %v411 = vld [vmem:[%s351 + $0x1d8] sm:$0xff]
    %v412 = vld [vmem:[%s351 + $0x1e0] sm:$0xff]
    %v413 = vld [vmem:[%s351 + $0x1e8] sm:$0xff]
    %v414 = vld [vmem:[%s351 + $0x1f0] sm:$0xff]
    %v415 = vld [vmem:[%s351 + $0x1f8] sm:$0xff]
    %v416 = vld [vmem:[%s351 + $0x200] sm:$0xff]
    %v417 = vld [vmem:[%s351 + $0x208] sm:$0xff]
    %v418 = vld [vmem:[%s351 + $0x210] sm:$0xff]
    %v419 = vld [vmem:[%s351 + $0x218] sm:$0xff]
    %v420 = vld [vmem:[%s351 + $0x220] sm:$0xff]
    %v421 = vld [vmem:[%s351 + $0x228] sm:$0xff]
    %v422 = vld [vmem:[%s351 + $0x230] sm:$0xff]
    %v423 = vld [vmem:[%s351 + $0x238] sm:$0xff]
    %v424 = vld [vmem:[%s351 + $0x240] sm:$0xff]
    %v425 = vld [vmem:[%s351 + $0x248] sm:$0xff]
    %v426 = vld [vmem:[%s351 + $0x250] sm:$0xff]
    %v427 = vld [vmem:[%s351 + $0x258] sm:$0xff]
    %v428 = vld [vmem:[%s351 + $0x260] sm:$0xff]
    %v429 = vld [vmem:[%s351 + $0x268] sm:$0xff]
    %v430 = vld [vmem:[%s351 + $0x270] sm:$0xff]
    %v431 = vld [vmem:[%s351 + $0x278] sm:$0xff]
    %v432 = vld [vmem:[%s351 + $0x280] sm:$0xff]
    %v433 = vld [vmem:[%s351 + $0x288] sm:$0xff]
    %v434 = vld [vmem:[%s351 + $0x290] sm:$0xff]
    %v435 = vld [vmem:[%s351 + $0x298] sm:$0xff]
    %v436 = vld [vmem:[%s351 + $0x2a0] sm:$0xff]
    %v437 = vld [vmem:[%s351 + $0x2a8] sm:$0xff]
    %v438 = vld [vmem:[%s351 + $0x2b0] sm:$0xff]
    %v439 = vld [vmem:[%s351 + $0x2b8] sm:$0xff]
    %v440 = vld [vmem:[%s351 + $0x2c0] sm:$0xff]
    %v441 = vld [vmem:[%s351 + $0x2c8] sm:$0xff]
    %v442 = vld [vmem:[%s351 + $0x2d0] sm:$0xff]
    %v443 = vld [vmem:[%s351 + $0x2d8] sm:$0xff]
    %v444 = vld [vmem:[%s351 + $0x2e0] sm:$0xff]
    %v445 = vld [vmem:[%s351 + $0x2e8] sm:$0xff]
    %v446 = vld [vmem:[%s351 + $0x2f0] sm:$0xff]
    %v447 = vld [vmem:[%s351 + $0x2f8] sm:$0xff]
    %v448 = vld [vmem:[%s351 + $0x300] sm:$0xff]
    %v449 = vld [vmem:[%s351 + $0x308] sm:$0xff]
    %v450 = vld [vmem:[%s351 + $0x310] sm:$0xff]
    %v451 = vld [vmem:[%s351 + $0x318] sm:$0xff]
    %v452 = vld [vmem:[%s351 + $0x320] sm:$0xff]
    %v453 = vld [vmem:[%s351 + $0x328] sm:$0xff]
    %v454 = vld [vmem:[%s351 + $0x330] sm:$0xff]
    %v455 = vld [vmem:[%s351 + $0x338] sm:$0xff]
    %v456 = vld [vmem:[%s351 + $0x340] sm:$0xff]
    %v457 = vld [vmem:[%s351 + $0x348] sm:$0xff]
    %v458 = vld [vmem:[%s351 + $0x350] sm:$0xff]
    %v459 = vld [vmem:[%s351 + $0x358] sm:$0xff]
    %v460 = vld [vmem:[%s351 + $0x360] sm:$0xff]
    %v461 = vld [vmem:[%s351 + $0x368] sm:$0xff]
    %v462 = vld [vmem:[%s351 + $0x370] sm:$0xff]
    %v463 = vld [vmem:[%s351 + $0x378] sm:$0xff]
    %v464 = vld [vmem:[%s351 + $0x380] sm:$0xff]
    %v465 = vld [vmem:[%s351 + $0x388] sm:$0xff]
    %v466 = vld [vmem:[%s351 + $0x390] sm:$0xff]
    %v467 = vld [vmem:[%s351 + $0x398] sm:$0xff]
    %v468 = vld [vmem:[%s351 + $0x3a0] sm:$0xff]
    %v469 = vld [vmem:[%s351 + $0x3a8] sm:$0xff]
    %v470 = vld [vmem:[%s351 + $0x3b0] sm:$0xff]
    %v471 = vld [vmem:[%s351 + $0x3b8] sm:$0xff]
    %v472 = vld [vmem:[%s351 + $0x3c0] sm:$0xff]
    %v473 = vld [vmem:[%s351 + $0x3c8] sm:$0xff]
    %v474 = vld [vmem:[%s351 + $0x3d0] sm:$0xff]
    %v475 = vld [vmem:[%s351 + $0x3d8] sm:$0xff]
    %v476 = vld [vmem:[%s351 + $0x3e0] sm:$0xff]
    %v477 = vld [vmem:[%s351 + $0x3e8] sm:$0xff]
    %v478 = vld [vmem:[%s351 + $0x3f0] sm:$0xff]
    %v479 = vld [vmem:[%s351 + $0x3f8] sm:$0xff]
    %481 = vst [vmem:[#allocation1] ss:$2 sm:$0xff] %v350
    %v482 = vld.sshfl [vmem:[#allocation1] sm:$0xff pattern:$0x75316420]
    %v483 = vld.sshfl [vmem:[#allocation1 + $0x8] sm:$0xff pattern:$0x75316420]
    %486 = vmatpush.msra.mxu0 %v412
    %487 = vmatpush.msra.mxu0 %v408
    %488 = vmatpush.msra.mxu0 %v404
    %489 = vmatpush.msra.mxu0 %v400
    %490 = vmatpush.msra.mxu0 %v396
    %491 = vmatpush.msra.mxu0 %v392
    %492 = vmatpush.msra.mxu0 %v388
    %493 = vmatpush.msra.mxu0 %v384
    %494 = vmatpush.msra.mxu0 %v380
    %495 = vmatpush.msra.mxu0 %v376
    %496 = vmatpush.msra.mxu0 %v372
    %497 = vmatpush.msra.mxu0 %v368
    %498 = vmatpush.msra.mxu0 %v364
    %499 = vmatpush.msra.mxu0 %v360
    %500 = vmatpush.msra.mxu0 %v356
    %501 = vmatpush.msra.mxu0 %v352
    %502 = vmatmul.f32.gmra.mxu0 %v482
    %v503 = vpop.f32.mrf.mxu0
    %v504 = vadd.f32 0.0, %v503
    %505 = vdwg.mxu0
    %506 = vmatpush.msra.mxu0 %v476
    %507 = vmatpush.msra.mxu0 %v472
    %508 = vmatpush.msra.mxu0 %v468
    %509 = vmatpush.msra.mxu0 %v464
    %510 = vmatpush.msra.mxu0 %v460
    %511 = vmatpush.msra.mxu0 %v456
    %512 = vmatpush.msra.mxu0 %v452
    %513 = vmatpush.msra.mxu0 %v448
    %514 = vmatpush.msra.mxu0 %v444
    %515 = vmatpush.msra.mxu0 %v440
    %516 = vmatpush.msra.mxu0 %v436
    %517 = vmatpush.msra.mxu0 %v432
    %518 = vmatpush.msra.mxu0 %v428
    %519 = vmatpush.msra.mxu0 %v424
    %520 = vmatpush.msra.mxu0 %v420
    %521 = vmatpush.msra.mxu0 %v416
    %522 = vmatmul.f32.gmra.mxu0 %v483
    %v523 = vpop.f32.mrf.mxu0
    %v524 = vadd.f32 %v504, %v523
    %525 = vdwg.mxu0
    %526 = vmatpush.msra.mxu0 %v413
    %527 = vmatpush.msra.mxu0 %v409
    %528 = vmatpush.msra.mxu0 %v405
    %529 = vmatpush.msra.mxu0 %v401
    %530 = vmatpush.msra.mxu0 %v397
    %531 = vmatpush.msra.mxu0 %v393
    %532 = vmatpush.msra.mxu0 %v389
    %533 = vmatpush.msra.mxu0 %v385
    %534 = vmatpush.msra.mxu0 %v381
    %535 = vmatpush.msra.mxu0 %v377
    %536 = vmatpush.msra.mxu0 %v373
    %537 = vmatpush.msra.mxu0 %v369
    %538 = vmatpush.msra.mxu0 %v365
    %539 = vmatpush.msra.mxu0 %v361
    %540 = vmatpush.msra.mxu0 %v357
    %541 = vmatpush.msra.mxu0 %v353
    %542 = vmatmul.f32.gmra.mxu0 %v482
    %v543 = vpop.f32.mrf.mxu0
    %v544 = vadd.f32 0.0, %v543
    %545 = vdwg.mxu0
    %546 = vmatpush.msra.mxu0 %v477
    %547 = vmatpush.msra.mxu0 %v473
    %548 = vmatpush.msra.mxu0 %v469
    %549 = vmatpush.msra.mxu0 %v465
    %550 = vmatpush.msra.mxu0 %v461
    %551 = vmatpush.msra.mxu0 %v457
    %552 = vmatpush.msra.mxu0 %v453
    %553 = vmatpush.msra.mxu0 %v449
    %554 = vmatpush.msra.mxu0 %v445
    %555 = vmatpush.msra.mxu0 %v441
    %556 = vmatpush.msra.mxu0 %v437
    %557 = vmatpush.msra.mxu0 %v433
    %558 = vmatpush.msra.mxu0 %v429
    %559 = vmatpush.msra.mxu0 %v425
    %560 = vmatpush.msra.mxu0 %v421
    %561 = vmatpush.msra.mxu0 %v417
    %562 = vmatmul.f32.gmra.mxu0 %v483
    %v563 = vpop.f32.mrf.mxu0
    %v564 = vadd.f32 %v544, %v563
    %565 = vdwg.mxu0
    %566 = vmatpush.msra.mxu0 %v414
    %567 = vmatpush.msra.mxu0 %v410
    %568 = vmatpush.msra.mxu0 %v406
    %569 = vmatpush.msra.mxu0 %v402
    %570 = vmatpush.msra.mxu0 %v398
    %571 = vmatpush.msra.mxu0 %v394
    %572 = vmatpush.msra.mxu0 %v390
    %573 = vmatpush.msra.mxu0 %v386
    %574 = vmatpush.msra.mxu0 %v382
    %575 = vmatpush.msra.mxu0 %v378
    %576 = vmatpush.msra.mxu0 %v374
    %577 = vmatpush.msra.mxu0 %v370
    %578 = vmatpush.msra.mxu0 %v366
    %579 = vmatpush.msra.mxu0 %v362
    %580 = vmatpush.msra.mxu0 %v358
    %581 = vmatpush.msra.mxu0 %v354
    %582 = vmatmul.f32.gmra.mxu0 %v482
    %v583 = vpop.f32.mrf.mxu0
    %v584 = vadd.f32 0.0, %v583
    %585 = vdwg.mxu0
    %586 = vmatpush.msra.mxu0 %v478
    %587 = vmatpush.msra.mxu0 %v474
    %588 = vmatpush.msra.mxu0 %v470
    %589 = vmatpush.msra.mxu0 %v466
    %590 = vmatpush.msra.mxu0 %v462
    %591 = vmatpush.msra.mxu0 %v458
    %592 = vmatpush.msra.mxu0 %v454
    %593 = vmatpush.msra.mxu0 %v450
    %594 = vmatpush.msra.mxu0 %v446
    %595 = vmatpush.msra.mxu0 %v442
    %596 = vmatpush.msra.mxu0 %v438
    %597 = vmatpush.msra.mxu0 %v434
    %598 = vmatpush.msra.mxu0 %v430
    %599 = vmatpush.msra.mxu0 %v426
    %600 = vmatpush.msra.mxu0 %v422
    %601 = vmatpush.msra.mxu0 %v418
    %602 = vmatmul.f32.gmra.mxu0 %v483
    %v603 = vpop.f32.mrf.mxu0
    %v604 = vadd.f32 %v584, %v603
    %605 = vdwg.mxu0
    %606 = vmatpush.msra.mxu0 %v415
    %607 = vmatpush.msra.mxu0 %v411
    %608 = vmatpush.msra.mxu0 %v407
    %609 = vmatpush.msra.mxu0 %v403
    %610 = vmatpush.msra.mxu0 %v399
    %611 = vmatpush.msra.mxu0 %v395
    %612 = vmatpush.msra.mxu0 %v391
    %613 = vmatpush.msra.mxu0 %v387
    %614 = vmatpush.msra.mxu0 %v383
    %615 = vmatpush.msra.mxu0 %v379
    %616 = vmatpush.msra.mxu0 %v375
    %617 = vmatpush.msra.mxu0 %v371
    %618 = vmatpush.msra.mxu0 %v367
    %619 = vmatpush.msra.mxu0 %v363
    %620 = vmatpush.msra.mxu0 %v359
    %621 = vmatpush.msra.mxu0 %v355
    %622 = vmatmul.f32.gmra.mxu0 %v482
    %v623 = vpop.f32.mrf.mxu0
    %v624 = vadd.f32 0.0, %v623
    %625 = vdwg.mxu0
    %626 = vmatpush.msra.mxu0 %v479
    %627 = vmatpush.msra.mxu0 %v475
    %628 = vmatpush.msra.mxu0 %v471
    %629 = vmatpush.msra.mxu0 %v467
    %630 = vmatpush.msra.mxu0 %v463
    %631 = vmatpush.msra.mxu0 %v459
    %632 = vmatpush.msra.mxu0 %v455
    %633 = vmatpush.msra.mxu0 %v451
    %634 = vmatpush.msra.mxu0 %v447
    %635 = vmatpush.msra.mxu0 %v443
    %636 = vmatpush.msra.mxu0 %v439
    %637 = vmatpush.msra.mxu0 %v435
    %638 = vmatpush.msra.mxu0 %v431
    %639 = vmatpush.msra.mxu0 %v427
    %640 = vmatpush.msra.mxu0 %v423
    %641 = vmatpush.msra.mxu0 %v419
    %642 = vmatmul.f32.gmra.mxu0 %v483
    %v643 = vpop.f32.mrf.mxu0
    %v644 = vadd.f32 %v624, %v643
    %645 = vdwg.mxu0
    %v650 = vrot.slane %v564, 4
    %v651 = vrot.slane %v644, 4
    %v652 = vsel %vm343, %v524, %v650
    %v653 = vsel %vm343, %v604, %v651
    %656 = vst [vmem:[#allocation7 + $0x10] sm:$0xff] %v652
    %657 = vst [vmem:[#allocation7 + $0x18] sm:$0xff] %v653
    %v658 = vld [vmem:[#allocation2 + $0x10] sm:$0xff]
    %s659 = scalar_lea.vmem [#allocation5], 2048
    %v660 = vld [vmem:[%s659] sm:$0xff]
    %v661 = vld [vmem:[%s659 + $0x8] sm:$0xff]
    %v662 = vld [vmem:[%s659 + $0x10] sm:$0xff]
    %v663 = vld [vmem:[%s659 + $0x18] sm:$0xff]
    %v664 = vld [vmem:[%s659 + $0x20] sm:$0xff]
    %v665 = vld [vmem:[%s659 + $0x28] sm:$0xff]
    %v666 = vld [vmem:[%s659 + $0x30] sm:$0xff]
    %v667 = vld [vmem:[%s659 + $0x38] sm:$0xff]
    %v668 = vld [vmem:[%s659 + $0x40] sm:$0xff]
    %v669 = vld [vmem:[%s659 + $0x48] sm:$0xff]
    %v670 = vld [vmem:[%s659 + $0x50] sm:$0xff]
    %v671 = vld [vmem:[%s659 + $0x58] sm:$0xff]
    %v672 = vld [vmem:[%s659 + $0x60] sm:$0xff]
    %v673 = vld [vmem:[%s659 + $0x68] sm:$0xff]
    %v674 = vld [vmem:[%s659 + $0x70] sm:$0xff]
    %v675 = vld [vmem:[%s659 + $0x78] sm:$0xff]
    %v676 = vld [vmem:[%s659 + $0x80] sm:$0xff]
    %v677 = vld [vmem:[%s659 + $0x88] sm:$0xff]
    %v678 = vld [vmem:[%s659 + $0x90] sm:$0xff]
    %v679 = vld [vmem:[%s659 + $0x98] sm:$0xff]
    %v680 = vld [vmem:[%s659 + $0xa0] sm:$0xff]
    %v681 = vld [vmem:[%s659 + $0xa8] sm:$0xff]
    %v682 = vld [vmem:[%s659 + $0xb0] sm:$0xff]
    %v683 = vld [vmem:[%s659 + $0xb8] sm:$0xff]
    %v684 = vld [vmem:[%s659 + $0xc0] sm:$0xff]
    %v685 = vld [vmem:[%s659 + $0xc8] sm:$0xff]
    %v686 = vld [vmem:[%s659 + $0xd0] sm:$0xff]
    %v687 = vld [vmem:[%s659 + $0xd8] sm:$0xff]
    %v688 = vld [vmem:[%s659 + $0xe0] sm:$0xff]
    %v689 = vld [vmem:[%s659 + $0xe8] sm:$0xff]
    %v690 = vld [vmem:[%s659 + $0xf0] sm:$0xff]
    %v691 = vld [vmem:[%s659 + $0xf8] sm:$0xff]
    %v692 = vld [vmem:[%s659 + $0x100] sm:$0xff]
    %v693 = vld [vmem:[%s659 + $0x108] sm:$0xff]
    %v694 = vld [vmem:[%s659 + $0x110] sm:$0xff]
    %v695 = vld [vmem:[%s659 + $0x118] sm:$0xff]
    %v696 = vld [vmem:[%s659 + $0x120] sm:$0xff]
    %v697 = vld [vmem:[%s659 + $0x128] sm:$0xff]
    %v698 = vld [vmem:[%s659 + $0x130] sm:$0xff]
    %v699 = vld [vmem:[%s659 + $0x138] sm:$0xff]
    %v700 = vld [vmem:[%s659 + $0x140] sm:$0xff]
    %v701 = vld [vmem:[%s659 + $0x148] sm:$0xff]
    %v702 = vld [vmem:[%s659 + $0x150] sm:$0xff]
    %v703 = vld [vmem:[%s659 + $0x158] sm:$0xff]
    %v704 = vld [vmem:[%s659 + $0x160] sm:$0xff]
    %v705 = vld [vmem:[%s659 + $0x168] sm:$0xff]
    %v706 = vld [vmem:[%s659 + $0x170] sm:$0xff]
    %v707 = vld [vmem:[%s659 + $0x178] sm:$0xff]
    %v708 = vld [vmem:[%s659 + $0x180] sm:$0xff]
    %v709 = vld [vmem:[%s659 + $0x188] sm:$0xff]
    %v710 = vld [vmem:[%s659 + $0x190] sm:$0xff]
    %v711 = vld [vmem:[%s659 + $0x198] sm:$0xff]
    %v712 = vld [vmem:[%s659 + $0x1a0] sm:$0xff]
    %v713 = vld [vmem:[%s659 + $0x1a8] sm:$0xff]
    %v714 = vld [vmem:[%s659 + $0x1b0] sm:$0xff]
    %v715 = vld [vmem:[%s659 + $0x1b8] sm:$0xff]
    %v716 = vld [vmem:[%s659 + $0x1c0] sm:$0xff]
    %v717 = vld [vmem:[%s659 + $0x1c8] sm:$0xff]
    %v718 = vld [vmem:[%s659 + $0x1d0] sm:$0xff]
    %v719 = vld [vmem:[%s659 + $0x1d8] sm:$0xff]
    %v720 = vld [vmem:[%s659 + $0x1e0] sm:$0xff]
    %v721 = vld [vmem:[%s659 + $0x1e8] sm:$0xff]
    %v722 = vld [vmem:[%s659 + $0x1f0] sm:$0xff]
    %v723 = vld [vmem:[%s659 + $0x1f8] sm:$0xff]
    %v724 = vld [vmem:[%s659 + $0x200] sm:$0xff]
    %v725 = vld [vmem:[%s659 + $0x208] sm:$0xff]
    %v726 = vld [vmem:[%s659 + $0x210] sm:$0xff]
    %v727 = vld [vmem:[%s659 + $0x218] sm:$0xff]
    %v728 = vld [vmem:[%s659 + $0x220] sm:$0xff]
    %v729 = vld [vmem:[%s659 + $0x228] sm:$0xff]
    %v730 = vld [vmem:[%s659 + $0x230] sm:$0xff]
    %v731 = vld [vmem:[%s659 + $0x238] sm:$0xff]
    %v732 = vld [vmem:[%s659 + $0x240] sm:$0xff]
    %v733 = vld [vmem:[%s659 + $0x248] sm:$0xff]
    %v734 = vld [vmem:[%s659 + $0x250] sm:$0xff]
    %v735 = vld [vmem:[%s659 + $0x258] sm:$0xff]
    %v736 = vld [vmem:[%s659 + $0x260] sm:$0xff]
    %v737 = vld [vmem:[%s659 + $0x268] sm:$0xff]
    %v738 = vld [vmem:[%s659 + $0x270] sm:$0xff]
    %v739 = vld [vmem:[%s659 + $0x278] sm:$0xff]
    %v740 = vld [vmem:[%s659 + $0x280] sm:$0xff]
    %v741 = vld [vmem:[%s659 + $0x288] sm:$0xff]
    %v742 = vld [vmem:[%s659 + $0x290] sm:$0xff]
    %v743 = vld [vmem:[%s659 + $0x298] sm:$0xff]
    %v744 = vld [vmem:[%s659 + $0x2a0] sm:$0xff]
    %v745 = vld [vmem:[%s659 + $0x2a8] sm:$0xff]
    %v746 = vld [vmem:[%s659 + $0x2b0] sm:$0xff]
    %v747 = vld [vmem:[%s659 + $0x2b8] sm:$0xff]
    %v748 = vld [vmem:[%s659 + $0x2c0] sm:$0xff]
    %v749 = vld [vmem:[%s659 + $0x2c8] sm:$0xff]
    %v750 = vld [vmem:[%s659 + $0x2d0] sm:$0xff]
    %v751 = vld [vmem:[%s659 + $0x2d8] sm:$0xff]
    %v752 = vld [vmem:[%s659 + $0x2e0] sm:$0xff]
    %v753 = vld [vmem:[%s659 + $0x2e8] sm:$0xff]
    %v754 = vld [vmem:[%s659 + $0x2f0] sm:$0xff]
    %v755 = vld [vmem:[%s659 + $0x2f8] sm:$0xff]
    %v756 = vld [vmem:[%s659 + $0x300] sm:$0xff]
    %v757 = vld [vmem:[%s659 + $0x308] sm:$0xff]
    %v758 = vld [vmem:[%s659 + $0x310] sm:$0xff]
    %v759 = vld [vmem:[%s659 + $0x318] sm:$0xff]
    %v760 = vld [vmem:[%s659 + $0x320] sm:$0xff]
    %v761 = vld [vmem:[%s659 + $0x328] sm:$0xff]
    %v762 = vld [vmem:[%s659 + $0x330] sm:$0xff]
    %v763 = vld [vmem:[%s659 + $0x338] sm:$0xff]
    %v764 = vld [vmem:[%s659 + $0x340] sm:$0xff]
    %v765 = vld [vmem:[%s659 + $0x348] sm:$0xff]
    %v766 = vld [vmem:[%s659 + $0x350] sm:$0xff]
    %v767 = vld [vmem:[%s659 + $0x358] sm:$0xff]
    %v768 = vld [vmem:[%s659 + $0x360] sm:$0xff]
    %v769 = vld [vmem:[%s659 + $0x368] sm:$0xff]
    %v770 = vld [vmem:[%s659 + $0x370] sm:$0xff]
    %v771 = vld [vmem:[%s659 + $0x378] sm:$0xff]
    %v772 = vld [vmem:[%s659 + $0x380] sm:$0xff]
    %v773 = vld [vmem:[%s659 + $0x388] sm:$0xff]
    %v774 = vld [vmem:[%s659 + $0x390] sm:$0xff]
    %v775 = vld [vmem:[%s659 + $0x398] sm:$0xff]
    %v776 = vld [vmem:[%s659 + $0x3a0] sm:$0xff]
    %v777 = vld [vmem:[%s659 + $0x3a8] sm:$0xff]
    %v778 = vld [vmem:[%s659 + $0x3b0] sm:$0xff]
    %v779 = vld [vmem:[%s659 + $0x3b8] sm:$0xff]
    %v780 = vld [vmem:[%s659 + $0x3c0] sm:$0xff]
    %v781 = vld [vmem:[%s659 + $0x3c8] sm:$0xff]
    %v782 = vld [vmem:[%s659 + $0x3d0] sm:$0xff]
    %v783 = vld [vmem:[%s659 + $0x3d8] sm:$0xff]
    %v784 = vld [vmem:[%s659 + $0x3e0] sm:$0xff]
    %v785 = vld [vmem:[%s659 + $0x3e8] sm:$0xff]
    %v786 = vld [vmem:[%s659 + $0x3f0] sm:$0xff]
    %v787 = vld [vmem:[%s659 + $0x3f8] sm:$0xff]
    %789 = vst [vmem:[#allocation1] ss:$2 sm:$0xff] %v658
    %v790 = vld.sshfl [vmem:[#allocation1] sm:$0xff pattern:$0x75316420]
    %v791 = vld.sshfl [vmem:[#allocation1 + $0x8] sm:$0xff pattern:$0x75316420]
    %794 = vmatpush.msra.mxu0 %v720
    %795 = vmatpush.msra.mxu0 %v716
    %796 = vmatpush.msra.mxu0 %v712
    %797 = vmatpush.msra.mxu0 %v708
    %798 = vmatpush.msra.mxu0 %v704
    %799 = vmatpush.msra.mxu0 %v700
    %800 = vmatpush.msra.mxu0 %v696
    %801 = vmatpush.msra.mxu0 %v692
    %802 = vmatpush.msra.mxu0 %v688
    %803 = vmatpush.msra.mxu0 %v684
    %804 = vmatpush.msra.mxu0 %v680
    %805 = vmatpush.msra.mxu0 %v676
    %806 = vmatpush.msra.mxu0 %v672
    %807 = vmatpush.msra.mxu0 %v668
    %808 = vmatpush.msra.mxu0 %v664
    %809 = vmatpush.msra.mxu0 %v660
    %810 = vmatmul.f32.gmra.mxu0 %v790
    %v811 = vpop.f32.mrf.mxu0
    %v812 = vadd.f32 0.0, %v811
    %813 = vdwg.mxu0
    %814 = vmatpush.msra.mxu0 %v784
    %815 = vmatpush.msra.mxu0 %v780
    %816 = vmatpush.msra.mxu0 %v776
    %817 = vmatpush.msra.mxu0 %v772
    %818 = vmatpush.msra.mxu0 %v768
    %819 = vmatpush.msra.mxu0 %v764
    %820 = vmatpush.msra.mxu0 %v760
    %821 = vmatpush.msra.mxu0 %v756
    %822 = vmatpush.msra.mxu0 %v752
    %823 = vmatpush.msra.mxu0 %v748
    %824 = vmatpush.msra.mxu0 %v744
    %825 = vmatpush.msra.mxu0 %v740
    %826 = vmatpush.msra.mxu0 %v736
    %827 = vmatpush.msra.mxu0 %v732
    %828 = vmatpush.msra.mxu0 %v728
    %829 = vmatpush.msra.mxu0 %v724
    %830 = vmatmul.f32.gmra.mxu0 %v791
    %v831 = vpop.f32.mrf.mxu0
    %v832 = vadd.f32 %v812, %v831
    %833 = vdwg.mxu0
    %834 = vmatpush.msra.mxu0 %v721
    %835 = vmatpush.msra.mxu0 %v717
    %836 = vmatpush.msra.mxu0 %v713
    %837 = vmatpush.msra.mxu0 %v709
    %838 = vmatpush.msra.mxu0 %v705
    %839 = vmatpush.msra.mxu0 %v701
    %840 = vmatpush.msra.mxu0 %v697
    %841 = vmatpush.msra.mxu0 %v693
    %842 = vmatpush.msra.mxu0 %v689
    %843 = vmatpush.msra.mxu0 %v685
    %844 = vmatpush.msra.mxu0 %v681
    %845 = vmatpush.msra.mxu0 %v677
    %846 = vmatpush.msra.mxu0 %v673
    %847 = vmatpush.msra.mxu0 %v669
    %848 = vmatpush.msra.mxu0 %v665
    %849 = vmatpush.msra.mxu0 %v661
    %850 = vmatmul.f32.gmra.mxu0 %v790
    %v851 = vpop.f32.mrf.mxu0
    %v852 = vadd.f32 0.0, %v851
    %853 = vdwg.mxu0
    %854 = vmatpush.msra.mxu0 %v785
    %855 = vmatpush.msra.mxu0 %v781
    %856 = vmatpush.msra.mxu0 %v777
    %857 = vmatpush.msra.mxu0 %v773
    %858 = vmatpush.msra.mxu0 %v769
    %859 = vmatpush.msra.mxu0 %v765
    %860 = vmatpush.msra.mxu0 %v761
    %861 = vmatpush.msra.mxu0 %v757
    %862 = vmatpush.msra.mxu0 %v753
    %863 = vmatpush.msra.mxu0 %v749
    %864 = vmatpush.msra.mxu0 %v745
    %865 = vmatpush.msra.mxu0 %v741
    %866 = vmatpush.msra.mxu0 %v737
    %867 = vmatpush.msra.mxu0 %v733
    %868 = vmatpush.msra.mxu0 %v729
    %869 = vmatpush.msra.mxu0 %v725
    %870 = vmatmul.f32.gmra.mxu0 %v791
    %v871 = vpop.f32.mrf.mxu0
    %v872 = vadd.f32 %v852, %v871
    %873 = vdwg.mxu0
    %874 = vmatpush.msra.mxu0 %v722
    %875 = vmatpush.msra.mxu0 %v718
    %876 = vmatpush.msra.mxu0 %v714
    %877 = vmatpush.msra.mxu0 %v710
    %878 = vmatpush.msra.mxu0 %v706
    %879 = vmatpush.msra.mxu0 %v702
    %880 = vmatpush.msra.mxu0 %v698
    %881 = vmatpush.msra.mxu0 %v694
    %882 = vmatpush.msra.mxu0 %v690
    %883 = vmatpush.msra.mxu0 %v686
    %884 = vmatpush.msra.mxu0 %v682
    %885 = vmatpush.msra.mxu0 %v678
    %886 = vmatpush.msra.mxu0 %v674
    %887 = vmatpush.msra.mxu0 %v670
    %888 = vmatpush.msra.mxu0 %v666
    %889 = vmatpush.msra.mxu0 %v662
    %890 = vmatmul.f32.gmra.mxu0 %v790
    %v891 = vpop.f32.mrf.mxu0
    %v892 = vadd.f32 0.0, %v891
    %893 = vdwg.mxu0
    %894 = vmatpush.msra.mxu0 %v786
    %895 = vmatpush.msra.mxu0 %v782
    %896 = vmatpush.msra.mxu0 %v778
    %897 = vmatpush.msra.mxu0 %v774
    %898 = vmatpush.msra.mxu0 %v770
    %899 = vmatpush.msra.mxu0 %v766
    %900 = vmatpush.msra.mxu0 %v762
    %901 = vmatpush.msra.mxu0 %v758
    %902 = vmatpush.msra.mxu0 %v754
    %903 = vmatpush.msra.mxu0 %v750
    %904 = vmatpush.msra.mxu0 %v746
    %905 = vmatpush.msra.mxu0 %v742
    %906 = vmatpush.msra.mxu0 %v738
    %907 = vmatpush.msra.mxu0 %v734
    %908 = vmatpush.msra.mxu0 %v730
    %909 = vmatpush.msra.mxu0 %v726
    %910 = vmatmul.f32.gmra.mxu0 %v791
    %v911 = vpop.f32.mrf.mxu0
    %v912 = vadd.f32 %v892, %v911
    %913 = vdwg.mxu0
    %914 = vmatpush.msra.mxu0 %v723
    %915 = vmatpush.msra.mxu0 %v719
    %916 = vmatpush.msra.mxu0 %v715
    %917 = vmatpush.msra.mxu0 %v711
    %918 = vmatpush.msra.mxu0 %v707
    %919 = vmatpush.msra.mxu0 %v703
    %920 = vmatpush.msra.mxu0 %v699
    %921 = vmatpush.msra.mxu0 %v695
    %922 = vmatpush.msra.mxu0 %v691
    %923 = vmatpush.msra.mxu0 %v687
    %924 = vmatpush.msra.mxu0 %v683
    %925 = vmatpush.msra.mxu0 %v679
    %926 = vmatpush.msra.mxu0 %v675
    %927 = vmatpush.msra.mxu0 %v671
    %928 = vmatpush.msra.mxu0 %v667
    %929 = vmatpush.msra.mxu0 %v663
    %930 = vmatmul.f32.gmra.mxu0 %v790
    %v931 = vpop.f32.mrf.mxu0
    %v932 = vadd.f32 0.0, %v931
    %933 = vdwg.mxu0
    %934 = vmatpush.msra.mxu0 %v787
    %935 = vmatpush.msra.mxu0 %v783
    %936 = vmatpush.msra.mxu0 %v779
    %937 = vmatpush.msra.mxu0 %v775
    %938 = vmatpush.msra.mxu0 %v771
    %939 = vmatpush.msra.mxu0 %v767
    %940 = vmatpush.msra.mxu0 %v763
    %941 = vmatpush.msra.mxu0 %v759
    %942 = vmatpush.msra.mxu0 %v755
    %943 = vmatpush.msra.mxu0 %v751
    %944 = vmatpush.msra.mxu0 %v747
    %945 = vmatpush.msra.mxu0 %v743
    %946 = vmatpush.msra.mxu0 %v739
    %947 = vmatpush.msra.mxu0 %v735
    %948 = vmatpush.msra.mxu0 %v731
    %949 = vmatpush.msra.mxu0 %v727
    %950 = vmatmul.f32.gmra.mxu0 %v791
    %v951 = vpop.f32.mrf.mxu0
    %v952 = vadd.f32 %v932, %v951
    %953 = vdwg.mxu0
    %v958 = vrot.slane %v872, 4
    %v959 = vrot.slane %v952, 4
    %v960 = vsel %vm343, %v832, %v958
    %v961 = vsel %vm343, %v912, %v959
    %964 = vst [vmem:[#allocation7 + $0x20] sm:$0xff] %v960
    %965 = vst [vmem:[#allocation7 + $0x28] sm:$0xff] %v961
    %v966 = vld [vmem:[#allocation2 + $0x18] sm:$0xff]
    %s967 = scalar_lea.vmem [#allocation5], 3072
    %v968 = vld [vmem:[%s967] sm:$0xff]
    %v969 = vld [vmem:[%s967 + $0x8] sm:$0xff]
    %v970 = vld [vmem:[%s967 + $0x10] sm:$0xff]
    %v971 = vld [vmem:[%s967 + $0x18] sm:$0xff]
    %v972 = vld [vmem:[%s967 + $0x20] sm:$0xff]
    %v973 = vld [vmem:[%s967 + $0x28] sm:$0xff]
    %v974 = vld [vmem:[%s967 + $0x30] sm:$0xff]
    %v975 = vld [vmem:[%s967 + $0x38] sm:$0xff]
    %v976 = vld [vmem:[%s967 + $0x40] sm:$0xff]
    %v977 = vld [vmem:[%s967 + $0x48] sm:$0xff]
    %v978 = vld [vmem:[%s967 + $0x50] sm:$0xff]
    %v979 = vld [vmem:[%s967 + $0x58] sm:$0xff]
    %v980 = vld [vmem:[%s967 + $0x60] sm:$0xff]
    %v981 = vld [vmem:[%s967 + $0x68] sm:$0xff]
    %v982 = vld [vmem:[%s967 + $0x70] sm:$0xff]
    %v983 = vld [vmem:[%s967 + $0x78] sm:$0xff]
    %v984 = vld [vmem:[%s967 + $0x80] sm:$0xff]
    %v985 = vld [vmem:[%s967 + $0x88] sm:$0xff]
    %v986 = vld [vmem:[%s967 + $0x90] sm:$0xff]
    %v987 = vld [vmem:[%s967 + $0x98] sm:$0xff]
    %v988 = vld [vmem:[%s967 + $0xa0] sm:$0xff]
    %v989 = vld [vmem:[%s967 + $0xa8] sm:$0xff]
    %v990 = vld [vmem:[%s967 + $0xb0] sm:$0xff]
    %v991 = vld [vmem:[%s967 + $0xb8] sm:$0xff]
    %v992 = vld [vmem:[%s967 + $0xc0] sm:$0xff]
    %v993 = vld [vmem:[%s967 + $0xc8] sm:$0xff]
    %v994 = vld [vmem:[%s967 + $0xd0] sm:$0xff]
    %v995 = vld [vmem:[%s967 + $0xd8] sm:$0xff]
    %v996 = vld [vmem:[%s967 + $0xe0] sm:$0xff]
    %v997 = vld [vmem:[%s967 + $0xe8] sm:$0xff]
    %v998 = vld [vmem:[%s967 + $0xf0] sm:$0xff]
    %v999 = vld [vmem:[%s967 + $0xf8] sm:$0xff]
    %v1000 = vld [vmem:[%s967 + $0x100] sm:$0xff]
    %v1001 = vld [vmem:[%s967 + $0x108] sm:$0xff]
    %v1002 = vld [vmem:[%s967 + $0x110] sm:$0xff]
    %v1003 = vld [vmem:[%s967 + $0x118] sm:$0xff]
    %v1004 = vld [vmem:[%s967 + $0x120] sm:$0xff]
    %v1005 = vld [vmem:[%s967 + $0x128] sm:$0xff]
    %v1006 = vld [vmem:[%s967 + $0x130] sm:$0xff]
    %v1007 = vld [vmem:[%s967 + $0x138] sm:$0xff]
    %v1008 = vld [vmem:[%s967 + $0x140] sm:$0xff]
    %v1009 = vld [vmem:[%s967 + $0x148] sm:$0xff]
    %v1010 = vld [vmem:[%s967 + $0x150] sm:$0xff]
    %v1011 = vld [vmem:[%s967 + $0x158] sm:$0xff]
    %v1012 = vld [vmem:[%s967 + $0x160] sm:$0xff]
    %v1013 = vld [vmem:[%s967 + $0x168] sm:$0xff]
    %v1014 = vld [vmem:[%s967 + $0x170] sm:$0xff]
    %v1015 = vld [vmem:[%s967 + $0x178] sm:$0xff]
    %v1016 = vld [vmem:[%s967 + $0x180] sm:$0xff]
    %v1017 = vld [vmem:[%s967 + $0x188] sm:$0xff]
    %v1018 = vld [vmem:[%s967 + $0x190] sm:$0xff]
    %v1019 = vld [vmem:[%s967 + $0x198] sm:$0xff]
    %v1020 = vld [vmem:[%s967 + $0x1a0] sm:$0xff]
    %v1021 = vld [vmem:[%s967 + $0x1a8] sm:$0xff]
    %v1022 = vld [vmem:[%s967 + $0x1b0] sm:$0xff]
    %v1023 = vld [vmem:[%s967 + $0x1b8] sm:$0xff]
    %v1024 = vld [vmem:[%s967 + $0x1c0] sm:$0xff]
    %v1025 = vld [vmem:[%s967 + $0x1c8] sm:$0xff]
    %v1026 = vld [vmem:[%s967 + $0x1d0] sm:$0xff]
    %v1027 = vld [vmem:[%s967 + $0x1d8] sm:$0xff]
    %v1028 = vld [vmem:[%s967 + $0x1e0] sm:$0xff]
    %v1029 = vld [vmem:[%s967 + $0x1e8] sm:$0xff]
    %v1030 = vld [vmem:[%s967 + $0x1f0] sm:$0xff]
    %v1031 = vld [vmem:[%s967 + $0x1f8] sm:$0xff]
    %v1032 = vld [vmem:[%s967 + $0x200] sm:$0xff]
    %v1033 = vld [vmem:[%s967 + $0x208] sm:$0xff]
    %v1034 = vld [vmem:[%s967 + $0x210] sm:$0xff]
    %v1035 = vld [vmem:[%s967 + $0x218] sm:$0xff]
    %v1036 = vld [vmem:[%s967 + $0x220] sm:$0xff]
    %v1037 = vld [vmem:[%s967 + $0x228] sm:$0xff]
    %v1038 = vld [vmem:[%s967 + $0x230] sm:$0xff]
    %v1039 = vld [vmem:[%s967 + $0x238] sm:$0xff]
    %v1040 = vld [vmem:[%s967 + $0x240] sm:$0xff]
    %v1041 = vld [vmem:[%s967 + $0x248] sm:$0xff]
    %v1042 = vld [vmem:[%s967 + $0x250] sm:$0xff]
    %v1043 = vld [vmem:[%s967 + $0x258] sm:$0xff]
    %v1044 = vld [vmem:[%s967 + $0x260] sm:$0xff]
    %v1045 = vld [vmem:[%s967 + $0x268] sm:$0xff]
    %v1046 = vld [vmem:[%s967 + $0x270] sm:$0xff]
    %v1047 = vld [vmem:[%s967 + $0x278] sm:$0xff]
    %v1048 = vld [vmem:[%s967 + $0x280] sm:$0xff]
    %v1049 = vld [vmem:[%s967 + $0x288] sm:$0xff]
    %v1050 = vld [vmem:[%s967 + $0x290] sm:$0xff]
    %v1051 = vld [vmem:[%s967 + $0x298] sm:$0xff]
    %v1052 = vld [vmem:[%s967 + $0x2a0] sm:$0xff]
    %v1053 = vld [vmem:[%s967 + $0x2a8] sm:$0xff]
    %v1054 = vld [vmem:[%s967 + $0x2b0] sm:$0xff]
    %v1055 = vld [vmem:[%s967 + $0x2b8] sm:$0xff]
    %v1056 = vld [vmem:[%s967 + $0x2c0] sm:$0xff]
    %v1057 = vld [vmem:[%s967 + $0x2c8] sm:$0xff]
    %v1058 = vld [vmem:[%s967 + $0x2d0] sm:$0xff]
    %v1059 = vld [vmem:[%s967 + $0x2d8] sm:$0xff]
    %v1060 = vld [vmem:[%s967 + $0x2e0] sm:$0xff]
    %v1061 = vld [vmem:[%s967 + $0x2e8] sm:$0xff]
    %v1062 = vld [vmem:[%s967 + $0x2f0] sm:$0xff]
    %v1063 = vld [vmem:[%s967 + $0x2f8] sm:$0xff]
    %v1064 = vld [vmem:[%s967 + $0x300] sm:$0xff]
    %v1065 = vld [vmem:[%s967 + $0x308] sm:$0xff]
    %v1066 = vld [vmem:[%s967 + $0x310] sm:$0xff]
    %v1067 = vld [vmem:[%s967 + $0x318] sm:$0xff]
    %v1068 = vld [vmem:[%s967 + $0x320] sm:$0xff]
    %v1069 = vld [vmem:[%s967 + $0x328] sm:$0xff]
    %v1070 = vld [vmem:[%s967 + $0x330] sm:$0xff]
    %v1071 = vld [vmem:[%s967 + $0x338] sm:$0xff]
    %v1072 = vld [vmem:[%s967 + $0x340] sm:$0xff]
    %v1073 = vld [vmem:[%s967 + $0x348] sm:$0xff]
    %v1074 = vld [vmem:[%s967 + $0x350] sm:$0xff]
    %v1075 = vld [vmem:[%s967 + $0x358] sm:$0xff]
    %v1076 = vld [vmem:[%s967 + $0x360] sm:$0xff]
    %v1077 = vld [vmem:[%s967 + $0x368] sm:$0xff]
    %v1078 = vld [vmem:[%s967 + $0x370] sm:$0xff]
    %v1079 = vld [vmem:[%s967 + $0x378] sm:$0xff]
    %v1080 = vld [vmem:[%s967 + $0x380] sm:$0xff]
    %v1081 = vld [vmem:[%s967 + $0x388] sm:$0xff]
    %v1082 = vld [vmem:[%s967 + $0x390] sm:$0xff]
    %v1083 = vld [vmem:[%s967 + $0x398] sm:$0xff]
    %v1084 = vld [vmem:[%s967 + $0x3a0] sm:$0xff]
    %v1085 = vld [vmem:[%s967 + $0x3a8] sm:$0xff]
    %v1086 = vld [vmem:[%s967 + $0x3b0] sm:$0xff]
    %v1087 = vld [vmem:[%s967 + $0x3b8] sm:$0xff]
    %v1088 = vld [vmem:[%s967 + $0x3c0] sm:$0xff]
    %v1089 = vld [vmem:[%s967 + $0x3c8] sm:$0xff]
    %v1090 = vld [vmem:[%s967 + $0x3d0] sm:$0xff]
    %v1091 = vld [vmem:[%s967 + $0x3d8] sm:$0xff]
    %v1092 = vld [vmem:[%s967 + $0x3e0] sm:$0xff]
    %v1093 = vld [vmem:[%s967 + $0x3e8] sm:$0xff]
    %v1094 = vld [vmem:[%s967 + $0x3f0] sm:$0xff]
    %v1095 = vld [vmem:[%s967 + $0x3f8] sm:$0xff]
    %1097 = vst [vmem:[#allocation1] ss:$2 sm:$0xff] %v966
    %v1098 = vld.sshfl [vmem:[#allocation1] sm:$0xff pattern:$0x75316420]
    %v1099 = vld.sshfl [vmem:[#allocation1 + $0x8] sm:$0xff pattern:$0x75316420]
    %1102 = vmatpush.msra.mxu0 %v1028
    %1103 = vmatpush.msra.mxu0 %v1024
    %1104 = vmatpush.msra.mxu0 %v1020
    %1105 = vmatpush.msra.mxu0 %v1016
    %1106 = vmatpush.msra.mxu0 %v1012
    %1107 = vmatpush.msra.mxu0 %v1008
    %1108 = vmatpush.msra.mxu0 %v1004
    %1109 = vmatpush.msra.mxu0 %v1000
    %1110 = vmatpush.msra.mxu0 %v996
    %1111 = vmatpush.msra.mxu0 %v992
    %1112 = vmatpush.msra.mxu0 %v988
    %1113 = vmatpush.msra.mxu0 %v984
    %1114 = vmatpush.msra.mxu0 %v980
    %1115 = vmatpush.msra.mxu0 %v976
    %1116 = vmatpush.msra.mxu0 %v972
    %1117 = vmatpush.msra.mxu0 %v968
    %1118 = vmatmul.f32.gmra.mxu0 %v1098
    %v1119 = vpop.f32.mrf.mxu0
    %v1120 = vadd.f32 0.0, %v1119
    %1121 = vdwg.mxu0
    %1122 = vmatpush.msra.mxu0 %v1092
    %1123 = vmatpush.msra.mxu0 %v1088
    %1124 = vmatpush.msra.mxu0 %v1084
    %1125 = vmatpush.msra.mxu0 %v1080
    %1126 = vmatpush.msra.mxu0 %v1076
    %1127 = vmatpush.msra.mxu0 %v1072
    %1128 = vmatpush.msra.mxu0 %v1068
    %1129 = vmatpush.msra.mxu0 %v1064
    %1130 = vmatpush.msra.mxu0 %v1060
    %1131 = vmatpush.msra.mxu0 %v1056
    %1132 = vmatpush.msra.mxu0 %v1052
    %1133 = vmatpush.msra.mxu0 %v1048
    %1134 = vmatpush.msra.mxu0 %v1044
    %1135 = vmatpush.msra.mxu0 %v1040
    %1136 = vmatpush.msra.mxu0 %v1036
    %1137 = vmatpush.msra.mxu0 %v1032
    %1138 = vmatmul.f32.gmra.mxu0 %v1099
    %v1139 = vpop.f32.mrf.mxu0
    %v1140 = vadd.f32 %v1120, %v1139
    %1141 = vdwg.mxu0
    %1142 = vmatpush.msra.mxu0 %v1029
    %1143 = vmatpush.msra.mxu0 %v1025
    %1144 = vmatpush.msra.mxu0 %v1021
    %1145 = vmatpush.msra.mxu0 %v1017
    %1146 = vmatpush.msra.mxu0 %v1013
    %1147 = vmatpush.msra.mxu0 %v1009
    %1148 = vmatpush.msra.mxu0 %v1005
    %1149 = vmatpush.msra.mxu0 %v1001
    %1150 = vmatpush.msra.mxu0 %v997
    %1151 = vmatpush.msra.mxu0 %v993
    %1152 = vmatpush.msra.mxu0 %v989
    %1153 = vmatpush.msra.mxu0 %v985
    %1154 = vmatpush.msra.mxu0 %v981
    %1155 = vmatpush.msra.mxu0 %v977
    %1156 = vmatpush.msra.mxu0 %v973
    %1157 = vmatpush.msra.mxu0 %v969
    %1158 = vmatmul.f32.gmra.mxu0 %v1098
    %v1159 = vpop.f32.mrf.mxu0
    %v1160 = vadd.f32 0.0, %v1159
    %1161 = vdwg.mxu0
    %1162 = vmatpush.msra.mxu0 %v1093
    %1163 = vmatpush.msra.mxu0 %v1089
    %1164 = vmatpush.msra.mxu0 %v1085
    %1165 = vmatpush.msra.mxu0 %v1081
    %1166 = vmatpush.msra.mxu0 %v1077
    %1167 = vmatpush.msra.mxu0 %v1073
    %1168 = vmatpush.msra.mxu0 %v1069
    %1169 = vmatpush.msra.mxu0 %v1065
    %1170 = vmatpush.msra.mxu0 %v1061
    %1171 = vmatpush.msra.mxu0 %v1057
    %1172 = vmatpush.msra.mxu0 %v1053
    %1173 = vmatpush.msra.mxu0 %v1049
    %1174 = vmatpush.msra.mxu0 %v1045
    %1175 = vmatpush.msra.mxu0 %v1041
    %1176 = vmatpush.msra.mxu0 %v1037
    %1177 = vmatpush.msra.mxu0 %v1033
    %1178 = vmatmul.f32.gmra.mxu0 %v1099
    %v1179 = vpop.f32.mrf.mxu0
    %v1180 = vadd.f32 %v1160, %v1179
    %1181 = vdwg.mxu0
    %1182 = vmatpush.msra.mxu0 %v1030
    %1183 = vmatpush.msra.mxu0 %v1026
    %1184 = vmatpush.msra.mxu0 %v1022
    %1185 = vmatpush.msra.mxu0 %v1018
    %1186 = vmatpush.msra.mxu0 %v1014
    %1187 = vmatpush.msra.mxu0 %v1010
    %1188 = vmatpush.msra.mxu0 %v1006
    %1189 = vmatpush.msra.mxu0 %v1002
    %1190 = vmatpush.msra.mxu0 %v998
    %1191 = vmatpush.msra.mxu0 %v994
    %1192 = vmatpush.msra.mxu0 %v990
    %1193 = vmatpush.msra.mxu0 %v986
    %1194 = vmatpush.msra.mxu0 %v982
    %1195 = vmatpush.msra.mxu0 %v978
    %1196 = vmatpush.msra.mxu0 %v974
    %1197 = vmatpush.msra.mxu0 %v970
    %1198 = vmatmul.f32.gmra.mxu0 %v1098
    %v1199 = vpop.f32.mrf.mxu0
    %v1200 = vadd.f32 0.0, %v1199
    %1201 = vdwg.mxu0
    %1202 = vmatpush.msra.mxu0 %v1094
    %1203 = vmatpush.msra.mxu0 %v1090
    %1204 = vmatpush.msra.mxu0 %v1086
    %1205 = vmatpush.msra.mxu0 %v1082
    %1206 = vmatpush.msra.mxu0 %v1078
    %1207 = vmatpush.msra.mxu0 %v1074
    %1208 = vmatpush.msra.mxu0 %v1070
    %1209 = vmatpush.msra.mxu0 %v1066
    %1210 = vmatpush.msra.mxu0 %v1062
    %1211 = vmatpush.msra.mxu0 %v1058
    %1212 = vmatpush.msra.mxu0 %v1054
    %1213 = vmatpush.msra.mxu0 %v1050
    %1214 = vmatpush.msra.mxu0 %v1046
    %1215 = vmatpush.msra.mxu0 %v1042
    %1216 = vmatpush.msra.mxu0 %v1038
    %1217 = vmatpush.msra.mxu0 %v1034
    %1218 = vmatmul.f32.gmra.mxu0 %v1099
    %v1219 = vpop.f32.mrf.mxu0
    %v1220 = vadd.f32 %v1200, %v1219
    %1221 = vdwg.mxu0
    %1222 = vmatpush.msra.mxu0 %v1031
    %1223 = vmatpush.msra.mxu0 %v1027
    %1224 = vmatpush.msra.mxu0 %v1023
    %1225 = vmatpush.msra.mxu0 %v1019
    %1226 = vmatpush.msra.mxu0 %v1015
    %1227 = vmatpush.msra.mxu0 %v1011
    %1228 = vmatpush.msra.mxu0 %v1007
    %1229 = vmatpush.msra.mxu0 %v1003
    %1230 = vmatpush.msra.mxu0 %v999
    %1231 = vmatpush.msra.mxu0 %v995
    %1232 = vmatpush.msra.mxu0 %v991
    %1233 = vmatpush.msra.mxu0 %v987
    %1234 = vmatpush.msra.mxu0 %v983
    %1235 = vmatpush.msra.mxu0 %v979
    %1236 = vmatpush.msra.mxu0 %v975
    %1237 = vmatpush.msra.mxu0 %v971
    %1238 = vmatmul.f32.gmra.mxu0 %v1098
    %v1239 = vpop.f32.mrf.mxu0
    %v1240 = vadd.f32 0.0, %v1239
    %1241 = vdwg.mxu0
    %1242 = vmatpush.msra.mxu0 %v1095
    %1243 = vmatpush.msra.mxu0 %v1091
    %1244 = vmatpush.msra.mxu0 %v1087
    %1245 = vmatpush.msra.mxu0 %v1083
    %1246 = vmatpush.msra.mxu0 %v1079
    %1247 = vmatpush.msra.mxu0 %v1075
    %1248 = vmatpush.msra.mxu0 %v1071
    %1249 = vmatpush.msra.mxu0 %v1067
    %1250 = vmatpush.msra.mxu0 %v1063
    %1251 = vmatpush.msra.mxu0 %v1059
    %1252 = vmatpush.msra.mxu0 %v1055
    %1253 = vmatpush.msra.mxu0 %v1051
    %1254 = vmatpush.msra.mxu0 %v1047
    %1255 = vmatpush.msra.mxu0 %v1043
    %1256 = vmatpush.msra.mxu0 %v1039
    %1257 = vmatpush.msra.mxu0 %v1035
    %1258 = vmatmul.f32.gmra.mxu0 %v1099
    %v1259 = vpop.f32.mrf.mxu0
    %v1260 = vadd.f32 %v1240, %v1259
    %1261 = vdwg.mxu0
    %v1266 = vrot.slane %v1180, 4
    %v1267 = vrot.slane %v1260, 4
    %v1268 = vsel %vm343, %v1140, %v1266
    %v1269 = vsel %vm343, %v1220, %v1267
    %1272 = vst [vmem:[#allocation7 + $0x30] sm:$0xff] %v1268
    %1273 = vst [vmem:[#allocation7 + $0x38] sm:$0xff] %v1269
    %v1274 = vld [vmem:[#allocation2 + $0x20] sm:$0xff]
    %s1275 = scalar_lea.vmem [#allocation5], 4096
    %v1276 = vld [vmem:[%s1275] sm:$0xff]
    %v1277 = vld [vmem:[%s1275 + $0x8] sm:$0xff]
    %v1278 = vld [vmem:[%s1275 + $0x10] sm:$0xff]
    %v1279 = vld [vmem:[%s1275 + $0x18] sm:$0xff]
    %v1280 = vld [vmem:[%s1275 + $0x20] sm:$0xff]
    %v1281 = vld [vmem:[%s1275 + $0x28] sm:$0xff]
    %v1282 = vld [vmem:[%s1275 + $0x30] sm:$0xff]
    %v1283 = vld [vmem:[%s1275 + $0x38] sm:$0xff]
    %v1284 = vld [vmem:[%s1275 + $0x40] sm:$0xff]
    %v1285 = vld [vmem:[%s1275 + $0x48] sm:$0xff]
    %v1286 = vld [vmem:[%s1275 + $0x50] sm:$0xff]
    %v1287 = vld [vmem:[%s1275 + $0x58] sm:$0xff]
    %v1288 = vld [vmem:[%s1275 + $0x60] sm:$0xff]
    %v1289 = vld [vmem:[%s1275 + $0x68] sm:$0xff]
    %v1290 = vld [vmem:[%s1275 + $0x70] sm:$0xff]
    %v1291 = vld [vmem:[%s1275 + $0x78] sm:$0xff]
    %v1292 = vld [vmem:[%s1275 + $0x80] sm:$0xff]
    %v1293 = vld [vmem:[%s1275 + $0x88] sm:$0xff]
    %v1294 = vld [vmem:[%s1275 + $0x90] sm:$0xff]
    %v1295 = vld [vmem:[%s1275 + $0x98] sm:$0xff]
    %v1296 = vld [vmem:[%s1275 + $0xa0] sm:$0xff]
    %v1297 = vld [vmem:[%s1275 + $0xa8] sm:$0xff]
    %v1298 = vld [vmem:[%s1275 + $0xb0] sm:$0xff]
    %v1299 = vld [vmem:[%s1275 + $0xb8] sm:$0xff]
    %v1300 = vld [vmem:[%s1275 + $0xc0] sm:$0xff]
    %v1301 = vld [vmem:[%s1275 + $0xc8] sm:$0xff]
    %v1302 = vld [vmem:[%s1275 + $0xd0] sm:$0xff]
    %v1303 = vld [vmem:[%s1275 + $0xd8] sm:$0xff]
    %v1304 = vld [vmem:[%s1275 + $0xe0] sm:$0xff]
    %v1305 = vld [vmem:[%s1275 + $0xe8] sm:$0xff]
    %v1306 = vld [vmem:[%s1275 + $0xf0] sm:$0xff]
    %v1307 = vld [vmem:[%s1275 + $0xf8] sm:$0xff]
    %v1308 = vld [vmem:[%s1275 + $0x100] sm:$0xff]
    %v1309 = vld [vmem:[%s1275 + $0x108] sm:$0xff]
    %v1310 = vld [vmem:[%s1275 + $0x110] sm:$0xff]
    %v1311 = vld [vmem:[%s1275 + $0x118] sm:$0xff]
    %v1312 = vld [vmem:[%s1275 + $0x120] sm:$0xff]
    %v1313 = vld [vmem:[%s1275 + $0x128] sm:$0xff]
    %v1314 = vld [vmem:[%s1275 + $0x130] sm:$0xff]
    %v1315 = vld [vmem:[%s1275 + $0x138] sm:$0xff]
    %v1316 = vld [vmem:[%s1275 + $0x140] sm:$0xff]
    %v1317 = vld [vmem:[%s1275 + $0x148] sm:$0xff]
    %v1318 = vld [vmem:[%s1275 + $0x150] sm:$0xff]
    %v1319 = vld [vmem:[%s1275 + $0x158] sm:$0xff]
    %v1320 = vld [vmem:[%s1275 + $0x160] sm:$0xff]
    %v1321 = vld [vmem:[%s1275 + $0x168] sm:$0xff]
    %v1322 = vld [vmem:[%s1275 + $0x170] sm:$0xff]
    %v1323 = vld [vmem:[%s1275 + $0x178] sm:$0xff]
    %v1324 = vld [vmem:[%s1275 + $0x180] sm:$0xff]
    %v1325 = vld [vmem:[%s1275 + $0x188] sm:$0xff]
    %v1326 = vld [vmem:[%s1275 + $0x190] sm:$0xff]
    %v1327 = vld [vmem:[%s1275 + $0x198] sm:$0xff]
    %v1328 = vld [vmem:[%s1275 + $0x1a0] sm:$0xff]
    %v1329 = vld [vmem:[%s1275 + $0x1a8] sm:$0xff]
    %v1330 = vld [vmem:[%s1275 + $0x1b0] sm:$0xff]
    %v1331 = vld [vmem:[%s1275 + $0x1b8] sm:$0xff]
    %v1332 = vld [vmem:[%s1275 + $0x1c0] sm:$0xff]
    %v1333 = vld [vmem:[%s1275 + $0x1c8] sm:$0xff]
    %v1334 = vld [vmem:[%s1275 + $0x1d0] sm:$0xff]
    %v1335 = vld [vmem:[%s1275 + $0x1d8] sm:$0xff]
    %v1336 = vld [vmem:[%s1275 + $0x1e0] sm:$0xff]
    %v1337 = vld [vmem:[%s1275 + $0x1e8] sm:$0xff]
    %v1338 = vld [vmem:[%s1275 + $0x1f0] sm:$0xff]
    %v1339 = vld [vmem:[%s1275 + $0x1f8] sm:$0xff]
    %v1340 = vld [vmem:[%s1275 + $0x200] sm:$0xff]
    %v1341 = vld [vmem:[%s1275 + $0x208] sm:$0xff]
    %v1342 = vld [vmem:[%s1275 + $0x210] sm:$0xff]
    %v1343 = vld [vmem:[%s1275 + $0x218] sm:$0xff]
    %v1344 = vld [vmem:[%s1275 + $0x220] sm:$0xff]
    %v1345 = vld [vmem:[%s1275 + $0x228] sm:$0xff]
    %v1346 = vld [vmem:[%s1275 + $0x230] sm:$0xff]
    %v1347 = vld [vmem:[%s1275 + $0x238] sm:$0xff]
    %v1348 = vld [vmem:[%s1275 + $0x240] sm:$0xff]
    %v1349 = vld [vmem:[%s1275 + $0x248] sm:$0xff]
    %v1350 = vld [vmem:[%s1275 + $0x250] sm:$0xff]
    %v1351 = vld [vmem:[%s1275 + $0x258] sm:$0xff]
    %v1352 = vld [vmem:[%s1275 + $0x260] sm:$0xff]
    %v1353 = vld [vmem:[%s1275 + $0x268] sm:$0xff]
    %v1354 = vld [vmem:[%s1275 + $0x270] sm:$0xff]
    %v1355 = vld [vmem:[%s1275 + $0x278] sm:$0xff]
    %v1356 = vld [vmem:[%s1275 + $0x280] sm:$0xff]
    %v1357 = vld [vmem:[%s1275 + $0x288] sm:$0xff]
    %v1358 = vld [vmem:[%s1275 + $0x290] sm:$0xff]
    %v1359 = vld [vmem:[%s1275 + $0x298] sm:$0xff]
    %v1360 = vld [vmem:[%s1275 + $0x2a0] sm:$0xff]
    %v1361 = vld [vmem:[%s1275 + $0x2a8] sm:$0xff]
    %v1362 = vld [vmem:[%s1275 + $0x2b0] sm:$0xff]
    %v1363 = vld [vmem:[%s1275 + $0x2b8] sm:$0xff]
    %v1364 = vld [vmem:[%s1275 + $0x2c0] sm:$0xff]
    %v1365 = vld [vmem:[%s1275 + $0x2c8] sm:$0xff]
    %v1366 = vld [vmem:[%s1275 + $0x2d0] sm:$0xff]
    %v1367 = vld [vmem:[%s1275 + $0x2d8] sm:$0xff]
    %v1368 = vld [vmem:[%s1275 + $0x2e0] sm:$0xff]
    %v1369 = vld [vmem:[%s1275 + $0x2e8] sm:$0xff]
    %v1370 = vld [vmem:[%s1275 + $0x2f0] sm:$0xff]
    %v1371 = vld [vmem:[%s1275 + $0x2f8] sm:$0xff]
    %v1372 = vld [vmem:[%s1275 + $0x300] sm:$0xff]
    %v1373 = vld [vmem:[%s1275 + $0x308] sm:$0xff]
    %v1374 = vld [vmem:[%s1275 + $0x310] sm:$0xff]
    %v1375 = vld [vmem:[%s1275 + $0x318] sm:$0xff]
    %v1376 = vld [vmem:[%s1275 + $0x320] sm:$0xff]
    %v1377 = vld [vmem:[%s1275 + $0x328] sm:$0xff]
    %v1378 = vld [vmem:[%s1275 + $0x330] sm:$0xff]
    %v1379 = vld [vmem:[%s1275 + $0x338] sm:$0xff]
    %v1380 = vld [vmem:[%s1275 + $0x340] sm:$0xff]
    %v1381 = vld [vmem:[%s1275 + $0x348] sm:$0xff]
    %v1382 = vld [vmem:[%s1275 + $0x350] sm:$0xff]
    %v1383 = vld [vmem:[%s1275 + $0x358] sm:$0xff]
    %v1384 = vld [vmem:[%s1275 + $0x360] sm:$0xff]
    %v1385 = vld [vmem:[%s1275 + $0x368] sm:$0xff]
    %v1386 = vld [vmem:[%s1275 + $0x370] sm:$0xff]
    %v1387 = vld [vmem:[%s1275 + $0x378] sm:$0xff]
    %v1388 = vld [vmem:[%s1275 + $0x380] sm:$0xff]
    %v1389 = vld [vmem:[%s1275 + $0x388] sm:$0xff]
    %v1390 = vld [vmem:[%s1275 + $0x390] sm:$0xff]
    %v1391 = vld [vmem:[%s1275 + $0x398] sm:$0xff]
    %v1392 = vld [vmem:[%s1275 + $0x3a0] sm:$0xff]
    %v1393 = vld [vmem:[%s1275 + $0x3a8] sm:$0xff]
    %v1394 = vld [vmem:[%s1275 + $0x3b0] sm:$0xff]
    %v1395 = vld [vmem:[%s1275 + $0x3b8] sm:$0xff]
    %v1396 = vld [vmem:[%s1275 + $0x3c0] sm:$0xff]
    %v1397 = vld [vmem:[%s1275 + $0x3c8] sm:$0xff]
    %v1398 = vld [vmem:[%s1275 + $0x3d0] sm:$0xff]
    %v1399 = vld [vmem:[%s1275 + $0x3d8] sm:$0xff]
    %v1400 = vld [vmem:[%s1275 + $0x3e0] sm:$0xff]
    %v1401 = vld [vmem:[%s1275 + $0x3e8] sm:$0xff]
    %v1402 = vld [vmem:[%s1275 + $0x3f0] sm:$0xff]
    %v1403 = vld [vmem:[%s1275 + $0x3f8] sm:$0xff]
    %1405 = vst [vmem:[#allocation1] ss:$2 sm:$0xff] %v1274
    %v1406 = vld.sshfl [vmem:[#allocation1] sm:$0xff pattern:$0x75316420]
    %v1407 = vld.sshfl [vmem:[#allocation1 + $0x8] sm:$0xff pattern:$0x75316420]
    %1410 = vmatpush.msra.mxu0 %v1336
    %1411 = vmatpush.msra.mxu0 %v1332
    %1412 = vmatpush.msra.mxu0 %v1328
    %1413 = vmatpush.msra.mxu0 %v1324
    %1414 = vmatpush.msra.mxu0 %v1320
    %1415 = vmatpush.msra.mxu0 %v1316
    %1416 = vmatpush.msra.mxu0 %v1312
    %1417 = vmatpush.msra.mxu0 %v1308
    %1418 = vmatpush.msra.mxu0 %v1304
    %1419 = vmatpush.msra.mxu0 %v1300
    %1420 = vmatpush.msra.mxu0 %v1296
    %1421 = vmatpush.msra.mxu0 %v1292
    %1422 = vmatpush.msra.mxu0 %v1288
    %1423 = vmatpush.msra.mxu0 %v1284
    %1424 = vmatpush.msra.mxu0 %v1280
    %1425 = vmatpush.msra.mxu0 %v1276
    %1426 = vmatmul.f32.gmra.mxu0 %v1406
    %v1427 = vpop.f32.mrf.mxu0
    %v1428 = vadd.f32 0.0, %v1427
    %1429 = vdwg.mxu0
    %1430 = vmatpush.msra.mxu0 %v1400
    %1431 = vmatpush.msra.mxu0 %v1396
    %1432 = vmatpush.msra.mxu0 %v1392
    %1433 = vmatpush.msra.mxu0 %v1388
    %1434 = vmatpush.msra.mxu0 %v1384
    %1435 = vmatpush.msra.mxu0 %v1380
    %1436 = vmatpush.msra.mxu0 %v1376
    %1437 = vmatpush.msra.mxu0 %v1372
    %1438 = vmatpush.msra.mxu0 %v1368
    %1439 = vmatpush.msra.mxu0 %v1364
    %1440 = vmatpush.msra.mxu0 %v1360
    %1441 = vmatpush.msra.mxu0 %v1356
    %1442 = vmatpush.msra.mxu0 %v1352
    %1443 = vmatpush.msra.mxu0 %v1348
    %1444 = vmatpush.msra.mxu0 %v1344
    %1445 = vmatpush.msra.mxu0 %v1340
    %1446 = vmatmul.f32.gmra.mxu0 %v1407
    %v1447 = vpop.f32.mrf.mxu0
    %v1448 = vadd.f32 %v1428, %v1447
    %1449 = vdwg.mxu0
    %1450 = vmatpush.msra.mxu0 %v1337
    %1451 = vmatpush.msra.mxu0 %v1333
    %1452 = vmatpush.msra.mxu0 %v1329
    %1453 = vmatpush.msra.mxu0 %v1325
    %1454 = vmatpush.msra.mxu0 %v1321
    %1455 = vmatpush.msra.mxu0 %v1317
    %1456 = vmatpush.msra.mxu0 %v1313
    %1457 = vmatpush.msra.mxu0 %v1309
    %1458 = vmatpush.msra.mxu0 %v1305
    %1459 = vmatpush.msra.mxu0 %v1301
    %1460 = vmatpush.msra.mxu0 %v1297
    %1461 = vmatpush.msra.mxu0 %v1293
    %1462 = vmatpush.msra.mxu0 %v1289
    %1463 = vmatpush.msra.mxu0 %v1285
    %1464 = vmatpush.msra.mxu0 %v1281
    %1465 = vmatpush.msra.mxu0 %v1277
    %1466 = vmatmul.f32.gmra.mxu0 %v1406
    %v1467 = vpop.f32.mrf.mxu0
    %v1468 = vadd.f32 0.0, %v1467
    %1469 = vdwg.mxu0
    %1470 = vmatpush.msra.mxu0 %v1401
    %1471 = vmatpush.msra.mxu0 %v1397
    %1472 = vmatpush.msra.mxu0 %v1393
    %1473 = vmatpush.msra.mxu0 %v1389
    %1474 = vmatpush.msra.mxu0 %v1385
    %1475 = vmatpush.msra.mxu0 %v1381
    %1476 = vmatpush.msra.mxu0 %v1377
    %1477 = vmatpush.msra.mxu0 %v1373
    %1478 = vmatpush.msra.mxu0 %v1369
    %1479 = vmatpush.msra.mxu0 %v1365
    %1480 = vmatpush.msra.mxu0 %v1361
    %1481 = vmatpush.msra.mxu0 %v1357
    %1482 = vmatpush.msra.mxu0 %v1353
    %1483 = vmatpush.msra.mxu0 %v1349
    %1484 = vmatpush.msra.mxu0 %v1345
    %1485 = vmatpush.msra.mxu0 %v1341
    %1486 = vmatmul.f32.gmra.mxu0 %v1407
    %v1487 = vpop.f32.mrf.mxu0
    %v1488 = vadd.f32 %v1468, %v1487
    %1489 = vdwg.mxu0
    %1490 = vmatpush.msra.mxu0 %v1338
    %1491 = vmatpush.msra.mxu0 %v1334
    %1492 = vmatpush.msra.mxu0 %v1330
    %1493 = vmatpush.msra.mxu0 %v1326
    %1494 = vmatpush.msra.mxu0 %v1322
    %1495 = vmatpush.msra.mxu0 %v1318
    %1496 = vmatpush.msra.mxu0 %v1314
    %1497 = vmatpush.msra.mxu0 %v1310
    %1498 = vmatpush.msra.mxu0 %v1306
    %1499 = vmatpush.msra.mxu0 %v1302
    %1500 = vmatpush.msra.mxu0 %v1298
    %1501 = vmatpush.msra.mxu0 %v1294
    %1502 = vmatpush.msra.mxu0 %v1290
    %1503 = vmatpush.msra.mxu0 %v1286
    %1504 = vmatpush.msra.mxu0 %v1282
    %1505 = vmatpush.msra.mxu0 %v1278
    %1506 = vmatmul.f32.gmra.mxu0 %v1406
    %v1507 = vpop.f32.mrf.mxu0
    %v1508 = vadd.f32 0.0, %v1507
    %1509 = vdwg.mxu0
    %1510 = vmatpush.msra.mxu0 %v1402
    %1511 = vmatpush.msra.mxu0 %v1398
    %1512 = vmatpush.msra.mxu0 %v1394
    %1513 = vmatpush.msra.mxu0 %v1390
    %1514 = vmatpush.msra.mxu0 %v1386
    %1515 = vmatpush.msra.mxu0 %v1382
    %1516 = vmatpush.msra.mxu0 %v1378
    %1517 = vmatpush.msra.mxu0 %v1374
    %1518 = vmatpush.msra.mxu0 %v1370
    %1519 = vmatpush.msra.mxu0 %v1366
    %1520 = vmatpush.msra.mxu0 %v1362
    %1521 = vmatpush.msra.mxu0 %v1358
    %1522 = vmatpush.msra.mxu0 %v1354
    %1523 = vmatpush.msra.mxu0 %v1350
    %1524 = vmatpush.msra.mxu0 %v1346
    %1525 = vmatpush.msra.mxu0 %v1342
    %1526 = vmatmul.f32.gmra.mxu0 %v1407
    %v1527 = vpop.f32.mrf.mxu0
    %v1528 = vadd.f32 %v1508, %v1527
    %1529 = vdwg.mxu0
    %1530 = vmatpush.msra.mxu0 %v1339
    %1531 = vmatpush.msra.mxu0 %v1335
    %1532 = vmatpush.msra.mxu0 %v1331
    %1533 = vmatpush.msra.mxu0 %v1327
    %1534 = vmatpush.msra.mxu0 %v1323
    %1535 = vmatpush.msra.mxu0 %v1319
    %1536 = vmatpush.msra.mxu0 %v1315
    %1537 = vmatpush.msra.mxu0 %v1311
    %1538 = vmatpush.msra.mxu0 %v1307
    %1539 = vmatpush.msra.mxu0 %v1303
    %1540 = vmatpush.msra.mxu0 %v1299
    %1541 = vmatpush.msra.mxu0 %v1295
    %1542 = vmatpush.msra.mxu0 %v1291
    %1543 = vmatpush.msra.mxu0 %v1287
    %1544 = vmatpush.msra.mxu0 %v1283
    %1545 = vmatpush.msra.mxu0 %v1279
    %1546 = vmatmul.f32.gmra.mxu0 %v1406
    %v1547 = vpop.f32.mrf.mxu0
    %v1548 = vadd.f32 0.0, %v1547
    %1549 = vdwg.mxu0
    %1550 = vmatpush.msra.mxu0 %v1403
    %1551 = vmatpush.msra.mxu0 %v1399
    %1552 = vmatpush.msra.mxu0 %v1395
    %1553 = vmatpush.msra.mxu0 %v1391
    %1554 = vmatpush.msra.mxu0 %v1387
    %1555 = vmatpush.msra.mxu0 %v1383
    %1556 = vmatpush.msra.mxu0 %v1379
    %1557 = vmatpush.msra.mxu0 %v1375
    %1558 = vmatpush.msra.mxu0 %v1371
    %1559 = vmatpush.msra.mxu0 %v1367
    %1560 = vmatpush.msra.mxu0 %v1363
    %1561 = vmatpush.msra.mxu0 %v1359
    %1562 = vmatpush.msra.mxu0 %v1355
    %1563 = vmatpush.msra.mxu0 %v1351
    %1564 = vmatpush.msra.mxu0 %v1347
    %1565 = vmatpush.msra.mxu0 %v1343
    %1566 = vmatmul.f32.gmra.mxu0 %v1407
    %v1567 = vpop.f32.mrf.mxu0
    %v1568 = vadd.f32 %v1548, %v1567
    %1569 = vdwg.mxu0
    %v1574 = vrot.slane %v1488, 4
    %v1575 = vrot.slane %v1568, 4
    %v1576 = vsel %vm343, %v1448, %v1574
    %v1577 = vsel %vm343, %v1528, %v1575
    %1580 = vst [vmem:[#allocation7 + $0x40] sm:$0xff] %v1576
    %1581 = vst [vmem:[#allocation7 + $0x48] sm:$0xff] %v1577
    %v1582 = vld [vmem:[#allocation2 + $0x28] sm:$0xff]
    %s1583 = scalar_lea.vmem [#allocation5], 5120
    %v1584 = vld [vmem:[%s1583] sm:$0xff]
    %v1585 = vld [vmem:[%s1583 + $0x8] sm:$0xff]
    %v1586 = vld [vmem:[%s1583 + $0x10] sm:$0xff]
    %v1587 = vld [vmem:[%s1583 + $0x18] sm:$0xff]
    %v1588 = vld [vmem:[%s1583 + $0x20] sm:$0xff]
    %v1589 = vld [vmem:[%s1583 + $0x28] sm:$0xff]
    %v1590 = vld [vmem:[%s1583 + $0x30] sm:$0xff]
    %v1591 = vld [vmem:[%s1583 + $0x38] sm:$0xff]
    %v1592 = vld [vmem:[%s1583 + $0x40] sm:$0xff]
    %v1593 = vld [vmem:[%s1583 + $0x48] sm:$0xff]
    %v1594 = vld [vmem:[%s1583 + $0x50] sm:$0xff]
    %v1595 = vld [vmem:[%s1583 + $0x58] sm:$0xff]
    %v1596 = vld [vmem:[%s1583 + $0x60] sm:$0xff]
    %v1597 = vld [vmem:[%s1583 + $0x68] sm:$0xff]
    %v1598 = vld [vmem:[%s1583 + $0x70] sm:$0xff]
    %v1599 = vld [vmem:[%s1583 + $0x78] sm:$0xff]
    %v1600 = vld [vmem:[%s1583 + $0x80] sm:$0xff]
    %v1601 = vld [vmem:[%s1583 + $0x88] sm:$0xff]
    %v1602 = vld [vmem:[%s1583 + $0x90] sm:$0xff]
    %v1603 = vld [vmem:[%s1583 + $0x98] sm:$0xff]
    %v1604 = vld [vmem:[%s1583 + $0xa0] sm:$0xff]
    %v1605 = vld [vmem:[%s1583 + $0xa8] sm:$0xff]
    %v1606 = vld [vmem:[%s1583 + $0xb0] sm:$0xff]
    %v1607 = vld [vmem:[%s1583 + $0xb8] sm:$0xff]
    %v1608 = vld [vmem:[%s1583 + $0xc0] sm:$0xff]
    %v1609 = vld [vmem:[%s1583 + $0xc8] sm:$0xff]
    %v1610 = vld [vmem:[%s1583 + $0xd0] sm:$0xff]
    %v1611 = vld [vmem:[%s1583 + $0xd8] sm:$0xff]
    %v1612 = vld [vmem:[%s1583 + $0xe0] sm:$0xff]
    %v1613 = vld [vmem:[%s1583 + $0xe8] sm:$0xff]
    %v1614 = vld [vmem:[%s1583 + $0xf0] sm:$0xff]
    %v1615 = vld [vmem:[%s1583 + $0xf8] sm:$0xff]
    %v1616 = vld [vmem:[%s1583 + $0x100] sm:$0xff]
    %v1617 = vld [vmem:[%s1583 + $0x108] sm:$0xff]
    %v1618 = vld [vmem:[%s1583 + $0x110] sm:$0xff]
    %v1619 = vld [vmem:[%s1583 + $0x118] sm:$0xff]
    %v1620 = vld [vmem:[%s1583 + $0x120] sm:$0xff]
    %v1621 = vld [vmem:[%s1583 + $0x128] sm:$0xff]
    %v1622 = vld [vmem:[%s1583 + $0x130] sm:$0xff]
    %v1623 = vld [vmem:[%s1583 + $0x138] sm:$0xff]
    %v1624 = vld [vmem:[%s1583 + $0x140] sm:$0xff]
    %v1625 = vld [vmem:[%s1583 + $0x148] sm:$0xff]
    %v1626 = vld [vmem:[%s1583 + $0x150] sm:$0xff]
    %v1627 = vld [vmem:[%s1583 + $0x158] sm:$0xff]
    %v1628 = vld [vmem:[%s1583 + $0x160] sm:$0xff]
    %v1629 = vld [vmem:[%s1583 + $0x168] sm:$0xff]
    %v1630 = vld [vmem:[%s1583 + $0x170] sm:$0xff]
    %v1631 = vld [vmem:[%s1583 + $0x178] sm:$0xff]
    %v1632 = vld [vmem:[%s1583 + $0x180] sm:$0xff]
    %v1633 = vld [vmem:[%s1583 + $0x188] sm:$0xff]
    %v1634 = vld [vmem:[%s1583 + $0x190] sm:$0xff]
    %v1635 = vld [vmem:[%s1583 + $0x198] sm:$0xff]
    %v1636 = vld [vmem:[%s1583 + $0x1a0] sm:$0xff]
    %v1637 = vld [vmem:[%s1583 + $0x1a8] sm:$0xff]
    %v1638 = vld [vmem:[%s1583 + $0x1b0] sm:$0xff]
    %v1639 = vld [vmem:[%s1583 + $0x1b8] sm:$0xff]
    %v1640 = vld [vmem:[%s1583 + $0x1c0] sm:$0xff]
    %v1641 = vld [vmem:[%s1583 + $0x1c8] sm:$0xff]
    %v1642 = vld [vmem:[%s1583 + $0x1d0] sm:$0xff]
    %v1643 = vld [vmem:[%s1583 + $0x1d8] sm:$0xff]
    %v1644 = vld [vmem:[%s1583 + $0x1e0] sm:$0xff]
    %v1645 = vld [vmem:[%s1583 + $0x1e8] sm:$0xff]
    %v1646 = vld [vmem:[%s1583 + $0x1f0] sm:$0xff]
    %v1647 = vld [vmem:[%s1583 + $0x1f8] sm:$0xff]
    %v1648 = vld [vmem:[%s1583 + $0x200] sm:$0xff]
    %v1649 = vld [vmem:[%s1583 + $0x208] sm:$0xff]
    %v1650 = vld [vmem:[%s1583 + $0x210] sm:$0xff]
    %v1651 = vld [vmem:[%s1583 + $0x218] sm:$0xff]
    %v1652 = vld [vmem:[%s1583 + $0x220] sm:$0xff]
    %v1653 = vld [vmem:[%s1583 + $0x228] sm:$0xff]
    %v1654 = vld [vmem:[%s1583 + $0x230] sm:$0xff]
    %v1655 = vld [vmem:[%s1583 + $0x238] sm:$0xff]
    %v1656 = vld [vmem:[%s1583 + $0x240] sm:$0xff]
    %v1657 = vld [vmem:[%s1583 + $0x248] sm:$0xff]
    %v1658 = vld [vmem:[%s1583 + $0x250] sm:$0xff]
    %v1659 = vld [vmem:[%s1583 + $0x258] sm:$0xff]
    %v1660 = vld [vmem:[%s1583 + $0x260] sm:$0xff]
    %v1661 = vld [vmem:[%s1583 + $0x268] sm:$0xff]
    %v1662 = vld [vmem:[%s1583 + $0x270] sm:$0xff]
    %v1663 = vld [vmem:[%s1583 + $0x278] sm:$0xff]
    %v1664 = vld [vmem:[%s1583 + $0x280] sm:$0xff]
    %v1665 = vld [vmem:[%s1583 + $0x288] sm:$0xff]
    %v1666 = vld [vmem:[%s1583 + $0x290] sm:$0xff]
    %v1667 = vld [vmem:[%s1583 + $0x298] sm:$0xff]
    %v1668 = vld [vmem:[%s1583 + $0x2a0] sm:$0xff]
    %v1669 = vld [vmem:[%s1583 + $0x2a8] sm:$0xff]
    %v1670 = vld [vmem:[%s1583 + $0x2b0] sm:$0xff]
    %v1671 = vld [vmem:[%s1583 + $0x2b8] sm:$0xff]
    %v1672 = vld [vmem:[%s1583 + $0x2c0] sm:$0xff]
    %v1673 = vld [vmem:[%s1583 + $0x2c8] sm:$0xff]
    %v1674 = vld [vmem:[%s1583 + $0x2d0] sm:$0xff]
    %v1675 = vld [vmem:[%s1583 + $0x2d8] sm:$0xff]
    %v1676 = vld [vmem:[%s1583 + $0x2e0] sm:$0xff]
    %v1677 = vld [vmem:[%s1583 + $0x2e8] sm:$0xff]
    %v1678 = vld [vmem:[%s1583 + $0x2f0] sm:$0xff]
    %v1679 = vld [vmem:[%s1583 + $0x2f8] sm:$0xff]
    %v1680 = vld [vmem:[%s1583 + $0x300] sm:$0xff]
    %v1681 = vld [vmem:[%s1583 + $0x308] sm:$0xff]
    %v1682 = vld [vmem:[%s1583 + $0x310] sm:$0xff]
    %v1683 = vld [vmem:[%s1583 + $0x318] sm:$0xff]
    %v1684 = vld [vmem:[%s1583 + $0x320] sm:$0xff]
    %v1685 = vld [vmem:[%s1583 + $0x328] sm:$0xff]
    %v1686 = vld [vmem:[%s1583 + $0x330] sm:$0xff]
    %v1687 = vld [vmem:[%s1583 + $0x338] sm:$0xff]
    %v1688 = vld [vmem:[%s1583 + $0x340] sm:$0xff]
    %v1689 = vld [vmem:[%s1583 + $0x348] sm:$0xff]
    %v1690 = vld [vmem:[%s1583 + $0x350] sm:$0xff]
    %v1691 = vld [vmem:[%s1583 + $0x358] sm:$0xff]
    %v1692 = vld [vmem:[%s1583 + $0x360] sm:$0xff]
    %v1693 = vld [vmem:[%s1583 + $0x368] sm:$0xff]
    %v1694 = vld [vmem:[%s1583 + $0x370] sm:$0xff]
    %v1695 = vld [vmem:[%s1583 + $0x378] sm:$0xff]
    %v1696 = vld [vmem:[%s1583 + $0x380] sm:$0xff]
    %v1697 = vld [vmem:[%s1583 + $0x388] sm:$0xff]
    %v1698 = vld [vmem:[%s1583 + $0x390] sm:$0xff]
    %v1699 = vld [vmem:[%s1583 + $0x398] sm:$0xff]
    %v1700 = vld [vmem:[%s1583 + $0x3a0] sm:$0xff]
    %v1701 = vld [vmem:[%s1583 + $0x3a8] sm:$0xff]
    %v1702 = vld [vmem:[%s1583 + $0x3b0] sm:$0xff]
    %v1703 = vld [vmem:[%s1583 + $0x3b8] sm:$0xff]
    %v1704 = vld [vmem:[%s1583 + $0x3c0] sm:$0xff]
    %v1705 = vld [vmem:[%s1583 + $0x3c8] sm:$0xff]
    %v1706 = vld [vmem:[%s1583 + $0x3d0] sm:$0xff]
    %v1707 = vld [vmem:[%s1583 + $0x3d8] sm:$0xff]
    %v1708 = vld [vmem:[%s1583 + $0x3e0] sm:$0xff]
    %v1709 = vld [vmem:[%s1583 + $0x3e8] sm:$0xff]
    %v1710 = vld [vmem:[%s1583 + $0x3f0] sm:$0xff]
    %v1711 = vld [vmem:[%s1583 + $0x3f8] sm:$0xff]
    %1713 = vst [vmem:[#allocation1] ss:$2 sm:$0xff] %v1582
    %v1714 = vld.sshfl [vmem:[#allocation1] sm:$0xff pattern:$0x75316420]
    %v1715 = vld.sshfl [vmem:[#allocation1 + $0x8] sm:$0xff pattern:$0x75316420]
    %1718 = vmatpush.msra.mxu0 %v1644
    %1719 = vmatpush.msra.mxu0 %v1640
    %1720 = vmatpush.msra.mxu0 %v1636
    %1721 = vmatpush.msra.mxu0 %v1632
    %1722 = vmatpush.msra.mxu0 %v1628
    %1723 = vmatpush.msra.mxu0 %v1624
    %1724 = vmatpush.msra.mxu0 %v1620
    %1725 = vmatpush.msra.mxu0 %v1616
    %1726 = vmatpush.msra.mxu0 %v1612
    %1727 = vmatpush.msra.mxu0 %v1608
    %1728 = vmatpush.msra.mxu0 %v1604
    %1729 = vmatpush.msra.mxu0 %v1600
    %1730 = vmatpush.msra.mxu0 %v1596
    %1731 = vmatpush.msra.mxu0 %v1592
    %1732 = vmatpush.msra.mxu0 %v1588
    %1733 = vmatpush.msra.mxu0 %v1584
    %1734 = vmatmul.f32.gmra.mxu0 %v1714
    %v1735 = vpop.f32.mrf.mxu0
    %v1736 = vadd.f32 0.0, %v1735
    %1737 = vdwg.mxu0
    %1738 = vmatpush.msra.mxu0 %v1708
    %1739 = vmatpush.msra.mxu0 %v1704
    %1740 = vmatpush.msra.mxu0 %v1700
    %1741 = vmatpush.msra.mxu0 %v1696
    %1742 = vmatpush.msra.mxu0 %v1692
    %1743 = vmatpush.msra.mxu0 %v1688
    %1744 = vmatpush.msra.mxu0 %v1684
    %1745 = vmatpush.msra.mxu0 %v1680
    %1746 = vmatpush.msra.mxu0 %v1676
    %1747 = vmatpush.msra.mxu0 %v1672
    %1748 = vmatpush.msra.mxu0 %v1668
    %1749 = vmatpush.msra.mxu0 %v1664
    %1750 = vmatpush.msra.mxu0 %v1660
    %1751 = vmatpush.msra.mxu0 %v1656
    %1752 = vmatpush.msra.mxu0 %v1652
    %1753 = vmatpush.msra.mxu0 %v1648
    %1754 = vmatmul.f32.gmra.mxu0 %v1715
    %v1755 = vpop.f32.mrf.mxu0
    %v1756 = vadd.f32 %v1736, %v1755
    %1757 = vdwg.mxu0
    %1758 = vmatpush.msra.mxu0 %v1645
    %1759 = vmatpush.msra.mxu0 %v1641
    %1760 = vmatpush.msra.mxu0 %v1637
    %1761 = vmatpush.msra.mxu0 %v1633
    %1762 = vmatpush.msra.mxu0 %v1629
    %1763 = vmatpush.msra.mxu0 %v1625
    %1764 = vmatpush.msra.mxu0 %v1621
    %1765 = vmatpush.msra.mxu0 %v1617
    %1766 = vmatpush.msra.mxu0 %v1613
    %1767 = vmatpush.msra.mxu0 %v1609
    %1768 = vmatpush.msra.mxu0 %v1605
    %1769 = vmatpush.msra.mxu0 %v1601
    %1770 = vmatpush.msra.mxu0 %v1597
    %1771 = vmatpush.msra.mxu0 %v1593
    %1772 = vmatpush.msra.mxu0 %v1589
    %1773 = vmatpush.msra.mxu0 %v1585
    %1774 = vmatmul.f32.gmra.mxu0 %v1714
    %v1775 = vpop.f32.mrf.mxu0
    %v1776 = vadd.f32 0.0, %v1775
    %1777 = vdwg.mxu0
    %1778 = vmatpush.msra.mxu0 %v1709
    %1779 = vmatpush.msra.mxu0 %v1705
    %1780 = vmatpush.msra.mxu0 %v1701
    %1781 = vmatpush.msra.mxu0 %v1697
    %1782 = vmatpush.msra.mxu0 %v1693
    %1783 = vmatpush.msra.mxu0 %v1689
    %1784 = vmatpush.msra.mxu0 %v1685
    %1785 = vmatpush.msra.mxu0 %v1681
    %1786 = vmatpush.msra.mxu0 %v1677
    %1787 = vmatpush.msra.mxu0 %v1673
    %1788 = vmatpush.msra.mxu0 %v1669
    %1789 = vmatpush.msra.mxu0 %v1665
    %1790 = vmatpush.msra.mxu0 %v1661
    %1791 = vmatpush.msra.mxu0 %v1657
    %1792 = vmatpush.msra.mxu0 %v1653
    %1793 = vmatpush.msra.mxu0 %v1649
    %1794 = vmatmul.f32.gmra.mxu0 %v1715
    %v1795 = vpop.f32.mrf.mxu0
    %v1796 = vadd.f32 %v1776, %v1795
    %1797 = vdwg.mxu0
    %1798 = vmatpush.msra.mxu0 %v1646
    %1799 = vmatpush.msra.mxu0 %v1642
    %1800 = vmatpush.msra.mxu0 %v1638
    %1801 = vmatpush.msra.mxu0 %v1634
    %1802 = vmatpush.msra.mxu0 %v1630
    %1803 = vmatpush.msra.mxu0 %v1626
    %1804 = vmatpush.msra.mxu0 %v1622
    %1805 = vmatpush.msra.mxu0 %v1618
    %1806 = vmatpush.msra.mxu0 %v1614
    %1807 = vmatpush.msra.mxu0 %v1610
    %1808 = vmatpush.msra.mxu0 %v1606
    %1809 = vmatpush.msra.mxu0 %v1602
    %1810 = vmatpush.msra.mxu0 %v1598
    %1811 = vmatpush.msra.mxu0 %v1594
    %1812 = vmatpush.msra.mxu0 %v1590
    %1813 = vmatpush.msra.mxu0 %v1586
    %1814 = vmatmul.f32.gmra.mxu0 %v1714
    %v1815 = vpop.f32.mrf.mxu0
    %v1816 = vadd.f32 0.0, %v1815
    %1817 = vdwg.mxu0
    %1818 = vmatpush.msra.mxu0 %v1710
    %1819 = vmatpush.msra.mxu0 %v1706
    %1820 = vmatpush.msra.mxu0 %v1702
    %1821 = vmatpush.msra.mxu0 %v1698
    %1822 = vmatpush.msra.mxu0 %v1694
    %1823 = vmatpush.msra.mxu0 %v1690
    %1824 = vmatpush.msra.mxu0 %v1686
    %1825 = vmatpush.msra.mxu0 %v1682
    %1826 = vmatpush.msra.mxu0 %v1678
    %1827 = vmatpush.msra.mxu0 %v1674
    %1828 = vmatpush.msra.mxu0 %v1670
    %1829 = vmatpush.msra.mxu0 %v1666
    %1830 = vmatpush.msra.mxu0 %v1662
    %1831 = vmatpush.msra.mxu0 %v1658
    %1832 = vmatpush.msra.mxu0 %v1654
    %1833 = vmatpush.msra.mxu0 %v1650
    %1834 = vmatmul.f32.gmra.mxu0 %v1715
    %v1835 = vpop.f32.mrf.mxu0
    %v1836 = vadd.f32 %v1816, %v1835
    %1837 = vdwg.mxu0
    %1838 = vmatpush.msra.mxu0 %v1647
    %1839 = vmatpush.msra.mxu0 %v1643
    %1840 = vmatpush.msra.mxu0 %v1639
    %1841 = vmatpush.msra.mxu0 %v1635
    %1842 = vmatpush.msra.mxu0 %v1631
    %1843 = vmatpush.msra.mxu0 %v1627
    %1844 = vmatpush.msra.mxu0 %v1623
    %1845 = vmatpush.msra.mxu0 %v1619
    %1846 = vmatpush.msra.mxu0 %v1615
    %1847 = vmatpush.msra.mxu0 %v1611
    %1848 = vmatpush.msra.mxu0 %v1607
    %1849 = vmatpush.msra.mxu0 %v1603
    %1850 = vmatpush.msra.mxu0 %v1599
    %1851 = vmatpush.msra.mxu0 %v1595
    %1852 = vmatpush.msra.mxu0 %v1591
    %1853 = vmatpush.msra.mxu0 %v1587
    %1854 = vmatmul.f32.gmra.mxu0 %v1714
    %v1855 = vpop.f32.mrf.mxu0
    %v1856 = vadd.f32 0.0, %v1855
    %1857 = vdwg.mxu0
    %1858 = vmatpush.msra.mxu0 %v1711
    %1859 = vmatpush.msra.mxu0 %v1707
    %1860 = vmatpush.msra.mxu0 %v1703
    %1861 = vmatpush.msra.mxu0 %v1699
    %1862 = vmatpush.msra.mxu0 %v1695
    %1863 = vmatpush.msra.mxu0 %v1691
    %1864 = vmatpush.msra.mxu0 %v1687
    %1865 = vmatpush.msra.mxu0 %v1683
    %1866 = vmatpush.msra.mxu0 %v1679
    %1867 = vmatpush.msra.mxu0 %v1675
    %1868 = vmatpush.msra.mxu0 %v1671
    %1869 = vmatpush.msra.mxu0 %v1667
    %1870 = vmatpush.msra.mxu0 %v1663
    %1871 = vmatpush.msra.mxu0 %v1659
    %1872 = vmatpush.msra.mxu0 %v1655
    %1873 = vmatpush.msra.mxu0 %v1651
    %1874 = vmatmul.f32.gmra.mxu0 %v1715
    %v1875 = vpop.f32.mrf.mxu0
    %v1876 = vadd.f32 %v1856, %v1875
    %1877 = vdwg.mxu0
    %v1882 = vrot.slane %v1796, 4
    %v1883 = vrot.slane %v1876, 4
    %v1884 = vsel %vm343, %v1756, %v1882
    %v1885 = vsel %vm343, %v1836, %v1883
    %1888 = vst [vmem:[#allocation7 + $0x50] sm:$0xff] %v1884
    %1889 = vst [vmem:[#allocation7 + $0x58] sm:$0xff] %v1885
    %v1890 = vld [vmem:[#allocation2 + $0x30] sm:$0xff]
    %s1891 = scalar_lea.vmem [#allocation5], 6144
    %v1892 = vld [vmem:[%s1891] sm:$0xff]
    %v1893 = vld [vmem:[%s1891 + $0x8] sm:$0xff]
    %v1894 = vld [vmem:[%s1891 + $0x10] sm:$0xff]
    %v1895 = vld [vmem:[%s1891 + $0x18] sm:$0xff]
    %v1896 = vld [vmem:[%s1891 + $0x20] sm:$0xff]
    %v1897 = vld [vmem:[%s1891 + $0x28] sm:$0xff]
    %v1898 = vld [vmem:[%s1891 + $0x30] sm:$0xff]
    %v1899 = vld [vmem:[%s1891 + $0x38] sm:$0xff]
    %v1900 = vld [vmem:[%s1891 + $0x40] sm:$0xff]
    %v1901 = vld [vmem:[%s1891 + $0x48] sm:$0xff]
    %v1902 = vld [vmem:[%s1891 + $0x50] sm:$0xff]
    %v1903 = vld [vmem:[%s1891 + $0x58] sm:$0xff]
    %v1904 = vld [vmem:[%s1891 + $0x60] sm:$0xff]
    %v1905 = vld [vmem:[%s1891 + $0x68] sm:$0xff]
    %v1906 = vld [vmem:[%s1891 + $0x70] sm:$0xff]
    %v1907 = vld [vmem:[%s1891 + $0x78] sm:$0xff]
    %v1908 = vld [vmem:[%s1891 + $0x80] sm:$0xff]
    %v1909 = vld [vmem:[%s1891 + $0x88] sm:$0xff]
    %v1910 = vld [vmem:[%s1891 + $0x90] sm:$0xff]
    %v1911 = vld [vmem:[%s1891 + $0x98] sm:$0xff]
    %v1912 = vld [vmem:[%s1891 + $0xa0] sm:$0xff]
    %v1913 = vld [vmem:[%s1891 + $0xa8] sm:$0xff]
    %v1914 = vld [vmem:[%s1891 + $0xb0] sm:$0xff]
    %v1915 = vld [vmem:[%s1891 + $0xb8] sm:$0xff]
    %v1916 = vld [vmem:[%s1891 + $0xc0] sm:$0xff]
    %v1917 = vld [vmem:[%s1891 + $0xc8] sm:$0xff]
    %v1918 = vld [vmem:[%s1891 + $0xd0] sm:$0xff]
    %v1919 = vld [vmem:[%s1891 + $0xd8] sm:$0xff]
    %v1920 = vld [vmem:[%s1891 + $0xe0] sm:$0xff]
    %v1921 = vld [vmem:[%s1891 + $0xe8] sm:$0xff]
    %v1922 = vld [vmem:[%s1891 + $0xf0] sm:$0xff]
    %v1923 = vld [vmem:[%s1891 + $0xf8] sm:$0xff]
    %v1924 = vld [vmem:[%s1891 + $0x100] sm:$0xff]
    %v1925 = vld [vmem:[%s1891 + $0x108] sm:$0xff]
    %v1926 = vld [vmem:[%s1891 + $0x110] sm:$0xff]
    %v1927 = vld [vmem:[%s1891 + $0x118] sm:$0xff]
    %v1928 = vld [vmem:[%s1891 + $0x120] sm:$0xff]
    %v1929 = vld [vmem:[%s1891 + $0x128] sm:$0xff]
    %v1930 = vld [vmem:[%s1891 + $0x130] sm:$0xff]
    %v1931 = vld [vmem:[%s1891 + $0x138] sm:$0xff]
    %v1932 = vld [vmem:[%s1891 + $0x140] sm:$0xff]
    %v1933 = vld [vmem:[%s1891 + $0x148] sm:$0xff]
    %v1934 = vld [vmem:[%s1891 + $0x150] sm:$0xff]
    %v1935 = vld [vmem:[%s1891 + $0x158] sm:$0xff]
    %v1936 = vld [vmem:[%s1891 + $0x160] sm:$0xff]
    %v1937 = vld [vmem:[%s1891 + $0x168] sm:$0xff]
    %v1938 = vld [vmem:[%s1891 + $0x170] sm:$0xff]
    %v1939 = vld [vmem:[%s1891 + $0x178] sm:$0xff]
    %v1940 = vld [vmem:[%s1891 + $0x180] sm:$0xff]
    %v1941 = vld [vmem:[%s1891 + $0x188] sm:$0xff]
    %v1942 = vld [vmem:[%s1891 + $0x190] sm:$0xff]
    %v1943 = vld [vmem:[%s1891 + $0x198] sm:$0xff]
    %v1944 = vld [vmem:[%s1891 + $0x1a0] sm:$0xff]
    %v1945 = vld [vmem:[%s1891 + $0x1a8] sm:$0xff]
    %v1946 = vld [vmem:[%s1891 + $0x1b0] sm:$0xff]
    %v1947 = vld [vmem:[%s1891 + $0x1b8] sm:$0xff]
    %v1948 = vld [vmem:[%s1891 + $0x1c0] sm:$0xff]
    %v1949 = vld [vmem:[%s1891 + $0x1c8] sm:$0xff]
    %v1950 = vld [vmem:[%s1891 + $0x1d0] sm:$0xff]
    %v1951 = vld [vmem:[%s1891 + $0x1d8] sm:$0xff]
    %v1952 = vld [vmem:[%s1891 + $0x1e0] sm:$0xff]
    %v1953 = vld [vmem:[%s1891 + $0x1e8] sm:$0xff]
    %v1954 = vld [vmem:[%s1891 + $0x1f0] sm:$0xff]
    %v1955 = vld [vmem:[%s1891 + $0x1f8] sm:$0xff]
    %v1956 = vld [vmem:[%s1891 + $0x200] sm:$0xff]
    %v1957 = vld [vmem:[%s1891 + $0x208] sm:$0xff]
    %v1958 = vld [vmem:[%s1891 + $0x210] sm:$0xff]
    %v1959 = vld [vmem:[%s1891 + $0x218] sm:$0xff]
    %v1960 = vld [vmem:[%s1891 + $0x220] sm:$0xff]
    %v1961 = vld [vmem:[%s1891 + $0x228] sm:$0xff]
    %v1962 = vld [vmem:[%s1891 + $0x230] sm:$0xff]
    %v1963 = vld [vmem:[%s1891 + $0x238] sm:$0xff]
    %v1964 = vld [vmem:[%s1891 + $0x240] sm:$0xff]
    %v1965 = vld [vmem:[%s1891 + $0x248] sm:$0xff]
    %v1966 = vld [vmem:[%s1891 + $0x250] sm:$0xff]
    %v1967 = vld [vmem:[%s1891 + $0x258] sm:$0xff]
    %v1968 = vld [vmem:[%s1891 + $0x260] sm:$0xff]
    %v1969 = vld [vmem:[%s1891 + $0x268] sm:$0xff]
    %v1970 = vld [vmem:[%s1891 + $0x270] sm:$0xff]
    %v1971 = vld [vmem:[%s1891 + $0x278] sm:$0xff]
    %v1972 = vld [vmem:[%s1891 + $0x280] sm:$0xff]
    %v1973 = vld [vmem:[%s1891 + $0x288] sm:$0xff]
    %v1974 = vld [vmem:[%s1891 + $0x290] sm:$0xff]
    %v1975 = vld [vmem:[%s1891 + $0x298] sm:$0xff]
    %v1976 = vld [vmem:[%s1891 + $0x2a0] sm:$0xff]
    %v1977 = vld [vmem:[%s1891 + $0x2a8] sm:$0xff]
    %v1978 = vld [vmem:[%s1891 + $0x2b0] sm:$0xff]
    %v1979 = vld [vmem:[%s1891 + $0x2b8] sm:$0xff]
    %v1980 = vld [vmem:[%s1891 + $0x2c0] sm:$0xff]
    %v1981 = vld [vmem:[%s1891 + $0x2c8] sm:$0xff]
    %v1982 = vld [vmem:[%s1891 + $0x2d0] sm:$0xff]
    %v1983 = vld [vmem:[%s1891 + $0x2d8] sm:$0xff]
    %v1984 = vld [vmem:[%s1891 + $0x2e0] sm:$0xff]
    %v1985 = vld [vmem:[%s1891 + $0x2e8] sm:$0xff]
    %v1986 = vld [vmem:[%s1891 + $0x2f0] sm:$0xff]
    %v1987 = vld [vmem:[%s1891 + $0x2f8] sm:$0xff]
    %v1988 = vld [vmem:[%s1891 + $0x300] sm:$0xff]
    %v1989 = vld [vmem:[%s1891 + $0x308] sm:$0xff]
    %v1990 = vld [vmem:[%s1891 + $0x310] sm:$0xff]
    %v1991 = vld [vmem:[%s1891 + $0x318] sm:$0xff]
    %v1992 = vld [vmem:[%s1891 + $0x320] sm:$0xff]
    %v1993 = vld [vmem:[%s1891 + $0x328] sm:$0xff]
    %v1994 = vld [vmem:[%s1891 + $0x330] sm:$0xff]
    %v1995 = vld [vmem:[%s1891 + $0x338] sm:$0xff]
    %v1996 = vld [vmem:[%s1891 + $0x340] sm:$0xff]
    %v1997 = vld [vmem:[%s1891 + $0x348] sm:$0xff]
    %v1998 = vld [vmem:[%s1891 + $0x350] sm:$0xff]
    %v1999 = vld [vmem:[%s1891 + $0x358] sm:$0xff]
    %v2000 = vld [vmem:[%s1891 + $0x360] sm:$0xff]
    %v2001 = vld [vmem:[%s1891 + $0x368] sm:$0xff]
    %v2002 = vld [vmem:[%s1891 + $0x370] sm:$0xff]
    %v2003 = vld [vmem:[%s1891 + $0x378] sm:$0xff]
    %v2004 = vld [vmem:[%s1891 + $0x380] sm:$0xff]
    %v2005 = vld [vmem:[%s1891 + $0x388] sm:$0xff]
    %v2006 = vld [vmem:[%s1891 + $0x390] sm:$0xff]
    %v2007 = vld [vmem:[%s1891 + $0x398] sm:$0xff]
    %v2008 = vld [vmem:[%s1891 + $0x3a0] sm:$0xff]
    %v2009 = vld [vmem:[%s1891 + $0x3a8] sm:$0xff]
    %v2010 = vld [vmem:[%s1891 + $0x3b0] sm:$0xff]
    %v2011 = vld [vmem:[%s1891 + $0x3b8] sm:$0xff]
    %v2012 = vld [vmem:[%s1891 + $0x3c0] sm:$0xff]
    %v2013 = vld [vmem:[%s1891 + $0x3c8] sm:$0xff]
    %v2014 = vld [vmem:[%s1891 + $0x3d0] sm:$0xff]
    %v2015 = vld [vmem:[%s1891 + $0x3d8] sm:$0xff]
    %v2016 = vld [vmem:[%s1891 + $0x3e0] sm:$0xff]
    %v2017 = vld [vmem:[%s1891 + $0x3e8] sm:$0xff]
    %v2018 = vld [vmem:[%s1891 + $0x3f0] sm:$0xff]
    %v2019 = vld [vmem:[%s1891 + $0x3f8] sm:$0xff]
    %2021 = vst [vmem:[#allocation1] ss:$2 sm:$0xff] %v1890
    %v2022 = vld.sshfl [vmem:[#allocation1] sm:$0xff pattern:$0x75316420]
    %v2023 = vld.sshfl [vmem:[#allocation1 + $0x8] sm:$0xff pattern:$0x75316420]
    %2026 = vmatpush.msra.mxu0 %v1952
    %2027 = vmatpush.msra.mxu0 %v1948
    %2028 = vmatpush.msra.mxu0 %v1944
    %2029 = vmatpush.msra.mxu0 %v1940
    %2030 = vmatpush.msra.mxu0 %v1936
    %2031 = vmatpush.msra.mxu0 %v1932
    %2032 = vmatpush.msra.mxu0 %v1928
    %2033 = vmatpush.msra.mxu0 %v1924
    %2034 = vmatpush.msra.mxu0 %v1920
    %2035 = vmatpush.msra.mxu0 %v1916
    %2036 = vmatpush.msra.mxu0 %v1912
    %2037 = vmatpush.msra.mxu0 %v1908
    %2038 = vmatpush.msra.mxu0 %v1904
    %2039 = vmatpush.msra.mxu0 %v1900
    %2040 = vmatpush.msra.mxu0 %v1896
    %2041 = vmatpush.msra.mxu0 %v1892
    %2042 = vmatmul.f32.gmra.mxu0 %v2022
    %v2043 = vpop.f32.mrf.mxu0
    %v2044 = vadd.f32 0.0, %v2043
    %2045 = vdwg.mxu0
    %2046 = vmatpush.msra.mxu0 %v2016
    %2047 = vmatpush.msra.mxu0 %v2012
    %2048 = vmatpush.msra.mxu0 %v2008
    %2049 = vmatpush.msra.mxu0 %v2004
    %2050 = vmatpush.msra.mxu0 %v2000
    %2051 = vmatpush.msra.mxu0 %v1996
    %2052 = vmatpush.msra.mxu0 %v1992
    %2053 = vmatpush.msra.mxu0 %v1988
    %2054 = vmatpush.msra.mxu0 %v1984
    %2055 = vmatpush.msra.mxu0 %v1980
    %2056 = vmatpush.msra.mxu0 %v1976
    %2057 = vmatpush.msra.mxu0 %v1972
    %2058 = vmatpush.msra.mxu0 %v1968
    %2059 = vmatpush.msra.mxu0 %v1964
    %2060 = vmatpush.msra.mxu0 %v1960
    %2061 = vmatpush.msra.mxu0 %v1956
    %2062 = vmatmul.f32.gmra.mxu0 %v2023
    %v2063 = vpop.f32.mrf.mxu0
    %v2064 = vadd.f32 %v2044, %v2063
    %2065 = vdwg.mxu0
    %2066 = vmatpush.msra.mxu0 %v1953
    %2067 = vmatpush.msra.mxu0 %v1949
    %2068 = vmatpush.msra.mxu0 %v1945
    %2069 = vmatpush.msra.mxu0 %v1941
    %2070 = vmatpush.msra.mxu0 %v1937
    %2071 = vmatpush.msra.mxu0 %v1933
    %2072 = vmatpush.msra.mxu0 %v1929
    %2073 = vmatpush.msra.mxu0 %v1925
    %2074 = vmatpush.msra.mxu0 %v1921
    %2075 = vmatpush.msra.mxu0 %v1917
    %2076 = vmatpush.msra.mxu0 %v1913
    %2077 = vmatpush.msra.mxu0 %v1909
    %2078 = vmatpush.msra.mxu0 %v1905
    %2079 = vmatpush.msra.mxu0 %v1901
    %2080 = vmatpush.msra.mxu0 %v1897
    %2081 = vmatpush.msra.mxu0 %v1893
    %2082 = vmatmul.f32.gmra.mxu0 %v2022
    %v2083 = vpop.f32.mrf.mxu0
    %v2084 = vadd.f32 0.0, %v2083
    %2085 = vdwg.mxu0
    %2086 = vmatpush.msra.mxu0 %v2017
    %2087 = vmatpush.msra.mxu0 %v2013
    %2088 = vmatpush.msra.mxu0 %v2009
    %2089 = vmatpush.msra.mxu0 %v2005
    %2090 = vmatpush.msra.mxu0 %v2001
    %2091 = vmatpush.msra.mxu0 %v1997
    %2092 = vmatpush.msra.mxu0 %v1993
    %2093 = vmatpush.msra.mxu0 %v1989
    %2094 = vmatpush.msra.mxu0 %v1985
    %2095 = vmatpush.msra.mxu0 %v1981
    %2096 = vmatpush.msra.mxu0 %v1977
    %2097 = vmatpush.msra.mxu0 %v1973
    %2098 = vmatpush.msra.mxu0 %v1969
    %2099 = vmatpush.msra.mxu0 %v1965
    %2100 = vmatpush.msra.mxu0 %v1961
    %2101 = vmatpush.msra.mxu0 %v1957
    %2102 = vmatmul.f32.gmra.mxu0 %v2023
    %v2103 = vpop.f32.mrf.mxu0
    %v2104 = vadd.f32 %v2084, %v2103
    %2105 = vdwg.mxu0
    %2106 = vmatpush.msra.mxu0 %v1954
    %2107 = vmatpush.msra.mxu0 %v1950
    %2108 = vmatpush.msra.mxu0 %v1946
    %2109 = vmatpush.msra.mxu0 %v1942
    %2110 = vmatpush.msra.mxu0 %v1938
    %2111 = vmatpush.msra.mxu0 %v1934
    %2112 = vmatpush.msra.mxu0 %v1930
    %2113 = vmatpush.msra.mxu0 %v1926
    %2114 = vmatpush.msra.mxu0 %v1922
    %2115 = vmatpush.msra.mxu0 %v1918
    %2116 = vmatpush.msra.mxu0 %v1914
    %2117 = vmatpush.msra.mxu0 %v1910
    %2118 = vmatpush.msra.mxu0 %v1906
    %2119 = vmatpush.msra.mxu0 %v1902
    %2120 = vmatpush.msra.mxu0 %v1898
    %2121 = vmatpush.msra.mxu0 %v1894
    %2122 = vmatmul.f32.gmra.mxu0 %v2022
    %v2123 = vpop.f32.mrf.mxu0
    %v2124 = vadd.f32 0.0, %v2123
    %2125 = vdwg.mxu0
    %2126 = vmatpush.msra.mxu0 %v2018
    %2127 = vmatpush.msra.mxu0 %v2014
    %2128 = vmatpush.msra.mxu0 %v2010
    %2129 = vmatpush.msra.mxu0 %v2006
    %2130 = vmatpush.msra.mxu0 %v2002
    %2131 = vmatpush.msra.mxu0 %v1998
    %2132 = vmatpush.msra.mxu0 %v1994
    %2133 = vmatpush.msra.mxu0 %v1990
    %2134 = vmatpush.msra.mxu0 %v1986
    %2135 = vmatpush.msra.mxu0 %v1982
    %2136 = vmatpush.msra.mxu0 %v1978
    %2137 = vmatpush.msra.mxu0 %v1974
    %2138 = vmatpush.msra.mxu0 %v1970
    %2139 = vmatpush.msra.mxu0 %v1966
    %2140 = vmatpush.msra.mxu0 %v1962
    %2141 = vmatpush.msra.mxu0 %v1958
    %2142 = vmatmul.f32.gmra.mxu0 %v2023
    %v2143 = vpop.f32.mrf.mxu0
    %v2144 = vadd.f32 %v2124, %v2143
    %2145 = vdwg.mxu0
    %2146 = vmatpush.msra.mxu0 %v1955
    %2147 = vmatpush.msra.mxu0 %v1951
    %2148 = vmatpush.msra.mxu0 %v1947
    %2149 = vmatpush.msra.mxu0 %v1943
    %2150 = vmatpush.msra.mxu0 %v1939
    %2151 = vmatpush.msra.mxu0 %v1935
    %2152 = vmatpush.msra.mxu0 %v1931
    %2153 = vmatpush.msra.mxu0 %v1927
    %2154 = vmatpush.msra.mxu0 %v1923
    %2155 = vmatpush.msra.mxu0 %v1919
    %2156 = vmatpush.msra.mxu0 %v1915
    %2157 = vmatpush.msra.mxu0 %v1911
    %2158 = vmatpush.msra.mxu0 %v1907
    %2159 = vmatpush.msra.mxu0 %v1903
    %2160 = vmatpush.msra.mxu0 %v1899
    %2161 = vmatpush.msra.mxu0 %v1895
    %2162 = vmatmul.f32.gmra.mxu0 %v2022
    %v2163 = vpop.f32.mrf.mxu0
    %v2164 = vadd.f32 0.0, %v2163
    %2165 = vdwg.mxu0
    %2166 = vmatpush.msra.mxu0 %v2019
    %2167 = vmatpush.msra.mxu0 %v2015
    %2168 = vmatpush.msra.mxu0 %v2011
    %2169 = vmatpush.msra.mxu0 %v2007
    %2170 = vmatpush.msra.mxu0 %v2003
    %2171 = vmatpush.msra.mxu0 %v1999
    %2172 = vmatpush.msra.mxu0 %v1995
    %2173 = vmatpush.msra.mxu0 %v1991
    %2174 = vmatpush.msra.mxu0 %v1987
    %2175 = vmatpush.msra.mxu0 %v1983
    %2176 = vmatpush.msra.mxu0 %v1979
    %2177 = vmatpush.msra.mxu0 %v1975
    %2178 = vmatpush.msra.mxu0 %v1971
    %2179 = vmatpush.msra.mxu0 %v1967
    %2180 = vmatpush.msra.mxu0 %v1963
    %2181 = vmatpush.msra.mxu0 %v1959
    %2182 = vmatmul.f32.gmra.mxu0 %v2023
    %v2183 = vpop.f32.mrf.mxu0
    %v2184 = vadd.f32 %v2164, %v2183
    %2185 = vdwg.mxu0
    %v2190 = vrot.slane %v2104, 4
    %v2191 = vrot.slane %v2184, 4
    %v2192 = vsel %vm343, %v2064, %v2190
    %v2193 = vsel %vm343, %v2144, %v2191
    %2196 = vst [vmem:[#allocation7 + $0x60] sm:$0xff] %v2192
    %2197 = vst [vmem:[#allocation7 + $0x68] sm:$0xff] %v2193
    %v2198 = vld [vmem:[#allocation2 + $0x38] sm:$0xff]
    %s2199 = scalar_lea.vmem [#allocation5], 7168
    %v2200 = vld [vmem:[%s2199] sm:$0xff]
    %v2201 = vld [vmem:[%s2199 + $0x8] sm:$0xff]
    %v2202 = vld [vmem:[%s2199 + $0x10] sm:$0xff]
    %v2203 = vld [vmem:[%s2199 + $0x18] sm:$0xff]
    %v2204 = vld [vmem:[%s2199 + $0x20] sm:$0xff]
    %v2205 = vld [vmem:[%s2199 + $0x28] sm:$0xff]
    %v2206 = vld [vmem:[%s2199 + $0x30] sm:$0xff]
    %v2207 = vld [vmem:[%s2199 + $0x38] sm:$0xff]
    %v2208 = vld [vmem:[%s2199 + $0x40] sm:$0xff]
    %v2209 = vld [vmem:[%s2199 + $0x48] sm:$0xff]
    %v2210 = vld [vmem:[%s2199 + $0x50] sm:$0xff]
    %v2211 = vld [vmem:[%s2199 + $0x58] sm:$0xff]
    %v2212 = vld [vmem:[%s2199 + $0x60] sm:$0xff]
    %v2213 = vld [vmem:[%s2199 + $0x68] sm:$0xff]
    %v2214 = vld [vmem:[%s2199 + $0x70] sm:$0xff]
    %v2215 = vld [vmem:[%s2199 + $0x78] sm:$0xff]
    %v2216 = vld [vmem:[%s2199 + $0x80] sm:$0xff]
    %v2217 = vld [vmem:[%s2199 + $0x88] sm:$0xff]
    %v2218 = vld [vmem:[%s2199 + $0x90] sm:$0xff]
    %v2219 = vld [vmem:[%s2199 + $0x98] sm:$0xff]
    %v2220 = vld [vmem:[%s2199 + $0xa0] sm:$0xff]
    %v2221 = vld [vmem:[%s2199 + $0xa8] sm:$0xff]
    %v2222 = vld [vmem:[%s2199 + $0xb0] sm:$0xff]
    %v2223 = vld [vmem:[%s2199 + $0xb8] sm:$0xff]
    %v2224 = vld [vmem:[%s2199 + $0xc0] sm:$0xff]
    %v2225 = vld [vmem:[%s2199 + $0xc8] sm:$0xff]
    %v2226 = vld [vmem:[%s2199 + $0xd0] sm:$0xff]
    %v2227 = vld [vmem:[%s2199 + $0xd8] sm:$0xff]
    %v2228 = vld [vmem:[%s2199 + $0xe0] sm:$0xff]
    %v2229 = vld [vmem:[%s2199 + $0xe8] sm:$0xff]
    %v2230 = vld [vmem:[%s2199 + $0xf0] sm:$0xff]
    %v2231 = vld [vmem:[%s2199 + $0xf8] sm:$0xff]
    %v2232 = vld [vmem:[%s2199 + $0x100] sm:$0xff]
    %v2233 = vld [vmem:[%s2199 + $0x108] sm:$0xff]
    %v2234 = vld [vmem:[%s2199 + $0x110] sm:$0xff]
    %v2235 = vld [vmem:[%s2199 + $0x118] sm:$0xff]
    %v2236 = vld [vmem:[%s2199 + $0x120] sm:$0xff]
    %v2237 = vld [vmem:[%s2199 + $0x128] sm:$0xff]
    %v2238 = vld [vmem:[%s2199 + $0x130] sm:$0xff]
    %v2239 = vld [vmem:[%s2199 + $0x138] sm:$0xff]
    %v2240 = vld [vmem:[%s2199 + $0x140] sm:$0xff]
    %v2241 = vld [vmem:[%s2199 + $0x148] sm:$0xff]
    %v2242 = vld [vmem:[%s2199 + $0x150] sm:$0xff]
    %v2243 = vld [vmem:[%s2199 + $0x158] sm:$0xff]
    %v2244 = vld [vmem:[%s2199 + $0x160] sm:$0xff]
    %v2245 = vld [vmem:[%s2199 + $0x168] sm:$0xff]
    %v2246 = vld [vmem:[%s2199 + $0x170] sm:$0xff]
    %v2247 = vld [vmem:[%s2199 + $0x178] sm:$0xff]
    %v2248 = vld [vmem:[%s2199 + $0x180] sm:$0xff]
    %v2249 = vld [vmem:[%s2199 + $0x188] sm:$0xff]
    %v2250 = vld [vmem:[%s2199 + $0x190] sm:$0xff]
    %v2251 = vld [vmem:[%s2199 + $0x198] sm:$0xff]
    %v2252 = vld [vmem:[%s2199 + $0x1a0] sm:$0xff]
    %v2253 = vld [vmem:[%s2199 + $0x1a8] sm:$0xff]
    %v2254 = vld [vmem:[%s2199 + $0x1b0] sm:$0xff]
    %v2255 = vld [vmem:[%s2199 + $0x1b8] sm:$0xff]
    %v2256 = vld [vmem:[%s2199 + $0x1c0] sm:$0xff]
    %v2257 = vld [vmem:[%s2199 + $0x1c8] sm:$0xff]
    %v2258 = vld [vmem:[%s2199 + $0x1d0] sm:$0xff]
    %v2259 = vld [vmem:[%s2199 + $0x1d8] sm:$0xff]
    %v2260 = vld [vmem:[%s2199 + $0x1e0] sm:$0xff]
    %v2261 = vld [vmem:[%s2199 + $0x1e8] sm:$0xff]
    %v2262 = vld [vmem:[%s2199 + $0x1f0] sm:$0xff]
    %v2263 = vld [vmem:[%s2199 + $0x1f8] sm:$0xff]
    %v2264 = vld [vmem:[%s2199 + $0x200] sm:$0xff]
    %v2265 = vld [vmem:[%s2199 + $0x208] sm:$0xff]
    %v2266 = vld [vmem:[%s2199 + $0x210] sm:$0xff]
    %v2267 = vld [vmem:[%s2199 + $0x218] sm:$0xff]
    %v2268 = vld [vmem:[%s2199 + $0x220] sm:$0xff]
    %v2269 = vld [vmem:[%s2199 + $0x228] sm:$0xff]
    %v2270 = vld [vmem:[%s2199 + $0x230] sm:$0xff]
    %v2271 = vld [vmem:[%s2199 + $0x238] sm:$0xff]
    %v2272 = vld [vmem:[%s2199 + $0x240] sm:$0xff]
    %v2273 = vld [vmem:[%s2199 + $0x248] sm:$0xff]
    %v2274 = vld [vmem:[%s2199 + $0x250] sm:$0xff]
    %v2275 = vld [vmem:[%s2199 + $0x258] sm:$0xff]
    %v2276 = vld [vmem:[%s2199 + $0x260] sm:$0xff]
    %v2277 = vld [vmem:[%s2199 + $0x268] sm:$0xff]
    %v2278 = vld [vmem:[%s2199 + $0x270] sm:$0xff]
    %v2279 = vld [vmem:[%s2199 + $0x278] sm:$0xff]
    %v2280 = vld [vmem:[%s2199 + $0x280] sm:$0xff]
    %v2281 = vld [vmem:[%s2199 + $0x288] sm:$0xff]
    %v2282 = vld [vmem:[%s2199 + $0x290] sm:$0xff]
    %v2283 = vld [vmem:[%s2199 + $0x298] sm:$0xff]
    %v2284 = vld [vmem:[%s2199 + $0x2a0] sm:$0xff]
    %v2285 = vld [vmem:[%s2199 + $0x2a8] sm:$0xff]
    %v2286 = vld [vmem:[%s2199 + $0x2b0] sm:$0xff]
    %v2287 = vld [vmem:[%s2199 + $0x2b8] sm:$0xff]
    %v2288 = vld [vmem:[%s2199 + $0x2c0] sm:$0xff]
    %v2289 = vld [vmem:[%s2199 + $0x2c8] sm:$0xff]
    %v2290 = vld [vmem:[%s2199 + $0x2d0] sm:$0xff]
    %v2291 = vld [vmem:[%s2199 + $0x2d8] sm:$0xff]
    %v2292 = vld [vmem:[%s2199 + $0x2e0] sm:$0xff]
    %v2293 = vld [vmem:[%s2199 + $0x2e8] sm:$0xff]
    %v2294 = vld [vmem:[%s2199 + $0x2f0] sm:$0xff]
    %v2295 = vld [vmem:[%s2199 + $0x2f8] sm:$0xff]
    %v2296 = vld [vmem:[%s2199 + $0x300] sm:$0xff]
    %v2297 = vld [vmem:[%s2199 + $0x308] sm:$0xff]
    %v2298 = vld [vmem:[%s2199 + $0x310] sm:$0xff]
    %v2299 = vld [vmem:[%s2199 + $0x318] sm:$0xff]
    %v2300 = vld [vmem:[%s2199 + $0x320] sm:$0xff]
    %v2301 = vld [vmem:[%s2199 + $0x328] sm:$0xff]
    %v2302 = vld [vmem:[%s2199 + $0x330] sm:$0xff]
    %v2303 = vld [vmem:[%s2199 + $0x338] sm:$0xff]
    %v2304 = vld [vmem:[%s2199 + $0x340] sm:$0xff]
    %v2305 = vld [vmem:[%s2199 + $0x348] sm:$0xff]
    %v2306 = vld [vmem:[%s2199 + $0x350] sm:$0xff]
    %v2307 = vld [vmem:[%s2199 + $0x358] sm:$0xff]
    %v2308 = vld [vmem:[%s2199 + $0x360] sm:$0xff]
    %v2309 = vld [vmem:[%s2199 + $0x368] sm:$0xff]
    %v2310 = vld [vmem:[%s2199 + $0x370] sm:$0xff]
    %v2311 = vld [vmem:[%s2199 + $0x378] sm:$0xff]
    %v2312 = vld [vmem:[%s2199 + $0x380] sm:$0xff]
    %v2313 = vld [vmem:[%s2199 + $0x388] sm:$0xff]
    %v2314 = vld [vmem:[%s2199 + $0x390] sm:$0xff]
    %v2315 = vld [vmem:[%s2199 + $0x398] sm:$0xff]
    %v2316 = vld [vmem:[%s2199 + $0x3a0] sm:$0xff]
    %v2317 = vld [vmem:[%s2199 + $0x3a8] sm:$0xff]
    %v2318 = vld [vmem:[%s2199 + $0x3b0] sm:$0xff]
    %v2319 = vld [vmem:[%s2199 + $0x3b8] sm:$0xff]
    %v2320 = vld [vmem:[%s2199 + $0x3c0] sm:$0xff]
    %v2321 = vld [vmem:[%s2199 + $0x3c8] sm:$0xff]
    %v2322 = vld [vmem:[%s2199 + $0x3d0] sm:$0xff]
    %v2323 = vld [vmem:[%s2199 + $0x3d8] sm:$0xff]
    %v2324 = vld [vmem:[%s2199 + $0x3e0] sm:$0xff]
    %v2325 = vld [vmem:[%s2199 + $0x3e8] sm:$0xff]
    %v2326 = vld [vmem:[%s2199 + $0x3f0] sm:$0xff]
    %v2327 = vld [vmem:[%s2199 + $0x3f8] sm:$0xff]
    %2329 = vst [vmem:[#allocation1] ss:$2 sm:$0xff] %v2198
    %v2330 = vld.sshfl [vmem:[#allocation1] sm:$0xff pattern:$0x75316420]
    %v2331 = vld.sshfl [vmem:[#allocation1 + $0x8] sm:$0xff pattern:$0x75316420]
    %2334 = vmatpush.msra.mxu0 %v2260
    %2335 = vmatpush.msra.mxu0 %v2256
    %2336 = vmatpush.msra.mxu0 %v2252
    %2337 = vmatpush.msra.mxu0 %v2248
    %2338 = vmatpush.msra.mxu0 %v2244
    %2339 = vmatpush.msra.mxu0 %v2240
    %2340 = vmatpush.msra.mxu0 %v2236
    %2341 = vmatpush.msra.mxu0 %v2232
    %2342 = vmatpush.msra.mxu0 %v2228
    %2343 = vmatpush.msra.mxu0 %v2224
    %2344 = vmatpush.msra.mxu0 %v2220
    %2345 = vmatpush.msra.mxu0 %v2216
    %2346 = vmatpush.msra.mxu0 %v2212
    %2347 = vmatpush.msra.mxu0 %v2208
    %2348 = vmatpush.msra.mxu0 %v2204
    %2349 = vmatpush.msra.mxu0 %v2200
    %2350 = vmatmul.f32.gmra.mxu0 %v2330
    %v2351 = vpop.f32.mrf.mxu0
    %v2352 = vadd.f32 0.0, %v2351
    %2353 = vdwg.mxu0
    %2354 = vmatpush.msra.mxu0 %v2324
    %2355 = vmatpush.msra.mxu0 %v2320
    %2356 = vmatpush.msra.mxu0 %v2316
    %2357 = vmatpush.msra.mxu0 %v2312
    %2358 = vmatpush.msra.mxu0 %v2308
    %2359 = vmatpush.msra.mxu0 %v2304
    %2360 = vmatpush.msra.mxu0 %v2300
    %2361 = vmatpush.msra.mxu0 %v2296
    %2362 = vmatpush.msra.mxu0 %v2292
    %2363 = vmatpush.msra.mxu0 %v2288
    %2364 = vmatpush.msra.mxu0 %v2284
    %2365 = vmatpush.msra.mxu0 %v2280
    %2366 = vmatpush.msra.mxu0 %v2276
    %2367 = vmatpush.msra.mxu0 %v2272
    %2368 = vmatpush.msra.mxu0 %v2268
    %2369 = vmatpush.msra.mxu0 %v2264
    %2370 = vmatmul.f32.gmra.mxu0 %v2331
    %v2371 = vpop.f32.mrf.mxu0
    %v2372 = vadd.f32 %v2352, %v2371
    %2373 = vdwg.mxu0
    %2374 = vmatpush.msra.mxu0 %v2261
    %2375 = vmatpush.msra.mxu0 %v2257
    %2376 = vmatpush.msra.mxu0 %v2253
    %2377 = vmatpush.msra.mxu0 %v2249
    %2378 = vmatpush.msra.mxu0 %v2245
    %2379 = vmatpush.msra.mxu0 %v2241
    %2380 = vmatpush.msra.mxu0 %v2237
    %2381 = vmatpush.msra.mxu0 %v2233
    %2382 = vmatpush.msra.mxu0 %v2229
    %2383 = vmatpush.msra.mxu0 %v2225
    %2384 = vmatpush.msra.mxu0 %v2221
    %2385 = vmatpush.msra.mxu0 %v2217
    %2386 = vmatpush.msra.mxu0 %v2213
    %2387 = vmatpush.msra.mxu0 %v2209
    %2388 = vmatpush.msra.mxu0 %v2205
    %2389 = vmatpush.msra.mxu0 %v2201
    %2390 = vmatmul.f32.gmra.mxu0 %v2330
    %v2391 = vpop.f32.mrf.mxu0
    %v2392 = vadd.f32 0.0, %v2391
    %2393 = vdwg.mxu0
    %2394 = vmatpush.msra.mxu0 %v2325
    %2395 = vmatpush.msra.mxu0 %v2321
    %2396 = vmatpush.msra.mxu0 %v2317
    %2397 = vmatpush.msra.mxu0 %v2313
    %2398 = vmatpush.msra.mxu0 %v2309
    %2399 = vmatpush.msra.mxu0 %v2305
    %2400 = vmatpush.msra.mxu0 %v2301
    %2401 = vmatpush.msra.mxu0 %v2297
    %2402 = vmatpush.msra.mxu0 %v2293
    %2403 = vmatpush.msra.mxu0 %v2289
    %2404 = vmatpush.msra.mxu0 %v2285
    %2405 = vmatpush.msra.mxu0 %v2281
    %2406 = vmatpush.msra.mxu0 %v2277
    %2407 = vmatpush.msra.mxu0 %v2273
    %2408 = vmatpush.msra.mxu0 %v2269
    %2409 = vmatpush.msra.mxu0 %v2265
    %2410 = vmatmul.f32.gmra.mxu0 %v2331
    %v2411 = vpop.f32.mrf.mxu0
    %v2412 = vadd.f32 %v2392, %v2411
    %2413 = vdwg.mxu0
    %2414 = vmatpush.msra.mxu0 %v2262
    %2415 = vmatpush.msra.mxu0 %v2258
    %2416 = vmatpush.msra.mxu0 %v2254
    %2417 = vmatpush.msra.mxu0 %v2250
    %2418 = vmatpush.msra.mxu0 %v2246
    %2419 = vmatpush.msra.mxu0 %v2242
    %2420 = vmatpush.msra.mxu0 %v2238
    %2421 = vmatpush.msra.mxu0 %v2234
    %2422 = vmatpush.msra.mxu0 %v2230
    %2423 = vmatpush.msra.mxu0 %v2226
    %2424 = vmatpush.msra.mxu0 %v2222
    %2425 = vmatpush.msra.mxu0 %v2218
    %2426 = vmatpush.msra.mxu0 %v2214
    %2427 = vmatpush.msra.mxu0 %v2210
    %2428 = vmatpush.msra.mxu0 %v2206
    %2429 = vmatpush.msra.mxu0 %v2202
    %2430 = vmatmul.f32.gmra.mxu0 %v2330
    %v2431 = vpop.f32.mrf.mxu0
    %v2432 = vadd.f32 0.0, %v2431
    %2433 = vdwg.mxu0
    %2434 = vmatpush.msra.mxu0 %v2326
    %2435 = vmatpush.msra.mxu0 %v2322
    %2436 = vmatpush.msra.mxu0 %v2318
    %2437 = vmatpush.msra.mxu0 %v2314
    %2438 = vmatpush.msra.mxu0 %v2310
    %2439 = vmatpush.msra.mxu0 %v2306
    %2440 = vmatpush.msra.mxu0 %v2302
    %2441 = vmatpush.msra.mxu0 %v2298
    %2442 = vmatpush.msra.mxu0 %v2294
    %2443 = vmatpush.msra.mxu0 %v2290
    %2444 = vmatpush.msra.mxu0 %v2286
    %2445 = vmatpush.msra.mxu0 %v2282
    %2446 = vmatpush.msra.mxu0 %v2278
    %2447 = vmatpush.msra.mxu0 %v2274
    %2448 = vmatpush.msra.mxu0 %v2270
    %2449 = vmatpush.msra.mxu0 %v2266
    %2450 = vmatmul.f32.gmra.mxu0 %v2331
    %v2451 = vpop.f32.mrf.mxu0
    %v2452 = vadd.f32 %v2432, %v2451
    %2453 = vdwg.mxu0
    %2454 = vmatpush.msra.mxu0 %v2263
    %2455 = vmatpush.msra.mxu0 %v2259
    %2456 = vmatpush.msra.mxu0 %v2255
    %2457 = vmatpush.msra.mxu0 %v2251
    %2458 = vmatpush.msra.mxu0 %v2247
    %2459 = vmatpush.msra.mxu0 %v2243
    %2460 = vmatpush.msra.mxu0 %v2239
    %2461 = vmatpush.msra.mxu0 %v2235
    %2462 = vmatpush.msra.mxu0 %v2231
    %2463 = vmatpush.msra.mxu0 %v2227
    %2464 = vmatpush.msra.mxu0 %v2223
    %2465 = vmatpush.msra.mxu0 %v2219
    %2466 = vmatpush.msra.mxu0 %v2215
    %2467 = vmatpush.msra.mxu0 %v2211
    %2468 = vmatpush.msra.mxu0 %v2207
    %2469 = vmatpush.msra.mxu0 %v2203
    %2470 = vmatmul.f32.gmra.mxu0 %v2330
    %v2471 = vpop.f32.mrf.mxu0
    %v2472 = vadd.f32 0.0, %v2471
    %2473 = vdwg.mxu0
    %2474 = vmatpush.msra.mxu0 %v2327
    %2475 = vmatpush.msra.mxu0 %v2323
    %2476 = vmatpush.msra.mxu0 %v2319
    %2477 = vmatpush.msra.mxu0 %v2315
    %2478 = vmatpush.msra.mxu0 %v2311
    %2479 = vmatpush.msra.mxu0 %v2307
    %2480 = vmatpush.msra.mxu0 %v2303
    %2481 = vmatpush.msra.mxu0 %v2299
    %2482 = vmatpush.msra.mxu0 %v2295
    %2483 = vmatpush.msra.mxu0 %v2291
    %2484 = vmatpush.msra.mxu0 %v2287
    %2485 = vmatpush.msra.mxu0 %v2283
    %2486 = vmatpush.msra.mxu0 %v2279
    %2487 = vmatpush.msra.mxu0 %v2275
    %2488 = vmatpush.msra.mxu0 %v2271
    %2489 = vmatpush.msra.mxu0 %v2267
    %2490 = vmatmul.f32.gmra.mxu0 %v2331
    %v2491 = vpop.f32.mrf.mxu0
    %v2492 = vadd.f32 %v2472, %v2491
    %2493 = vdwg.mxu0
    %v2498 = vrot.slane %v2412, 4
    %v2499 = vrot.slane %v2492, 4
    %v2500 = vsel %vm343, %v2372, %v2498
    %v2501 = vsel %vm343, %v2452, %v2499
    %2504 = vst [vmem:[#allocation7 + $0x70] sm:$0xff] %v2500
    %2505 = vst [vmem:[#allocation7 + $0x78] sm:$0xff] %v2501
    // Predicated region
    $region18: #{tpu_custom_call.1} parent=1 // pred_check
      _
    $region19: #{tpu_custom_call.1} parent=1 // pred_check_branch
      %2507 = sbr.rel (0) target = $region21
    $region20: #{tpu_custom_call.1} parent=1 // pred_region
      %2509 = vsyncadd [#allocation4], 0
      %s2511 = sshll.u32 [#allocation7], 4
      %s2512 = int_to_ptr.vmem [resolvable:$true] %s2511
      %s2513 = sshll.u32 %s2, 4
      %s2514 = int_to_ptr.hbm [resolvable:$true] %s2513
      %2516 = dma.vmem_to_hbm [thread:$0]  %s2512, 2048, %s2514, [#allocation4]
    $region21: #{tpu_custom_call.1} parent=1 // pred_fallthru
      _
    // Predicated region
    $region22: #{tpu_custom_call.1} parent=1 // pred_check
      _
    $region23: #{tpu_custom_call.1} parent=1 // pred_check_branch
      %2518 = sbr.rel (0) target = $region25
    $region24: #{tpu_custom_call.1} parent=1 // pred_region
      %2520 = dma.done [#allocation4], 2048
    $region25: #{tpu_custom_call.1} parent=1 // pred_fallthru
      _
    %2521 = vsyncpa [#allocation3], 1
    %2522 = vsyncpa [#allocation6], 1
    %2523 = vsyncpa [#allocation4], 1

// kernel: tpu_custom_call.1
$region0: #{tpu_custom_call.1}
  #allocation0 [shape = 'u32[]', space=smem, size = 0x4, offset = 0x4, fixed_abs, tag = 'smem constant byte address 0x4 - core index']
  #allocation1 [shape = 'u32[72,128]{1,0:T(1,128)}', space=vmem, size = 0x9000, scoped, tag = 'internal scratch']
  %s0 = inlined_call_operand.hbm [shape: f32[4,2048], index: 0, kind: input, shape index: {}]
  %s1 = inlined_call_operand.hbm [shape: f32[8,256,512], index: 1, kind: input, shape index: {}]
  %s2 = inlined_call_operand.hbm [shape: f32[4,4096], index: 2, kind: output, shape index: {}]
  %s3 = sld [smem:[#allocation0]]
  $region26: #{tpu_custom_call.1} parent=0
    _
  %s5 = ssub.s32 1, %s3
  %s6 = scalar_select 0, %s5, %s3
  $region1: #{tpu_custom_call.1} parent=0
    #allocation2 [shape = 'u8[32768]{0}', space=vmem, size = 0x8000, scoped, tag = 'input window, operand 0, single buffered']
    #allocation3 [shape = 's32[1]{0}', space=sflag, size = 0x4, scoped, tag = 'scoped memory for tpu_custom_call.1']
    #allocation4 [shape = 's32[1]{0}', space=sflag, size = 0x4, scoped, tag = 'scoped memory for tpu_custom_call.1']
    #allocation5 [shape = 'u8[4194304]{0}', space=vmem, size = 0x400000, scoped, tag = 'input window, operand 1, single buffered']
    #allocation6 [shape = 's32[1]{0}', space=sflag, size = 0x4, scoped, tag = 'scoped memory for tpu_custom_call.1']
    #allocation7 [shape = 'u8[65536]{0}', space=vmem, size = 0x10000, scoped, tag = 'output window, operand 0, single buffered']
    %7 = vsyncpa [#allocation3], 0
    %8 = vsyncpa [#allocation6], 0
    %9 = vsyncpa [#allocation4], 0
    // Predicated region
    $region2: #{tpu_custom_call.1} parent=1 // pred_check
      _
    $region3: #{tpu_custom_call.1} parent=1 // pred_check_branch
      %11 = sbr.rel (0) target = $region5
    $region4: #{tpu_custom_call.1} parent=1 // pred_region
      %13 = vsyncadd [#allocation3], 0
      %s15 = sshll.u32 %s0, 4
      %s16 = int_to_ptr.hbm [resolvable:$true] %s15
      %s17 = sshll.u32 [#allocation2], 4
      %s18 = int_to_ptr.vmem [resolvable:$true] %s17
      %20 = dma.hbm_to_vmem [thread:$0]  %s16, 1024, %s18, [#allocation3]
    $region5: #{tpu_custom_call.1} parent=1 // pred_fallthru
      _
    // Predicated region
    $region6: #{tpu_custom_call.1} parent=1 // pred_check
      _
    $region7: #{tpu_custom_call.1} parent=1 // pred_check_branch
      %22 = sbr.rel (0) target = $region9
    $region8: #{tpu_custom_call.1} parent=1 // pred_region
      %24 = vsyncadd [#allocation6], 0
      %s25 = sshll.u32 %s1, 4
      %s26 = int_to_ptr.hbm [resolvable:$true] %s25
      %s27 = sshll.u32 [#allocation5], 4
      %s28 = int_to_ptr.vmem [resolvable:$true] %s27
      %33 = dma.hbm_to_vmem [thread:$0]  %s26, 131072, %s28, [#allocation6], 512, 512, 32
    $region9: #{tpu_custom_call.1} parent=1 // pred_fallthru
      _
    // Predicated region
    $region10: #{tpu_custom_call.1} parent=1 // pred_check
      _
    $region11: #{tpu_custom_call.1} parent=1 // pred_check_branch
      %35 = sbr.rel (0) target = $region13
    $region12: #{tpu_custom_call.1} parent=1 // pred_region
      %37 = dma.done [#allocation3], 1024
    $region13: #{tpu_custom_call.1} parent=1 // pred_fallthru
      _
    // Predicated region
    $region14: #{tpu_custom_call.1} parent=1 // pred_check
      _
    $region15: #{tpu_custom_call.1} parent=1 // pred_check_branch
      %39 = sbr.rel (0) target = $region17
    $region16: #{tpu_custom_call.1} parent=1 // pred_region
      %41 = dma.done [#allocation6], 131072
    $region17: #{tpu_custom_call.1} parent=1 // pred_fallthru
      _
    %v42 = vld [vmem:[#allocation2] sm:$0xff]
    %v43 = vld [vmem:[#allocation5] sm:$0xff]
    %v44 = vld [vmem:[#allocation5 + $0x8] sm:$0xff]
    %v45 = vld [vmem:[#allocation5 + $0x10] sm:$0xff]
    %v46 = vld [vmem:[#allocation5 + $0x18] sm:$0xff]
    %v47 = vld [vmem:[#allocation5 + $0x20] sm:$0xff]
    %v48 = vld [vmem:[#allocation5 + $0x28] sm:$0xff]
    %v49 = vld [vmem:[#allocation5 + $0x30] sm:$0xff]
    %v50 = vld [vmem:[#allocation5 + $0x38] sm:$0xff]
    %v51 = vld [vmem:[#allocation5 + $0x40] sm:$0xff]
    %v52 = vld [vmem:[#allocation5 + $0x48] sm:$0xff]
    %v53 = vld [vmem:[#allocation5 + $0x50] sm:$0xff]
    %v54 = vld [vmem:[#allocation5 + $0x58] sm:$0xff]
    %v55 = vld [vmem:[#allocation5 + $0x60] sm:$0xff]
    %v56 = vld [vmem:[#allocation5 + $0x68] sm:$0xff]
    %v57 = vld [vmem:[#allocation5 + $0x70] sm:$0xff]
    %v58 = vld [vmem:[#allocation5 + $0x78] sm:$0xff]
    %v59 = vld [vmem:[#allocation5 + $0x80] sm:$0xff]
    %v60 = vld [vmem:[#allocation5 + $0x88] sm:$0xff]
    %v61 = vld [vmem:[#allocation5 + $0x90] sm:$0xff]
    %v62 = vld [vmem:[#allocation5 + $0x98] sm:$0xff]
    %v63 = vld [vmem:[#allocation5 + $0xa0] sm:$0xff]
    %v64 = vld [vmem:[#allocation5 + $0xa8] sm:$0xff]
    %v65 = vld [vmem:[#allocation5 + $0xb0] sm:$0xff]
    %v66 = vld [vmem:[#allocation5 + $0xb8] sm:$0xff]
    %v67 = vld [vmem:[#allocation5 + $0xc0] sm:$0xff]
    %v68 = vld [vmem:[#allocation5 + $0xc8] sm:$0xff]
    %v69 = vld [vmem:[#allocation5 + $0xd0] sm:$0xff]
    %v70 = vld [vmem:[#allocation5 + $0xd8] sm:$0xff]
    %v71 = vld [vmem:[#allocation5 + $0xe0] sm:$0xff]
    %v72 = vld [vmem:[#allocation5 + $0xe8] sm:$0xff]
    %v73 = vld [vmem:[#allocation5 + $0xf0] sm:$0xff]
    %v74 = vld [vmem:[#allocation5 + $0xf8] sm:$0xff]
    %v75 = vld [vmem:[#allocation5 + $0x100] sm:$0xff]
    %v76 = vld [vmem:[#allocation5 + $0x108] sm:$0xff]
    %v77 = vld [vmem:[#allocation5 + $0x110] sm:$0xff]
    %v78 = vld [vmem:[#allocation5 + $0x118] sm:$0xff]
    %v79 = vld [vmem:[#allocation5 + $0x120] sm:$0xff]
    %v80 = vld [vmem:[#allocation5 + $0x128] sm:$0xff]
    %v81 = vld [vmem:[#allocation5 + $0x130] sm:$0xff]
    %v82 = vld [vmem:[#allocation5 + $0x138] sm:$0xff]
    %v83 = vld [vmem:[#allocation5 + $0x140] sm:$0xff]
    %v84 = vld [vmem:[#allocation5 + $0x148] sm:$0xff]
    %v85 = vld [vmem:[#allocation5 + $0x150] sm:$0xff]
    %v86 = vld [vmem:[#allocation5 + $0x158] sm:$0xff]
    %v87 = vld [vmem:[#allocation5 + $0x160] sm:$0xff]
    %v88 = vld [vmem:[#allocation5 + $0x168] sm:$0xff]
    %v89 = vld [vmem:[#allocation5 + $0x170] sm:$0xff]
    %v90 = vld [vmem:[#allocation5 + $0x178] sm:$0xff]
    %v91 = vld [vmem:[#allocation5 + $0x180] sm:$0xff]
    %v92 = vld [vmem:[#allocation5 + $0x188] sm:$0xff]
    %v93 = vld [vmem:[#allocation5 + $0x190] sm:$0xff]
    %v94 = vld [vmem:[#allocation5 + $0x198] sm:$0xff]
    %v95 = vld [vmem:[#allocation5 + $0x1a0] sm:$0xff]
    %v96 = vld [vmem:[#allocation5 + $0x1a8] sm:$0xff]
    %v97 = vld [vmem:[#allocation5 + $0x1b0] sm:$0xff]
    %v98 = vld [vmem:[#allocation5 + $0x1b8] sm:$0xff]
    %v99 = vld [vmem:[#allocation5 + $0x1c0] sm:$0xff]
    %v100 = vld [vmem:[#allocation5 + $0x1c8] sm:$0xff]
    %v101 = vld [vmem:[#allocation5 + $0x1d0] sm:$0xff]
    %v102 = vld [vmem:[#allocation5 + $0x1d8] sm:$0xff]
    %v103 = vld [vmem:[#allocation5 + $0x1e0] sm:$0xff]
    %v104 = vld [vmem:[#allocation5 + $0x1e8] sm:$0xff]
    %v105 = vld [vmem:[#allocation5 + $0x1f0] sm:$0xff]
    %v106 = vld [vmem:[#allocation5 + $0x1f8] sm:$0xff]
    %v107 = vld [vmem:[#allocation5 + $0x200] sm:$0xff]
    %v108 = vld [vmem:[#allocation5 + $0x208] sm:$0xff]
    %v109 = vld [vmem:[#allocation5 + $0x210] sm:$0xff]
    %v110 = vld [vmem:[#allocation5 + $0x218] sm:$0xff]
    %v111 = vld [vmem:[#allocation5 + $0x220] sm:$0xff]
    %v112 = vld [vmem:[#allocation5 + $0x228] sm:$0xff]
    %v113 = vld [vmem:[#allocation5 + $0x230] sm:$0xff]
    %v114 = vld [vmem:[#allocation5 + $0x238] sm:$0xff]
    %v115 = vld [vmem:[#allocation5 + $0x240] sm:$0xff]
    %v116 = vld [vmem:[#allocation5 + $0x248] sm:$0xff]
    %v117 = vld [vmem:[#allocation5 + $0x250] sm:$0xff]
    %v118 = vld [vmem:[#allocation5 + $0x258] sm:$0xff]
    %v119 = vld [vmem:[#allocation5 + $0x260] sm:$0xff]
    %v120 = vld [vmem:[#allocation5 + $0x268] sm:$0xff]
    %v121 = vld [vmem:[#allocation5 + $0x270] sm:$0xff]
    %v122 = vld [vmem:[#allocation5 + $0x278] sm:$0xff]
    %v123 = vld [vmem:[#allocation5 + $0x280] sm:$0xff]
    %v124 = vld [vmem:[#allocation5 + $0x288] sm:$0xff]
    %v125 = vld [vmem:[#allocation5 + $0x290] sm:$0xff]
    %v126 = vld [vmem:[#allocation5 + $0x298] sm:$0xff]
    %v127 = vld [vmem:[#allocation5 + $0x2a0] sm:$0xff]
    %v128 = vld [vmem:[#allocation5 + $0x2a8] sm:$0xff]
    %v129 = vld [vmem:[#allocation5 + $0x2b0] sm:$0xff]
    %v130 = vld [vmem:[#allocation5 + $0x2b8] sm:$0xff]
    %v131 = vld [vmem:[#allocation5 + $0x2c0] sm:$0xff]
    %v132 = vld [vmem:[#allocation5 + $0x2c8] sm:$0xff]
    %v133 = vld [vmem:[#allocation5 + $0x2d0] sm:$0xff]
    %v134 = vld [vmem:[#allocation5 + $0x2d8] sm:$0xff]
    %v135 = vld [vmem:[#allocation5 + $0x2e0] sm:$0xff]
    %v136 = vld [vmem:[#allocation5 + $0x2e8] sm:$0xff]
    %v137 = vld [vmem:[#allocation5 + $0x2f0] sm:$0xff]
    %v138 = vld [vmem:[#allocation5 + $0x2f8] sm:$0xff]
    %v139 = vld [vmem:[#allocation5 + $0x300] sm:$0xff]
    %v140 = vld [vmem:[#allocation5 + $0x308] sm:$0xff]
    %v141 = vld [vmem:[#allocation5 + $0x310] sm:$0xff]
    %v142 = vld [vmem:[#allocation5 + $0x318] sm:$0xff]
    %v143 = vld [vmem:[#allocation5 + $0x320] sm:$0xff]
    %v144 = vld [vmem:[#allocation5 + $0x328] sm:$0xff]
    %v145 = vld [vmem:[#allocation5 + $0x330] sm:$0xff]
    %v146 = vld [vmem:[#allocation5 + $0x338] sm:$0xff]
    %v147 = vld [vmem:[#allocation5 + $0x340] sm:$0xff]
    %v148 = vld [vmem:[#allocation5 + $0x348] sm:$0xff]
    %v149 = vld [vmem:[#allocation5 + $0x350] sm:$0xff]
    %v150 = vld [vmem:[#allocation5 + $0x358] sm:$0xff]
    %v151 = vld [vmem:[#allocation5 + $0x360] sm:$0xff]
    %v152 = vld [vmem:[#allocation5 + $0x368] sm:$0xff]
    %v153 = vld [vmem:[#allocation5 + $0x370] sm:$0xff]
    %v154 = vld [vmem:[#allocation5 + $0x378] sm:$0xff]
    %v155 = vld [vmem:[#allocation5 + $0x380] sm:$0xff]
    %v156 = vld [vmem:[#allocation5 + $0x388] sm:$0xff]
    %v157 = vld [vmem:[#allocation5 + $0x390] sm:$0xff]
    %v158 = vld [vmem:[#allocation5 + $0x398] sm:$0xff]
    %v159 = vld [vmem:[#allocation5 + $0x3a0] sm:$0xff]
    %v160 = vld [vmem:[#allocation5 + $0x3a8] sm:$0xff]
    %v161 = vld [vmem:[#allocation5 + $0x3b0] sm:$0xff]
    %v162 = vld [vmem:[#allocation5 + $0x3b8] sm:$0xff]
    %v163 = vld [vmem:[#allocation5 + $0x3c0] sm:$0xff]
    %v164 = vld [vmem:[#allocation5 + $0x3c8] sm:$0xff]
    %v165 = vld [vmem:[#allocation5 + $0x3d0] sm:$0xff]
    %v166 = vld [vmem:[#allocation5 + $0x3d8] sm:$0xff]
    %v167 = vld [vmem:[#allocation5 + $0x3e0] sm:$0xff]
    %v168 = vld [vmem:[#allocation5 + $0x3e8] sm:$0xff]
    %v169 = vld [vmem:[#allocation5 + $0x3f0] sm:$0xff]
    %v170 = vld [vmem:[#allocation5 + $0x3f8] sm:$0xff]
    %172 = vst [vmem:[#allocation1] ss:$2 sm:$0xff] %v42
    %v173 = vld.sshfl [vmem:[#allocation1] sm:$0xff pattern:$0x75316420]
    %v174 = vld.sshfl [vmem:[#allocation1 + $0x8] sm:$0xff pattern:$0x75316420]
    %177 = vmatpush.msra.mxu0 %v103
    %178 = vmatpush.msra.mxu0 %v99
    %179 = vmatpush.msra.mxu0 %v95
    %180 = vmatpush.msra.mxu0 %v91
    %181 = vmatpush.msra.mxu0 %v87
    %182 = vmatpush.msra.mxu0 %v83
    %183 = vmatpush.msra.mxu0 %v79
    %184 = vmatpush.msra.mxu0 %v75
    %185 = vmatpush.msra.mxu0 %v71
    %186 = vmatpush.msra.mxu0 %v67
    %187 = vmatpush.msra.mxu0 %v63
    %188 = vmatpush.msra.mxu0 %v59
    %189 = vmatpush.msra.mxu0 %v55
    %190 = vmatpush.msra.mxu0 %v51
    %191 = vmatpush.msra.mxu0 %v47
    %192 = vmatpush.msra.mxu0 %v43
    %193 = vmatmul.f32.gmra.mxu0 %v173
    %v194 = vpop.f32.mrf.mxu0
    %v195 = vadd.f32 0.0, %v194
    %196 = vdwg.mxu0
    %197 = vmatpush.msra.mxu0 %v167
    %198 = vmatpush.msra.mxu0 %v163
    %199 = vmatpush.msra.mxu0 %v159
    %200 = vmatpush.msra.mxu0 %v155
    %201 = vmatpush.msra.mxu0 %v151
    %202 = vmatpush.msra.mxu0 %v147
    %203 = vmatpush.msra.mxu0 %v143
    %204 = vmatpush.msra.mxu0 %v139
    %205 = vmatpush.msra.mxu0 %v135
    %206 = vmatpush.msra.mxu0 %v131
    %207 = vmatpush.msra.mxu0 %v127
    %208 = vmatpush.msra.mxu0 %v123
    %209 = vmatpush.msra.mxu0 %v119
    %210 = vmatpush.msra.mxu0 %v115
    %211 = vmatpush.msra.mxu0 %v111
    %212 = vmatpush.msra.mxu0 %v107
    %213 = vmatmul.f32.gmra.mxu0 %v174
    %v214 = vpop.f32.mrf.mxu0
    %v215 = vadd.f32 %v195, %v214
    %216 = vdwg.mxu0
    %217 = vmatpush.msra.mxu0 %v104
    %218 = vmatpush.msra.mxu0 %v100
    %219 = vmatpush.msra.mxu0 %v96
    %220 = vmatpush.msra.mxu0 %v92
    %221 = vmatpush.msra.mxu0 %v88
    %222 = vmatpush.msra.mxu0 %v84
    %223 = vmatpush.msra.mxu0 %v80
    %224 = vmatpush.msra.mxu0 %v76
    %225 = vmatpush.msra.mxu0 %v72
    %226 = vmatpush.msra.mxu0 %v68
    %227 = vmatpush.msra.mxu0 %v64
    %228 = vmatpush.msra.mxu0 %v60
    %229 = vmatpush.msra.mxu0 %v56
    %230 = vmatpush.msra.mxu0 %v52
    %231 = vmatpush.msra.mxu0 %v48
    %232 = vmatpush.msra.mxu0 %v44
    %233 = vmatmul.f32.gmra.mxu0 %v173
    %v234 = vpop.f32.mrf.mxu0
    %v235 = vadd.f32 0.0, %v234
    %236 = vdwg.mxu0
    %237 = vmatpush.msra.mxu0 %v168
    %238 = vmatpush.msra.mxu0 %v164
    %239 = vmatpush.msra.mxu0 %v160
    %240 = vmatpush.msra.mxu0 %v156
    %241 = vmatpush.msra.mxu0 %v152
    %242 = vmatpush.msra.mxu0 %v148
    %243 = vmatpush.msra.mxu0 %v144
    %244 = vmatpush.msra.mxu0 %v140
    %245 = vmatpush.msra.mxu0 %v136
    %246 = vmatpush.msra.mxu0 %v132
    %247 = vmatpush.msra.mxu0 %v128
    %248 = vmatpush.msra.mxu0 %v124
    %249 = vmatpush.msra.mxu0 %v120
    %250 = vmatpush.msra.mxu0 %v116
    %251 = vmatpush.msra.mxu0 %v112
    %252 = vmatpush.msra.mxu0 %v108
    %253 = vmatmul.f32.gmra.mxu0 %v174
    %v254 = vpop.f32.mrf.mxu0
    %v255 = vadd.f32 %v235, %v254
    %256 = vdwg.mxu0
    %257 = vmatpush.msra.mxu0 %v105
    %258 = vmatpush.msra.mxu0 %v101
    %259 = vmatpush.msra.mxu0 %v97
    %260 = vmatpush.msra.mxu0 %v93
    %261 = vmatpush.msra.mxu0 %v89
    %262 = vmatpush.msra.mxu0 %v85
    %263 = vmatpush.msra.mxu0 %v81
    %264 = vmatpush.msra.mxu0 %v77
    %265 = vmatpush.msra.mxu0 %v73
    %266 = vmatpush.msra.mxu0 %v69
    %267 = vmatpush.msra.mxu0 %v65
    %268 = vmatpush.msra.mxu0 %v61
    %269 = vmatpush.msra.mxu0 %v57
    %270 = vmatpush.msra.mxu0 %v53
    %271 = vmatpush.msra.mxu0 %v49
    %272 = vmatpush.msra.mxu0 %v45
    %273 = vmatmul.f32.gmra.mxu0 %v173
    %v274 = vpop.f32.mrf.mxu0
    %v275 = vadd.f32 0.0, %v274
    %276 = vdwg.mxu0
    %277 = vmatpush.msra.mxu0 %v169
    %278 = vmatpush.msra.mxu0 %v165
    %279 = vmatpush.msra.mxu0 %v161
    %280 = vmatpush.msra.mxu0 %v157
    %281 = vmatpush.msra.mxu0 %v153
    %282 = vmatpush.msra.mxu0 %v149
    %283 = vmatpush.msra.mxu0 %v145
    %284 = vmatpush.msra.mxu0 %v141
    %285 = vmatpush.msra.mxu0 %v137
    %286 = vmatpush.msra.mxu0 %v133
    %287 = vmatpush.msra.mxu0 %v129
    %288 = vmatpush.msra.mxu0 %v125
    %289 = vmatpush.msra.mxu0 %v121
    %290 = vmatpush.msra.mxu0 %v117
    %291 = vmatpush.msra.mxu0 %v113
    %292 = vmatpush.msra.mxu0 %v109
    %293 = vmatmul.f32.gmra.mxu0 %v174
    %v294 = vpop.f32.mrf.mxu0
    %v295 = vadd.f32 %v275, %v294
    %296 = vdwg.mxu0
    %297 = vmatpush.msra.mxu0 %v106
    %298 = vmatpush.msra.mxu0 %v102
    %299 = vmatpush.msra.mxu0 %v98
    %300 = vmatpush.msra.mxu0 %v94
    %301 = vmatpush.msra.mxu0 %v90
    %302 = vmatpush.msra.mxu0 %v86
    %303 = vmatpush.msra.mxu0 %v82
    %304 = vmatpush.msra.mxu0 %v78
    %305 = vmatpush.msra.mxu0 %v74
    %306 = vmatpush.msra.mxu0 %v70
    %307 = vmatpush.msra.mxu0 %v66
    %308 = vmatpush.msra.mxu0 %v62
    %309 = vmatpush.msra.mxu0 %v58
    %310 = vmatpush.msra.mxu0 %v54
    %311 = vmatpush.msra.mxu0 %v50
    %312 = vmatpush.msra.mxu0 %v46
    %313 = vmatmul.f32.gmra.mxu0 %v173
    %v314 = vpop.f32.mrf.mxu0
    %v315 = vadd.f32 0.0, %v314
    %316 = vdwg.mxu0
    %317 = vmatpush.msra.mxu0 %v170
    %318 = vmatpush.msra.mxu0 %v166
    %319 = vmatpush.msra.mxu0 %v162
    %320 = vmatpush.msra.mxu0 %v158
    %321 = vmatpush.msra.mxu0 %v154
    %322 = vmatpush.msra.mxu0 %v150
    %323 = vmatpush.msra.mxu0 %v146
    %324 = vmatpush.msra.mxu0 %v142
    %325 = vmatpush.msra.mxu0 %v138
    %326 = vmatpush.msra.mxu0 %v134
    %327 = vmatpush.msra.mxu0 %v130
    %328 = vmatpush.msra.mxu0 %v126
    %329 = vmatpush.msra.mxu0 %v122
    %330 = vmatpush.msra.mxu0 %v118
    %331 = vmatpush.msra.mxu0 %v114
    %332 = vmatpush.msra.mxu0 %v110
    %333 = vmatmul.f32.gmra.mxu0 %v174
    %v334 = vpop.f32.mrf.mxu0
    %v335 = vadd.f32 %v315, %v334
    %336 = vdwg.mxu0
    %v341 = vrot.slane %v255, 4
    %v342 = vrot.slane %v335, 4
    %vm343 = vcmask 1043456
    %v344 = vsel %vm343, %v215, %v341
    %v345 = vsel %vm343, %v295, %v342
    %348 = vst [vmem:[#allocation7] sm:$0xff] %v344
    %349 = vst [vmem:[#allocation7 + $0x8] sm:$0xff] %v345
    %v350 = vld [vmem:[#allocation2 + $0x8] sm:$0xff]
    %s351 = scalar_lea.vmem [#allocation5], 1024
    %v352 = vld [vmem:[%s351] sm:$0xff]
    %v353 = vld [vmem:[%s351 + $0x8] sm:$0xff]
    %v354 = vld [vmem:[%s351 + $0x10] sm:$0xff]
    %v355 = vld [vmem:[%s351 + $0x18] sm:$0xff]
    %v356 = vld [vmem:[%s351 + $0x20] sm:$0xff]
    %v357 = vld [vmem:[%s351 + $0x28] sm:$0xff]
    %v358 = vld [vmem:[%s351 + $0x30] sm:$0xff]
    %v359 = vld [vmem:[%s351 + $0x38] sm:$0xff]
    %v360 = vld [vmem:[%s351 + $0x40] sm:$0xff]
    %v361 = vld [vmem:[%s351 + $0x48] sm:$0xff]
    %v362 = vld [vmem:[%s351 + $0x50] sm:$0xff]
    %v363 = vld [vmem:[%s351 + $0x58] sm:$0xff]
    %v364 = vld [vmem:[%s351 + $0x60] sm:$0xff]
    %v365 = vld [vmem:[%s351 + $0x68] sm:$0xff]
    %v366 = vld [vmem:[%s351 + $0x70] sm:$0xff]
    %v367 = vld [vmem:[%s351 + $0x78] sm:$0xff]
    %v368 = vld [vmem:[%s351 + $0x80] sm:$0xff]
    %v369 = vld [vmem:[%s351 + $0x88] sm:$0xff]
    %v370 = vld [vmem:[%s351 + $0x90] sm:$0xff]
    %v371 = vld [vmem:[%s351 + $0x98] sm:$0xff]
    %v372 = vld [vmem:[%s351 + $0xa0] sm:$0xff]
    %v373 = vld [vmem:[%s351 + $0xa8] sm:$0xff]
    %v374 = vld [vmem:[%s351 + $0xb0] sm:$0xff]
    %v375 = vld [vmem:[%s351 + $0xb8] sm:$0xff]
    %v376 = vld [vmem:[%s351 + $0xc0] sm:$0xff]
    %v377 = vld [vmem:[%s351 + $0xc8] sm:$0xff]
    %v378 = vld [vmem:[%s351 + $0xd0] sm:$0xff]
    %v379 = vld [vmem:[%s351 + $0xd8] sm:$0xff]
    %v380 = vld [vmem:[%s351 + $0xe0] sm:$0xff]
    %v381 = vld [vmem:[%s351 + $0xe8] sm:$0xff]
    %v382 = vld [vmem:[%s351 + $0xf0] sm:$0xff]
    %v383 = vld [vmem:[%s351 + $0xf8] sm:$0xff]
    %v384 = vld [vmem:[%s351 + $0x100] sm:$0xff]
    %v385 = vld [vmem:[%s351 + $0x108] sm:$0xff]
    %v386 = vld [vmem:[%s351 + $0x110] sm:$0xff]
    %v387 = vld [vmem:[%s351 + $0x118] sm:$0xff]
    %v388 = vld [vmem:[%s351 + $0x120] sm:$0xff]
    %v389 = vld [vmem:[%s351 + $0x128] sm:$0xff]
    %v390 = vld [vmem:[%s351 + $0x130] sm:$0xff]
    %v391 = vld [vmem:[%s351 + $0x138] sm:$0xff]
    %v392 = vld [vmem:[%s351 + $0x140] sm:$0xff]
    %v393 = vld [vmem:[%s351 + $0x148] sm:$0xff]
    %v394 = vld [vmem:[%s351 + $0x150] sm:$0xff]
    %v395 = vld [vmem:[%s351 + $0x158] sm:$0xff]
    %v396 = vld [vmem:[%s351 + $0x160] sm:$0xff]
    %v397 = vld [vmem:[%s351 + $0x168] sm:$0xff]
    %v398 = vld [vmem:[%s351 + $0x170] sm:$0xff]
    %v399 = vld [vmem:[%s351 + $0x178] sm:$0xff]
    %v400 = vld [vmem:[%s351 + $0x180] sm:$0xff]
    %v401 = vld [vmem:[%s351 + $0x188] sm:$0xff]
    %v402 = vld [vmem:[%s351 + $0x190] sm:$0xff]
    %v403 = vld [vmem:[%s351 + $0x198] sm:$0xff]
    %v404 = vld [vmem:[%s351 + $0x1a0] sm:$0xff]
    %v405 = vld [vmem:[%s351 + $0x1a8] sm:$0xff]
    %v406 = vld [vmem:[%s351 + $0x1b0] sm:$0xff]
    %v407 = vld [vmem:[%s351 + $0x1b8] sm:$0xff]
    %v408 = vld [vmem:[%s351 + $0x1c0] sm:$0xff]
    %v409 = vld [vmem:[%s351 + $0x1c8] sm:$0xff]
    %v410 = vld [vmem:[%s351 + $0x1d0] sm:$0xff]
    %v411 = vld [vmem:[%s351 + $0x1d8] sm:$0xff]
    %v412 = vld [vmem:[%s351 + $0x1e0] sm:$0xff]
    %v413 = vld [vmem:[%s351 + $0x1e8] sm:$0xff]
    %v414 = vld [vmem:[%s351 + $0x1f0] sm:$0xff]
    %v415 = vld [vmem:[%s351 + $0x1f8] sm:$0xff]
    %v416 = vld [vmem:[%s351 + $0x200] sm:$0xff]
    %v417 = vld [vmem:[%s351 + $0x208] sm:$0xff]
    %v418 = vld [vmem:[%s351 + $0x210] sm:$0xff]
    %v419 = vld [vmem:[%s351 + $0x218] sm:$0xff]
    %v420 = vld [vmem:[%s351 + $0x220] sm:$0xff]
    %v421 = vld [vmem:[%s351 + $0x228] sm:$0xff]
    %v422 = vld [vmem:[%s351 + $0x230] sm:$0xff]
    %v423 = vld [vmem:[%s351 + $0x238] sm:$0xff]
    %v424 = vld [vmem:[%s351 + $0x240] sm:$0xff]
    %v425 = vld [vmem:[%s351 + $0x248] sm:$0xff]
    %v426 = vld [vmem:[%s351 + $0x250] sm:$0xff]
    %v427 = vld [vmem:[%s351 + $0x258] sm:$0xff]
    %v428 = vld [vmem:[%s351 + $0x260] sm:$0xff]
    %v429 = vld [vmem:[%s351 + $0x268] sm:$0xff]
    %v430 = vld [vmem:[%s351 + $0x270] sm:$0xff]
    %v431 = vld [vmem:[%s351 + $0x278] sm:$0xff]
    %v432 = vld [vmem:[%s351 + $0x280] sm:$0xff]
    %v433 = vld [vmem:[%s351 + $0x288] sm:$0xff]
    %v434 = vld [vmem:[%s351 + $0x290] sm:$0xff]
    %v435 = vld [vmem:[%s351 + $0x298] sm:$0xff]
    %v436 = vld [vmem:[%s351 + $0x2a0] sm:$0xff]
    %v437 = vld [vmem:[%s351 + $0x2a8] sm:$0xff]
    %v438 = vld [vmem:[%s351 + $0x2b0] sm:$0xff]
    %v439 = vld [vmem:[%s351 + $0x2b8] sm:$0xff]
    %v440 = vld [vmem:[%s351 + $0x2c0] sm:$0xff]
    %v441 = vld [vmem:[%s351 + $0x2c8] sm:$0xff]
    %v442 = vld [vmem:[%s351 + $0x2d0] sm:$0xff]
    %v443 = vld [vmem:[%s351 + $0x2d8] sm:$0xff]
    %v444 = vld [vmem:[%s351 + $0x2e0] sm:$0xff]
    %v445 = vld [vmem:[%s351 + $0x2e8] sm:$0xff]
    %v446 = vld [vmem:[%s351 + $0x2f0] sm:$0xff]
    %v447 = vld [vmem:[%s351 + $0x2f8] sm:$0xff]
    %v448 = vld [vmem:[%s351 + $0x300] sm:$0xff]
    %v449 = vld [vmem:[%s351 + $0x308] sm:$0xff]
    %v450 = vld [vmem:[%s351 + $0x310] sm:$0xff]
    %v451 = vld [vmem:[%s351 + $0x318] sm:$0xff]
    %v452 = vld [vmem:[%s351 + $0x320] sm:$0xff]
    %v453 = vld [vmem:[%s351 + $0x328] sm:$0xff]
    %v454 = vld [vmem:[%s351 + $0x330] sm:$0xff]
    %v455 = vld [vmem:[%s351 + $0x338] sm:$0xff]
    %v456 = vld [vmem:[%s351 + $0x340] sm:$0xff]
    %v457 = vld [vmem:[%s351 + $0x348] sm:$0xff]
    %v458 = vld [vmem:[%s351 + $0x350] sm:$0xff]
    %v459 = vld [vmem:[%s351 + $0x358] sm:$0xff]
    %v460 = vld [vmem:[%s351 + $0x360] sm:$0xff]
    %v461 = vld [vmem:[%s351 + $0x368] sm:$0xff]
    %v462 = vld [vmem:[%s351 + $0x370] sm:$0xff]
    %v463 = vld [vmem:[%s351 + $0x378] sm:$0xff]
    %v464 = vld [vmem:[%s351 + $0x380] sm:$0xff]
    %v465 = vld [vmem:[%s351 + $0x388] sm:$0xff]
    %v466 = vld [vmem:[%s351 + $0x390] sm:$0xff]
    %v467 = vld [vmem:[%s351 + $0x398] sm:$0xff]
    %v468 = vld [vmem:[%s351 + $0x3a0] sm:$0xff]
    %v469 = vld [vmem:[%s351 + $0x3a8] sm:$0xff]
    %v470 = vld [vmem:[%s351 + $0x3b0] sm:$0xff]
    %v471 = vld [vmem:[%s351 + $0x3b8] sm:$0xff]
    %v472 = vld [vmem:[%s351 + $0x3c0] sm:$0xff]
    %v473 = vld [vmem:[%s351 + $0x3c8] sm:$0xff]
    %v474 = vld [vmem:[%s351 + $0x3d0] sm:$0xff]
    %v475 = vld [vmem:[%s351 + $0x3d8] sm:$0xff]
    %v476 = vld [vmem:[%s351 + $0x3e0] sm:$0xff]
    %v477 = vld [vmem:[%s351 + $0x3e8] sm:$0xff]
    %v478 = vld [vmem:[%s351 + $0x3f0] sm:$0xff]
    %v479 = vld [vmem:[%s351 + $0x3f8] sm:$0xff]
    %481 = vst [vmem:[#allocation1] ss:$2 sm:$0xff] %v350
    %v482 = vld.sshfl [vmem:[#allocation1] sm:$0xff pattern:$0x75316420]
    %v483 = vld.sshfl [vmem:[#allocation1 + $0x8] sm:$0xff pattern:$0x75316420]
    %486 = vmatpush.msra.mxu0 %v412
    %487 = vmatpush.msra.mxu0 %v408
    %488 = vmatpush.msra.mxu0 %v404
    %489 = vmatpush.msra.mxu0 %v400
    %490 = vmatpush.msra.mxu0 %v396
    %491 = vmatpush.msra.mxu0 %v392
    %492 = vmatpush.msra.mxu0 %v388
    %493 = vmatpush.msra.mxu0 %v384
    %494 = vmatpush.msra.mxu0 %v380
    %495 = vmatpush.msra.mxu0 %v376
    %496 = vmatpush.msra.mxu0 %v372
    %497 = vmatpush.msra.mxu0 %v368
    %498 = vmatpush.msra.mxu0 %v364
    %499 = vmatpush.msra.mxu0 %v360
    %500 = vmatpush.msra.mxu0 %v356
    %501 = vmatpush.msra.mxu0 %v352
    %502 = vmatmul.f32.gmra.mxu0 %v482
    %v503 = vpop.f32.mrf.mxu0
    %v504 = vadd.f32 0.0, %v503
    %505 = vdwg.mxu0
    %506 = vmatpush.msra.mxu0 %v476
    %507 = vmatpush.msra.mxu0 %v472
    %508 = vmatpush.msra.mxu0 %v468
    %509 = vmatpush.msra.mxu0 %v464
    %510 = vmatpush.msra.mxu0 %v460
    %511 = vmatpush.msra.mxu0 %v456
    %512 = vmatpush.msra.mxu0 %v452
    %513 = vmatpush.msra.mxu0 %v448
    %514 = vmatpush.msra.mxu0 %v444
    %515 = vmatpush.msra.mxu0 %v440
    %516 = vmatpush.msra.mxu0 %v436
    %517 = vmatpush.msra.mxu0 %v432
    %518 = vmatpush.msra.mxu0 %v428
    %519 = vmatpush.msra.mxu0 %v424
    %520 = vmatpush.msra.mxu0 %v420
    %521 = vmatpush.msra.mxu0 %v416
    %522 = vmatmul.f32.gmra.mxu0 %v483
    %v523 = vpop.f32.mrf.mxu0
    %v524 = vadd.f32 %v504, %v523
    %525 = vdwg.mxu0
    %526 = vmatpush.msra.mxu0 %v413
    %527 = vmatpush.msra.mxu0 %v409
    %528 = vmatpush.msra.mxu0 %v405
    %529 = vmatpush.msra.mxu0 %v401
    %530 = vmatpush.msra.mxu0 %v397
    %531 = vmatpush.msra.mxu0 %v393
    %532 = vmatpush.msra.mxu0 %v389
    %533 = vmatpush.msra.mxu0 %v385
    %534 = vmatpush.msra.mxu0 %v381
    %535 = vmatpush.msra.mxu0 %v377
    %536 = vmatpush.msra.mxu0 %v373
    %537 = vmatpush.msra.mxu0 %v369
    %538 = vmatpush.msra.mxu0 %v365
    %539 = vmatpush.msra.mxu0 %v361
    %540 = vmatpush.msra.mxu0 %v357
    %541 = vmatpush.msra.mxu0 %v353
    %542 = vmatmul.f32.gmra.mxu0 %v482
    %v543 = vpop.f32.mrf.mxu0
    %v544 = vadd.f32 0.0, %v543
    %545 = vdwg.mxu0
    %546 = vmatpush.msra.mxu0 %v477
    %547 = vmatpush.msra.mxu0 %v473
    %548 = vmatpush.msra.mxu0 %v469
    %549 = vmatpush.msra.mxu0 %v465
    %550 = vmatpush.msra.mxu0 %v461
    %551 = vmatpush.msra.mxu0 %v457
    %552 = vmatpush.msra.mxu0 %v453
    %553 = vmatpush.msra.mxu0 %v449
    %554 = vmatpush.msra.mxu0 %v445
    %555 = vmatpush.msra.mxu0 %v441
    %556 = vmatpush.msra.mxu0 %v437
    %557 = vmatpush.msra.mxu0 %v433
    %558 = vmatpush.msra.mxu0 %v429
    %559 = vmatpush.msra.mxu0 %v425
    %560 = vmatpush.msra.mxu0 %v421
    %561 = vmatpush.msra.mxu0 %v417
    %562 = vmatmul.f32.gmra.mxu0 %v483
    %v563 = vpop.f32.mrf.mxu0
    %v564 = vadd.f32 %v544, %v563
    %565 = vdwg.mxu0
    %566 = vmatpush.msra.mxu0 %v414
    %567 = vmatpush.msra.mxu0 %v410
    %568 = vmatpush.msra.mxu0 %v406
    %569 = vmatpush.msra.mxu0 %v402
    %570 = vmatpush.msra.mxu0 %v398
    %571 = vmatpush.msra.mxu0 %v394
    %572 = vmatpush.msra.mxu0 %v390
    %573 = vmatpush.msra.mxu0 %v386
    %574 = vmatpush.msra.mxu0 %v382
    %575 = vmatpush.msra.mxu0 %v378
    %576 = vmatpush.msra.mxu0 %v374
    %577 = vmatpush.msra.mxu0 %v370
    %578 = vmatpush.msra.mxu0 %v366
    %579 = vmatpush.msra.mxu0 %v362
    %580 = vmatpush.msra.mxu0 %v358
    %581 = vmatpush.msra.mxu0 %v354
    %582 = vmatmul.f32.gmra.mxu0 %v482
    %v583 = vpop.f32.mrf.mxu0
    %v584 = vadd.f32 0.0, %v583
    %585 = vdwg.mxu0
    %586 = vmatpush.msra.mxu0 %v478
    %587 = vmatpush.msra.mxu0 %v474
    %588 = vmatpush.msra.mxu0 %v470
    %589 = vmatpush.msra.mxu0 %v466
    %590 = vmatpush.msra.mxu0 %v462
    %591 = vmatpush.msra.mxu0 %v458
    %592 = vmatpush.msra.mxu0 %v454
    %593 = vmatpush.msra.mxu0 %v450
    %594 = vmatpush.msra.mxu0 %v446
    %595 = vmatpush.msra.mxu0 %v442
    %596 = vmatpush.msra.mxu0 %v438
    %597 = vmatpush.msra.mxu0 %v434
    %598 = vmatpush.msra.mxu0 %v430
    %599 = vmatpush.msra.mxu0 %v426
    %600 = vmatpush.msra.mxu0 %v422
    %601 = vmatpush.msra.mxu0 %v418
    %602 = vmatmul.f32.gmra.mxu0 %v483
    %v603 = vpop.f32.mrf.mxu0
    %v604 = vadd.f32 %v584, %v603
    %605 = vdwg.mxu0
    %606 = vmatpush.msra.mxu0 %v415
    %607 = vmatpush.msra.mxu0 %v411
    %608 = vmatpush.msra.mxu0 %v407
    %609 = vmatpush.msra.mxu0 %v403
    %610 = vmatpush.msra.mxu0 %v399
    %611 = vmatpush.msra.mxu0 %v395
    %612 = vmatpush.msra.mxu0 %v391
    %613 = vmatpush.msra.mxu0 %v387
    %614 = vmatpush.msra.mxu0 %v383
    %615 = vmatpush.msra.mxu0 %v379
    %616 = vmatpush.msra.mxu0 %v375
    %617 = vmatpush.msra.mxu0 %v371
    %618 = vmatpush.msra.mxu0 %v367
    %619 = vmatpush.msra.mxu0 %v363
    %620 = vmatpush.msra.mxu0 %v359
    %621 = vmatpush.msra.mxu0 %v355
    %622 = vmatmul.f32.gmra.mxu0 %v482
    %v623 = vpop.f32.mrf.mxu0
    %v624 = vadd.f32 0.0, %v623
    %625 = vdwg.mxu0
    %626 = vmatpush.msra.mxu0 %v479
    %627 = vmatpush.msra.mxu0 %v475
    %628 = vmatpush.msra.mxu0 %v471
    %629 = vmatpush.msra.mxu0 %v467
    %630 = vmatpush.msra.mxu0 %v463
    %631 = vmatpush.msra.mxu0 %v459
    %632 = vmatpush.msra.mxu0 %v455
    %633 = vmatpush.msra.mxu0 %v451
    %634 = vmatpush.msra.mxu0 %v447
    %635 = vmatpush.msra.mxu0 %v443
    %636 = vmatpush.msra.mxu0 %v439
    %637 = vmatpush.msra.mxu0 %v435
    %638 = vmatpush.msra.mxu0 %v431
    %639 = vmatpush.msra.mxu0 %v427
    %640 = vmatpush.msra.mxu0 %v423
    %641 = vmatpush.msra.mxu0 %v419
    %642 = vmatmul.f32.gmra.mxu0 %v483
    %v643 = vpop.f32.mrf.mxu0
    %v644 = vadd.f32 %v624, %v643
    %645 = vdwg.mxu0
    %v650 = vrot.slane %v564, 4
    %v651 = vrot.slane %v644, 4
    %v652 = vsel %vm343, %v524, %v650
    %v653 = vsel %vm343, %v604, %v651
    %656 = vst [vmem:[#allocation7 + $0x10] sm:$0xff] %v652
    %657 = vst [vmem:[#allocation7 + $0x18] sm:$0xff] %v653
    %v658 = vld [vmem:[#allocation2 + $0x10] sm:$0xff]
    %s659 = scalar_lea.vmem [#allocation5], 2048
    %v660 = vld [vmem:[%s659] sm:$0xff]
    %v661 = vld [vmem:[%s659 + $0x8] sm:$0xff]
    %v662 = vld [vmem:[%s659 + $0x10] sm:$0xff]
    %v663 = vld [vmem:[%s659 + $0x18] sm:$0xff]
    %v664 = vld [vmem:[%s659 + $0x20] sm:$0xff]
    %v665 = vld [vmem:[%s659 + $0x28] sm:$0xff]
    %v666 = vld [vmem:[%s659 + $0x30] sm:$0xff]
    %v667 = vld [vmem:[%s659 + $0x38] sm:$0xff]
    %v668 = vld [vmem:[%s659 + $0x40] sm:$0xff]
    %v669 = vld [vmem:[%s659 + $0x48] sm:$0xff]
    %v670 = vld [vmem:[%s659 + $0x50] sm:$0xff]
    %v671 = vld [vmem:[%s659 + $0x58] sm:$0xff]
    %v672 = vld [vmem:[%s659 + $0x60] sm:$0xff]
    %v673 = vld [vmem:[%s659 + $0x68] sm:$0xff]
    %v674 = vld [vmem:[%s659 + $0x70] sm:$0xff]
    %v675 = vld [vmem:[%s659 + $0x78] sm:$0xff]
    %v676 = vld [vmem:[%s659 + $0x80] sm:$0xff]
    %v677 = vld [vmem:[%s659 + $0x88] sm:$0xff]
    %v678 = vld [vmem:[%s659 + $0x90] sm:$0xff]
    %v679 = vld [vmem:[%s659 + $0x98] sm:$0xff]
    %v680 = vld [vmem:[%s659 + $0xa0] sm:$0xff]
    %v681 = vld [vmem:[%s659 + $0xa8] sm:$0xff]
    %v682 = vld [vmem:[%s659 + $0xb0] sm:$0xff]
    %v683 = vld [vmem:[%s659 + $0xb8] sm:$0xff]
    %v684 = vld [vmem:[%s659 + $0xc0] sm:$0xff]
    %v685 = vld [vmem:[%s659 + $0xc8] sm:$0xff]
    %v686 = vld [vmem:[%s659 + $0xd0] sm:$0xff]
    %v687 = vld [vmem:[%s659 + $0xd8] sm:$0xff]
    %v688 = vld [vmem:[%s659 + $0xe0] sm:$0xff]
    %v689 = vld [vmem:[%s659 + $0xe8] sm:$0xff]
    %v690 = vld [vmem:[%s659 + $0xf0] sm:$0xff]
    %v691 = vld [vmem:[%s659 + $0xf8] sm:$0xff]
    %v692 = vld [vmem:[%s659 + $0x100] sm:$0xff]
    %v693 = vld [vmem:[%s659 + $0x108] sm:$0xff]
    %v694 = vld [vmem:[%s659 + $0x110] sm:$0xff]
    %v695 = vld [vmem:[%s659 + $0x118] sm:$0xff]
    %v696 = vld [vmem:[%s659 + $0x120] sm:$0xff]
    %v697 = vld [vmem:[%s659 + $0x128] sm:$0xff]
    %v698 = vld [vmem:[%s659 + $0x130] sm:$0xff]
    %v699 = vld [vmem:[%s659 + $0x138] sm:$0xff]
    %v700 = vld [vmem:[%s659 + $0x140] sm:$0xff]
    %v701 = vld [vmem:[%s659 + $0x148] sm:$0xff]
    %v702 = vld [vmem:[%s659 + $0x150] sm:$0xff]
    %v703 = vld [vmem:[%s659 + $0x158] sm:$0xff]
    %v704 = vld [vmem:[%s659 + $0x160] sm:$0xff]
    %v705 = vld [vmem:[%s659 + $0x168] sm:$0xff]
    %v706 = vld [vmem:[%s659 + $0x170] sm:$0xff]
    %v707 = vld [vmem:[%s659 + $0x178] sm:$0xff]
    %v708 = vld [vmem:[%s659 + $0x180] sm:$0xff]
    %v709 = vld [vmem:[%s659 + $0x188] sm:$0xff]
    %v710 = vld [vmem:[%s659 + $0x190] sm:$0xff]
    %v711 = vld [vmem:[%s659 + $0x198] sm:$0xff]
    %v712 = vld [vmem:[%s659 + $0x1a0] sm:$0xff]
    %v713 = vld [vmem:[%s659 + $0x1a8] sm:$0xff]
    %v714 = vld [vmem:[%s659 + $0x1b0] sm:$0xff]
    %v715 = vld [vmem:[%s659 + $0x1b8] sm:$0xff]
    %v716 = vld [vmem:[%s659 + $0x1c0] sm:$0xff]
    %v717 = vld [vmem:[%s659 + $0x1c8] sm:$0xff]
    %v718 = vld [vmem:[%s659 + $0x1d0] sm:$0xff]
    %v719 = vld [vmem:[%s659 + $0x1d8] sm:$0xff]
    %v720 = vld [vmem:[%s659 + $0x1e0] sm:$0xff]
    %v721 = vld [vmem:[%s659 + $0x1e8] sm:$0xff]
    %v722 = vld [vmem:[%s659 + $0x1f0] sm:$0xff]
    %v723 = vld [vmem:[%s659 + $0x1f8] sm:$0xff]
    %v724 = vld [vmem:[%s659 + $0x200] sm:$0xff]
    %v725 = vld [vmem:[%s659 + $0x208] sm:$0xff]
    %v726 = vld [vmem:[%s659 + $0x210] sm:$0xff]
    %v727 = vld [vmem:[%s659 + $0x218] sm:$0xff]
    %v728 = vld [vmem:[%s659 + $0x220] sm:$0xff]
    %v729 = vld [vmem:[%s659 + $0x228] sm:$0xff]
    %v730 = vld [vmem:[%s659 + $0x230] sm:$0xff]
    %v731 = vld [vmem:[%s659 + $0x238] sm:$0xff]
    %v732 = vld [vmem:[%s659 + $0x240] sm:$0xff]
    %v733 = vld [vmem:[%s659 + $0x248] sm:$0xff]
    %v734 = vld [vmem:[%s659 + $0x250] sm:$0xff]
    %v735 = vld [vmem:[%s659 + $0x258] sm:$0xff]
    %v736 = vld [vmem:[%s659 + $0x260] sm:$0xff]
    %v737 = vld [vmem:[%s659 + $0x268] sm:$0xff]
    %v738 = vld [vmem:[%s659 + $0x270] sm:$0xff]
    %v739 = vld [vmem:[%s659 + $0x278] sm:$0xff]
    %v740 = vld [vmem:[%s659 + $0x280] sm:$0xff]
    %v741 = vld [vmem:[%s659 + $0x288] sm:$0xff]
    %v742 = vld [vmem:[%s659 + $0x290] sm:$0xff]
    %v743 = vld [vmem:[%s659 + $0x298] sm:$0xff]
    %v744 = vld [vmem:[%s659 + $0x2a0] sm:$0xff]
    %v745 = vld [vmem:[%s659 + $0x2a8] sm:$0xff]
    %v746 = vld [vmem:[%s659 + $0x2b0] sm:$0xff]
    %v747 = vld [vmem:[%s659 + $0x2b8] sm:$0xff]
    %v748 = vld [vmem:[%s659 + $0x2c0] sm:$0xff]
    %v749 = vld [vmem:[%s659 + $0x2c8] sm:$0xff]
    %v750 = vld [vmem:[%s659 + $0x2d0] sm:$0xff]
    %v751 = vld [vmem:[%s659 + $0x2d8] sm:$0xff]
    %v752 = vld [vmem:[%s659 + $0x2e0] sm:$0xff]
    %v753 = vld [vmem:[%s659 + $0x2e8] sm:$0xff]
    %v754 = vld [vmem:[%s659 + $0x2f0] sm:$0xff]
    %v755 = vld [vmem:[%s659 + $0x2f8] sm:$0xff]
    %v756 = vld [vmem:[%s659 + $0x300] sm:$0xff]
    %v757 = vld [vmem:[%s659 + $0x308] sm:$0xff]
    %v758 = vld [vmem:[%s659 + $0x310] sm:$0xff]
    %v759 = vld [vmem:[%s659 + $0x318] sm:$0xff]
    %v760 = vld [vmem:[%s659 + $0x320] sm:$0xff]
    %v761 = vld [vmem:[%s659 + $0x328] sm:$0xff]
    %v762 = vld [vmem:[%s659 + $0x330] sm:$0xff]
    %v763 = vld [vmem:[%s659 + $0x338] sm:$0xff]
    %v764 = vld [vmem:[%s659 + $0x340] sm:$0xff]
    %v765 = vld [vmem:[%s659 + $0x348] sm:$0xff]
    %v766 = vld [vmem:[%s659 + $0x350] sm:$0xff]
    %v767 = vld [vmem:[%s659 + $0x358] sm:$0xff]
    %v768 = vld [vmem:[%s659 + $0x360] sm:$0xff]
    %v769 = vld [vmem:[%s659 + $0x368] sm:$0xff]
    %v770 = vld [vmem:[%s659 + $0x370] sm:$0xff]
    %v771 = vld [vmem:[%s659 + $0x378] sm:$0xff]
    %v772 = vld [vmem:[%s659 + $0x380] sm:$0xff]
    %v773 = vld [vmem:[%s659 + $0x388] sm:$0xff]
    %v774 = vld [vmem:[%s659 + $0x390] sm:$0xff]
    %v775 = vld [vmem:[%s659 + $0x398] sm:$0xff]
    %v776 = vld [vmem:[%s659 + $0x3a0] sm:$0xff]
    %v777 = vld [vmem:[%s659 + $0x3a8] sm:$0xff]
    %v778 = vld [vmem:[%s659 + $0x3b0] sm:$0xff]
    %v779 = vld [vmem:[%s659 + $0x3b8] sm:$0xff]
    %v780 = vld [vmem:[%s659 + $0x3c0] sm:$0xff]
    %v781 = vld [vmem:[%s659 + $0x3c8] sm:$0xff]
    %v782 = vld [vmem:[%s659 + $0x3d0] sm:$0xff]
    %v783 = vld [vmem:[%s659 + $0x3d8] sm:$0xff]
    %v784 = vld [vmem:[%s659 + $0x3e0] sm:$0xff]
    %v785 = vld [vmem:[%s659 + $0x3e8] sm:$0xff]
    %v786 = vld [vmem:[%s659 + $0x3f0] sm:$0xff]
    %v787 = vld [vmem:[%s659 + $0x3f8] sm:$0xff]
    %789 = vst [vmem:[#allocation1] ss:$2 sm:$0xff] %v658
    %v790 = vld.sshfl [vmem:[#allocation1] sm:$0xff pattern:$0x75316420]
    %v791 = vld.sshfl [vmem:[#allocation1 + $0x8] sm:$0xff pattern:$0x75316420]
    %794 = vmatpush.msra.mxu0 %v720
    %795 = vmatpush.msra.mxu0 %v716
    %796 = vmatpush.msra.mxu0 %v712
    %797 = vmatpush.msra.mxu0 %v708
    %798 = vmatpush.msra.mxu0 %v704
    %799 = vmatpush.msra.mxu0 %v700
    %800 = vmatpush.msra.mxu0 %v696
    %801 = vmatpush.msra.mxu0 %v692
    %802 = vmatpush.msra.mxu0 %v688
    %803 = vmatpush.msra.mxu0 %v684
    %804 = vmatpush.msra.mxu0 %v680
    %805 = vmatpush.msra.mxu0 %v676
    %806 = vmatpush.msra.mxu0 %v672
    %807 = vmatpush.msra.mxu0 %v668
    %808 = vmatpush.msra.mxu0 %v664
    %809 = vmatpush.msra.mxu0 %v660
    %810 = vmatmul.f32.gmra.mxu0 %v790
    %v811 = vpop.f32.mrf.mxu0
    %v812 = vadd.f32 0.0, %v811
    %813 = vdwg.mxu0
    %814 = vmatpush.msra.mxu0 %v784
    %815 = vmatpush.msra.mxu0 %v780
    %816 = vmatpush.msra.mxu0 %v776
    %817 = vmatpush.msra.mxu0 %v772
    %818 = vmatpush.msra.mxu0 %v768
    %819 = vmatpush.msra.mxu0 %v764
    %820 = vmatpush.msra.mxu0 %v760
    %821 = vmatpush.msra.mxu0 %v756
    %822 = vmatpush.msra.mxu0 %v752
    %823 = vmatpush.msra.mxu0 %v748
    %824 = vmatpush.msra.mxu0 %v744
    %825 = vmatpush.msra.mxu0 %v740
    %826 = vmatpush.msra.mxu0 %v736
    %827 = vmatpush.msra.mxu0 %v732
    %828 = vmatpush.msra.mxu0 %v728
    %829 = vmatpush.msra.mxu0 %v724
    %830 = vmatmul.f32.gmra.mxu0 %v791
    %v831 = vpop.f32.mrf.mxu0
    %v832 = vadd.f32 %v812, %v831
    %833 = vdwg.mxu0
    %834 = vmatpush.msra.mxu0 %v721
    %835 = vmatpush.msra.mxu0 %v717
    %836 = vmatpush.msra.mxu0 %v713
    %837 = vmatpush.msra.mxu0 %v709
    %838 = vmatpush.msra.mxu0 %v705
    %839 = vmatpush.msra.mxu0 %v701
    %840 = vmatpush.msra.mxu0 %v697
    %841 = vmatpush.msra.mxu0 %v693
    %842 = vmatpush.msra.mxu0 %v689
    %843 = vmatpush.msra.mxu0 %v685
    %844 = vmatpush.msra.mxu0 %v681
    %845 = vmatpush.msra.mxu0 %v677
    %846 = vmatpush.msra.mxu0 %v673
    %847 = vmatpush.msra.mxu0 %v669
    %848 = vmatpush.msra.mxu0 %v665
    %849 = vmatpush.msra.mxu0 %v661
    %850 = vmatmul.f32.gmra.mxu0 %v790
    %v851 = vpop.f32.mrf.mxu0
    %v852 = vadd.f32 0.0, %v851
    %853 = vdwg.mxu0
    %854 = vmatpush.msra.mxu0 %v785
    %855 = vmatpush.msra.mxu0 %v781
    %856 = vmatpush.msra.mxu0 %v777
    %857 = vmatpush.msra.mxu0 %v773
    %858 = vmatpush.msra.mxu0 %v769
    %859 = vmatpush.msra.mxu0 %v765
    %860 = vmatpush.msra.mxu0 %v761
    %861 = vmatpush.msra.mxu0 %v757
    %862 = vmatpush.msra.mxu0 %v753
    %863 = vmatpush.msra.mxu0 %v749
    %864 = vmatpush.msra.mxu0 %v745
    %865 = vmatpush.msra.mxu0 %v741
    %866 = vmatpush.msra.mxu0 %v737
    %867 = vmatpush.msra.mxu0 %v733
    %868 = vmatpush.msra.mxu0 %v729
    %869 = vmatpush.msra.mxu0 %v725
    %870 = vmatmul.f32.gmra.mxu0 %v791
    %v871 = vpop.f32.mrf.mxu0
    %v872 = vadd.f32 %v852, %v871
    %873 = vdwg.mxu0
    %874 = vmatpush.msra.mxu0 %v722
    %875 = vmatpush.msra.mxu0 %v718
    %876 = vmatpush.msra.mxu0 %v714
    %877 = vmatpush.msra.mxu0 %v710
    %878 = vmatpush.msra.mxu0 %v706
    %879 = vmatpush.msra.mxu0 %v702
    %880 = vmatpush.msra.mxu0 %v698
    %881 = vmatpush.msra.mxu0 %v694
    %882 = vmatpush.msra.mxu0 %v690
    %883 = vmatpush.msra.mxu0 %v686
    %884 = vmatpush.msra.mxu0 %v682
    %885 = vmatpush.msra.mxu0 %v678
    %886 = vmatpush.msra.mxu0 %v674
    %887 = vmatpush.msra.mxu0 %v670
    %888 = vmatpush.msra.mxu0 %v666
    %889 = vmatpush.msra.mxu0 %v662
    %890 = vmatmul.f32.gmra.mxu0 %v790
    %v891 = vpop.f32.mrf.mxu0
    %v892 = vadd.f32 0.0, %v891
    %893 = vdwg.mxu0
    %894 = vmatpush.msra.mxu0 %v786
    %895 = vmatpush.msra.mxu0 %v782
    %896 = vmatpush.msra.mxu0 %v778
    %897 = vmatpush.msra.mxu0 %v774
    %898 = vmatpush.msra.mxu0 %v770
    %899 = vmatpush.msra.mxu0 %v766
    %900 = vmatpush.msra.mxu0 %v762
    %901 = vmatpush.msra.mxu0 %v758
    %902 = vmatpush.msra.mxu0 %v754
    %903 = vmatpush.msra.mxu0 %v750
    %904 = vmatpush.msra.mxu0 %v746
    %905 = vmatpush.msra.mxu0 %v742
    %906 = vmatpush.msra.mxu0 %v738
    %907 = vmatpush.msra.mxu0 %v734
    %908 = vmatpush.msra.mxu0 %v730
    %909 = vmatpush.msra.mxu0 %v726
    %910 = vmatmul.f32.gmra.mxu0 %v791
    %v911 = vpop.f32.mrf.mxu0
    %v912 = vadd.f32 %v892, %v911
    %913 = vdwg.mxu0
    %914 = vmatpush.msra.mxu0 %v723
    %915 = vmatpush.msra.mxu0 %v719
    %916 = vmatpush.msra.mxu0 %v715
    %917 = vmatpush.msra.mxu0 %v711
    %918 = vmatpush.msra.mxu0 %v707
    %919 = vmatpush.msra.mxu0 %v703
    %920 = vmatpush.msra.mxu0 %v699
    %921 = vmatpush.msra.mxu0 %v695
    %922 = vmatpush.msra.mxu0 %v691
    %923 = vmatpush.msra.mxu0 %v687
    %924 = vmatpush.msra.mxu0 %v683
    %925 = vmatpush.msra.mxu0 %v679
    %926 = vmatpush.msra.mxu0 %v675
    %927 = vmatpush.msra.mxu0 %v671
    %928 = vmatpush.msra.mxu0 %v667
    %929 = vmatpush.msra.mxu0 %v663
    %930 = vmatmul.f32.gmra.mxu0 %v790
    %v931 = vpop.f32.mrf.mxu0
    %v932 = vadd.f32 0.0, %v931
    %933 = vdwg.mxu0
    %934 = vmatpush.msra.mxu0 %v787
    %935 = vmatpush.msra.mxu0 %v783
    %936 = vmatpush.msra.mxu0 %v779
    %937 = vmatpush.msra.mxu0 %v775
    %938 = vmatpush.msra.mxu0 %v771
    %939 = vmatpush.msra.mxu0 %v767
    %940 = vmatpush.msra.mxu0 %v763
    %941 = vmatpush.msra.mxu0 %v759
    %942 = vmatpush.msra.mxu0 %v755
    %943 = vmatpush.msra.mxu0 %v751
    %944 = vmatpush.msra.mxu0 %v747
    %945 = vmatpush.msra.mxu0 %v743
    %946 = vmatpush.msra.mxu0 %v739
    %947 = vmatpush.msra.mxu0 %v735
    %948 = vmatpush.msra.mxu0 %v731
    %949 = vmatpush.msra.mxu0 %v727
    %950 = vmatmul.f32.gmra.mxu0 %v791
    %v951 = vpop.f32.mrf.mxu0
    %v952 = vadd.f32 %v932, %v951
    %953 = vdwg.mxu0
    %v958 = vrot.slane %v872, 4
    %v959 = vrot.slane %v952, 4
    %v960 = vsel %vm343, %v832, %v958
    %v961 = vsel %vm343, %v912, %v959
    %964 = vst [vmem:[#allocation7 + $0x20] sm:$0xff] %v960
    %965 = vst [vmem:[#allocation7 + $0x28] sm:$0xff] %v961
    %v966 = vld [vmem:[#allocation2 + $0x18] sm:$0xff]
    %s967 = scalar_lea.vmem [#allocation5], 3072
    %v968 = vld [vmem:[%s967] sm:$0xff]
    %v969 = vld [vmem:[%s967 + $0x8] sm:$0xff]
    %v970 = vld [vmem:[%s967 + $0x10] sm:$0xff]
    %v971 = vld [vmem:[%s967 + $0x18] sm:$0xff]
    %v972 = vld [vmem:[%s967 + $0x20] sm:$0xff]
    %v973 = vld [vmem:[%s967 + $0x28] sm:$0xff]
    %v974 = vld [vmem:[%s967 + $0x30] sm:$0xff]
    %v975 = vld [vmem:[%s967 + $0x38] sm:$0xff]
    %v976 = vld [vmem:[%s967 + $0x40] sm:$0xff]
    %v977 = vld [vmem:[%s967 + $0x48] sm:$0xff]
    %v978 = vld [vmem:[%s967 + $0x50] sm:$0xff]
    %v979 = vld [vmem:[%s967 + $0x58] sm:$0xff]
    %v980 = vld [vmem:[%s967 + $0x60] sm:$0xff]
    %v981 = vld [vmem:[%s967 + $0x68] sm:$0xff]
    %v982 = vld [vmem:[%s967 + $0x70] sm:$0xff]
    %v983 = vld [vmem:[%s967 + $0x78] sm:$0xff]
    %v984 = vld [vmem:[%s967 + $0x80] sm:$0xff]
    %v985 = vld [vmem:[%s967 + $0x88] sm:$0xff]
    %v986 = vld [vmem:[%s967 + $0x90] sm:$0xff]
    %v987 = vld [vmem:[%s967 + $0x98] sm:$0xff]
    %v988 = vld [vmem:[%s967 + $0xa0] sm:$0xff]
    %v989 = vld [vmem:[%s967 + $0xa8] sm:$0xff]
    %v990 = vld [vmem:[%s967 + $0xb0] sm:$0xff]
    %v991 = vld [vmem:[%s967 + $0xb8] sm:$0xff]
    %v992 = vld [vmem:[%s967 + $0xc0] sm:$0xff]
    %v993 = vld [vmem:[%s967 + $0xc8] sm:$0xff]
    %v994 = vld [vmem:[%s967 + $0xd0] sm:$0xff]
    %v995 = vld [vmem:[%s967 + $0xd8] sm:$0xff]
    %v996 = vld [vmem:[%s967 + $0xe0] sm:$0xff]
    %v997 = vld [vmem:[%s967 + $0xe8] sm:$0xff]
    %v998 = vld [vmem:[%s967 + $0xf0] sm:$0xff]
    %v999 = vld [vmem:[%s967 + $0xf8] sm:$0xff]
    %v1000 = vld [vmem:[%s967 + $0x100] sm:$0xff]
    %v1001 = vld [vmem:[%s967 + $0x108] sm:$0xff]
    %v1002 = vld [vmem:[%s967 + $0x110] sm:$0xff]
    %v1003 = vld [vmem:[%s967 + $0x118] sm:$0xff]
    %v1004 = vld [vmem:[%s967 + $0x120] sm:$0xff]
    %v1005 = vld [vmem:[%s967 + $0x128] sm:$0xff]
    %v1006 = vld [vmem:[%s967 + $0x130] sm:$0xff]
    %v1007 = vld [vmem:[%s967 + $0x138] sm:$0xff]
    %v1008 = vld [vmem:[%s967 + $0x140] sm:$0xff]
    %v1009 = vld [vmem:[%s967 + $0x148] sm:$0xff]
    %v1010 = vld [vmem:[%s967 + $0x150] sm:$0xff]
    %v1011 = vld [vmem:[%s967 + $0x158] sm:$0xff]
    %v1012 = vld [vmem:[%s967 + $0x160] sm:$0xff]
    %v1013 = vld [vmem:[%s967 + $0x168] sm:$0xff]
    %v1014 = vld [vmem:[%s967 + $0x170] sm:$0xff]
    %v1015 = vld [vmem:[%s967 + $0x178] sm:$0xff]
    %v1016 = vld [vmem:[%s967 + $0x180] sm:$0xff]
    %v1017 = vld [vmem:[%s967 + $0x188] sm:$0xff]
    %v1018 = vld [vmem:[%s967 + $0x190] sm:$0xff]
    %v1019 = vld [vmem:[%s967 + $0x198] sm:$0xff]
    %v1020 = vld [vmem:[%s967 + $0x1a0] sm:$0xff]
    %v1021 = vld [vmem:[%s967 + $0x1a8] sm:$0xff]
    %v1022 = vld [vmem:[%s967 + $0x1b0] sm:$0xff]
    %v1023 = vld [vmem:[%s967 + $0x1b8] sm:$0xff]
    %v1024 = vld [vmem:[%s967 + $0x1c0] sm:$0xff]
    %v1025 = vld [vmem:[%s967 + $0x1c8] sm:$0xff]
    %v1026 = vld [vmem:[%s967 + $0x1d0] sm:$0xff]
    %v1027 = vld [vmem:[%s967 + $0x1d8] sm:$0xff]
    %v1028 = vld [vmem:[%s967 + $0x1e0] sm:$0xff]
    %v1029 = vld [vmem:[%s967 + $0x1e8] sm:$0xff]
    %v1030 = vld [vmem:[%s967 + $0x1f0] sm:$0xff]
    %v1031 = vld [vmem:[%s967 + $0x1f8] sm:$0xff]
    %v1032 = vld [vmem:[%s967 + $0x200] sm:$0xff]
    %v1033 = vld [vmem:[%s967 + $0x208] sm:$0xff]
    %v1034 = vld [vmem:[%s967 + $0x210] sm:$0xff]
    %v1035 = vld [vmem:[%s967 + $0x218] sm:$0xff]
    %v1036 = vld [vmem:[%s967 + $0x220] sm:$0xff]
    %v1037 = vld [vmem:[%s967 + $0x228] sm:$0xff]
    %v1038 = vld [vmem:[%s967 + $0x230] sm:$0xff]
    %v1039 = vld [vmem:[%s967 + $0x238] sm:$0xff]
    %v1040 = vld [vmem:[%s967 + $0x240] sm:$0xff]
    %v1041 = vld [vmem:[%s967 + $0x248] sm:$0xff]
    %v1042 = vld [vmem:[%s967 + $0x250] sm:$0xff]
    %v1043 = vld [vmem:[%s967 + $0x258] sm:$0xff]
    %v1044 = vld [vmem:[%s967 + $0x260] sm:$0xff]
    %v1045 = vld [vmem:[%s967 + $0x268] sm:$0xff]
    %v1046 = vld [vmem:[%s967 + $0x270] sm:$0xff]
    %v1047 = vld [vmem:[%s967 + $0x278] sm:$0xff]
    %v1048 = vld [vmem:[%s967 + $0x280] sm:$0xff]
    %v1049 = vld [vmem:[%s967 + $0x288] sm:$0xff]
    %v1050 = vld [vmem:[%s967 + $0x290] sm:$0xff]
    %v1051 = vld [vmem:[%s967 + $0x298] sm:$0xff]
    %v1052 = vld [vmem:[%s967 + $0x2a0] sm:$0xff]
    %v1053 = vld [vmem:[%s967 + $0x2a8] sm:$0xff]
    %v1054 = vld [vmem:[%s967 + $0x2b0] sm:$0xff]
    %v1055 = vld [vmem:[%s967 + $0x2b8] sm:$0xff]
    %v1056 = vld [vmem:[%s967 + $0x2c0] sm:$0xff]
    %v1057 = vld [vmem:[%s967 + $0x2c8] sm:$0xff]
    %v1058 = vld [vmem:[%s967 + $0x2d0] sm:$0xff]
    %v1059 = vld [vmem:[%s967 + $0x2d8] sm:$0xff]
    %v1060 = vld [vmem:[%s967 + $0x2e0] sm:$0xff]
    %v1061 = vld [vmem:[%s967 + $0x2e8] sm:$0xff]
    %v1062 = vld [vmem:[%s967 + $0x2f0] sm:$0xff]
    %v1063 = vld [vmem:[%s967 + $0x2f8] sm:$0xff]
    %v1064 = vld [vmem:[%s967 + $0x300] sm:$0xff]
    %v1065 = vld [vmem:[%s967 + $0x308] sm:$0xff]
    %v1066 = vld [vmem:[%s967 + $0x310] sm:$0xff]
    %v1067 = vld [vmem:[%s967 + $0x318] sm:$0xff]
    %v1068 = vld [vmem:[%s967 + $0x320] sm:$0xff]
    %v1069 = vld [vmem:[%s967 + $0x328] sm:$0xff]
    %v1070 = vld [vmem:[%s967 + $0x330] sm:$0xff]
    %v1071 = vld [vmem:[%s967 + $0x338] sm:$0xff]
    %v1072 = vld [vmem:[%s967 + $0x340] sm:$0xff]
    %v1073 = vld [vmem:[%s967 + $0x348] sm:$0xff]
    %v1074 = vld [vmem:[%s967 + $0x350] sm:$0xff]
    %v1075 = vld [vmem:[%s967 + $0x358] sm:$0xff]
    %v1076 = vld [vmem:[%s967 + $0x360] sm:$0xff]
    %v1077 = vld [vmem:[%s967 + $0x368] sm:$0xff]
    %v1078 = vld [vmem:[%s967 + $0x370] sm:$0xff]
    %v1079 = vld [vmem:[%s967 + $0x378] sm:$0xff]
    %v1080 = vld [vmem:[%s967 + $0x380] sm:$0xff]
    %v1081 = vld [vmem:[%s967 + $0x388] sm:$0xff]
    %v1082 = vld [vmem:[%s967 + $0x390] sm:$0xff]
    %v1083 = vld [vmem:[%s967 + $0x398] sm:$0xff]
    %v1084 = vld [vmem:[%s967 + $0x3a0] sm:$0xff]
    %v1085 = vld [vmem:[%s967 + $0x3a8] sm:$0xff]
    %v1086 = vld [vmem:[%s967 + $0x3b0] sm:$0xff]
    %v1087 = vld [vmem:[%s967 + $0x3b8] sm:$0xff]
    %v1088 = vld [vmem:[%s967 + $0x3c0] sm:$0xff]
    %v1089 = vld [vmem:[%s967 + $0x3c8] sm:$0xff]
    %v1090 = vld [vmem:[%s967 + $0x3d0] sm:$0xff]
    %v1091 = vld [vmem:[%s967 + $0x3d8] sm:$0xff]
    %v1092 = vld [vmem:[%s967 + $0x3e0] sm:$0xff]
    %v1093 = vld [vmem:[%s967 + $0x3e8] sm:$0xff]
    %v1094 = vld [vmem:[%s967 + $0x3f0] sm:$0xff]
    %v1095 = vld [vmem:[%s967 + $0x3f8] sm:$0xff]
    %1097 = vst [vmem:[#allocation1] ss:$2 sm:$0xff] %v966
    %v1098 = vld.sshfl [vmem:[#allocation1] sm:$0xff pattern:$0x75316420]
    %v1099 = vld.sshfl [vmem:[#allocation1 + $0x8] sm:$0xff pattern:$0x75316420]
    %1102 = vmatpush.msra.mxu0 %v1028
    %1103 = vmatpush.msra.mxu0 %v1024
    %1104 = vmatpush.msra.mxu0 %v1020
    %1105 = vmatpush.msra.mxu0 %v1016
    %1106 = vmatpush.msra.mxu0 %v1012
    %1107 = vmatpush.msra.mxu0 %v1008
    %1108 = vmatpush.msra.mxu0 %v1004
    %1109 = vmatpush.msra.mxu0 %v1000
    %1110 = vmatpush.msra.mxu0 %v996
    %1111 = vmatpush.msra.mxu0 %v992
    %1112 = vmatpush.msra.mxu0 %v988
    %1113 = vmatpush.msra.mxu0 %v984
    %1114 = vmatpush.msra.mxu0 %v980
    %1115 = vmatpush.msra.mxu0 %v976
    %1116 = vmatpush.msra.mxu0 %v972
    %1117 = vmatpush.msra.mxu0 %v968
    %1118 = vmatmul.f32.gmra.mxu0 %v1098
    %v1119 = vpop.f32.mrf.mxu0
    %v1120 = vadd.f32 0.0, %v1119
    %1121 = vdwg.mxu0
    %1122 = vmatpush.msra.mxu0 %v1092
    %1123 = vmatpush.msra.mxu0 %v1088
    %1124 = vmatpush.msra.mxu0 %v1084
    %1125 = vmatpush.msra.mxu0 %v1080
    %1126 = vmatpush.msra.mxu0 %v1076
    %1127 = vmatpush.msra.mxu0 %v1072
    %1128 = vmatpush.msra.mxu0 %v1068
    %1129 = vmatpush.msra.mxu0 %v1064
    %1130 = vmatpush.msra.mxu0 %v1060
    %1131 = vmatpush.msra.mxu0 %v1056
    %1132 = vmatpush.msra.mxu0 %v1052
    %1133 = vmatpush.msra.mxu0 %v1048
    %1134 = vmatpush.msra.mxu0 %v1044
    %1135 = vmatpush.msra.mxu0 %v1040
    %1136 = vmatpush.msra.mxu0 %v1036
    %1137 = vmatpush.msra.mxu0 %v1032
    %1138 = vmatmul.f32.gmra.mxu0 %v1099
    %v1139 = vpop.f32.mrf.mxu0
    %v1140 = vadd.f32 %v1120, %v1139
    %1141 = vdwg.mxu0
    %1142 = vmatpush.msra.mxu0 %v1029
    %1143 = vmatpush.msra.mxu0 %v1025
    %1144 = vmatpush.msra.mxu0 %v1021
    %1145 = vmatpush.msra.mxu0 %v1017
    %1146 = vmatpush.msra.mxu0 %v1013
    %1147 = vmatpush.msra.mxu0 %v1009
    %1148 = vmatpush.msra.mxu0 %v1005
    %1149 = vmatpush.msra.mxu0 %v1001
    %1150 = vmatpush.msra.mxu0 %v997
    %1151 = vmatpush.msra.mxu0 %v993
    %1152 = vmatpush.msra.mxu0 %v989
    %1153 = vmatpush.msra.mxu0 %v985
    %1154 = vmatpush.msra.mxu0 %v981
    %1155 = vmatpush.msra.mxu0 %v977
    %1156 = vmatpush.msra.mxu0 %v973
    %1157 = vmatpush.msra.mxu0 %v969
    %1158 = vmatmul.f32.gmra.mxu0 %v1098
    %v1159 = vpop.f32.mrf.mxu0
    %v1160 = vadd.f32 0.0, %v1159
    %1161 = vdwg.mxu0
    %1162 = vmatpush.msra.mxu0 %v1093
    %1163 = vmatpush.msra.mxu0 %v1089
    %1164 = vmatpush.msra.mxu0 %v1085
    %1165 = vmatpush.msra.mxu0 %v1081
    %1166 = vmatpush.msra.mxu0 %v1077
    %1167 = vmatpush.msra.mxu0 %v1073
    %1168 = vmatpush.msra.mxu0 %v1069
    %1169 = vmatpush.msra.mxu0 %v1065
    %1170 = vmatpush.msra.mxu0 %v1061
    %1171 = vmatpush.msra.mxu0 %v1057
    %1172 = vmatpush.msra.mxu0 %v1053
    %1173 = vmatpush.msra.mxu0 %v1049
    %1174 = vmatpush.msra.mxu0 %v1045
    %1175 = vmatpush.msra.mxu0 %v1041
    %1176 = vmatpush.msra.mxu0 %v1037
    %1177 = vmatpush.msra.mxu0 %v1033
    %1178 = vmatmul.f32.gmra.mxu0 %v1099
    %v1179 = vpop.f32.mrf.mxu0
    %v1180 = vadd.f32 %v1160, %v1179
    %1181 = vdwg.mxu0
    %1182 = vmatpush.msra.mxu0 %v1030
    %1183 = vmatpush.msra.mxu0 %v1026
    %1184 = vmatpush.msra.mxu0 %v1022
    %1185 = vmatpush.msra.mxu0 %v1018
    %1186 = vmatpush.msra.mxu0 %v1014
    %1187 = vmatpush.msra.mxu0 %v1010
    %1188 = vmatpush.msra.mxu0 %v1006
    %1189 = vmatpush.msra.mxu0 %v1002
    %1190 = vmatpush.msra.mxu0 %v998
    %1191 = vmatpush.msra.mxu0 %v994
    %1192 = vmatpush.msra.mxu0 %v990
    %1193 = vmatpush.msra.mxu0 %v986
    %1194 = vmatpush.msra.mxu0 %v982
    %1195 = vmatpush.msra.mxu0 %v978
    %1196 = vmatpush.msra.mxu0 %v974
    %1197 = vmatpush.msra.mxu0 %v970
    %1198 = vmatmul.f32.gmra.mxu0 %v1098
    %v1199 = vpop.f32.mrf.mxu0
    %v1200 = vadd.f32 0.0, %v1199
    %1201 = vdwg.mxu0
    %1202 = vmatpush.msra.mxu0 %v1094
    %1203 = vmatpush.msra.mxu0 %v1090
    %1204 = vmatpush.msra.mxu0 %v1086
    %1205 = vmatpush.msra.mxu0 %v1082
    %1206 = vmatpush.msra.mxu0 %v1078
    %1207 = vmatpush.msra.mxu0 %v1074
    %1208 = vmatpush.msra.mxu0 %v1070
    %1209 = vmatpush.msra.mxu0 %v1066
    %1210 = vmatpush.msra.mxu0 %v1062
    %1211 = vmatpush.msra.mxu0 %v1058
    %1212 = vmatpush.msra.mxu0 %v1054
    %1213 = vmatpush.msra.mxu0 %v1050
    %1214 = vmatpush.msra.mxu0 %v1046
    %1215 = vmatpush.msra.mxu0 %v1042
    %1216 = vmatpush.msra.mxu0 %v1038
    %1217 = vmatpush.msra.mxu0 %v1034
    %1218 = vmatmul.f32.gmra.mxu0 %v1099
    %v1219 = vpop.f32.mrf.mxu0
    %v1220 = vadd.f32 %v1200, %v1219
    %1221 = vdwg.mxu0
    %1222 = vmatpush.msra.mxu0 %v1031
    %1223 = vmatpush.msra.mxu0 %v1027
    %1224 = vmatpush.msra.mxu0 %v1023
    %1225 = vmatpush.msra.mxu0 %v1019
    %1226 = vmatpush.msra.mxu0 %v1015
    %1227 = vmatpush.msra.mxu0 %v1011
    %1228 = vmatpush.msra.mxu0 %v1007
    %1229 = vmatpush.msra.mxu0 %v1003
    %1230 = vmatpush.msra.mxu0 %v999
    %1231 = vmatpush.msra.mxu0 %v995
    %1232 = vmatpush.msra.mxu0 %v991
    %1233 = vmatpush.msra.mxu0 %v987
    %1234 = vmatpush.msra.mxu0 %v983
    %1235 = vmatpush.msra.mxu0 %v979
    %1236 = vmatpush.msra.mxu0 %v975
    %1237 = vmatpush.msra.mxu0 %v971
    %1238 = vmatmul.f32.gmra.mxu0 %v1098
    %v1239 = vpop.f32.mrf.mxu0
    %v1240 = vadd.f32 0.0, %v1239
    %1241 = vdwg.mxu0
    %1242 = vmatpush.msra.mxu0 %v1095
    %1243 = vmatpush.msra.mxu0 %v1091
    %1244 = vmatpush.msra.mxu0 %v1087
    %1245 = vmatpush.msra.mxu0 %v1083
    %1246 = vmatpush.msra.mxu0 %v1079
    %1247 = vmatpush.msra.mxu0 %v1075
    %1248 = vmatpush.msra.mxu0 %v1071
    %1249 = vmatpush.msra.mxu0 %v1067
    %1250 = vmatpush.msra.mxu0 %v1063
    %1251 = vmatpush.msra.mxu0 %v1059
    %1252 = vmatpush.msra.mxu0 %v1055
    %1253 = vmatpush.msra.mxu0 %v1051
    %1254 = vmatpush.msra.mxu0 %v1047
    %1255 = vmatpush.msra.mxu0 %v1043
    %1256 = vmatpush.msra.mxu0 %v1039
    %1257 = vmatpush.msra.mxu0 %v1035
    %1258 = vmatmul.f32.gmra.mxu0 %v1099
    %v1259 = vpop.f32.mrf.mxu0
    %v1260 = vadd.f32 %v1240, %v1259
    %1261 = vdwg.mxu0
    %v1266 = vrot.slane %v1180, 4
    %v1267 = vrot.slane %v1260, 4
    %v1268 = vsel %vm343, %v1140, %v1266
    %v1269 = vsel %vm343, %v1220, %v1267
    %1272 = vst [vmem:[#allocation7 + $0x30] sm:$0xff] %v1268
    %1273 = vst [vmem:[#allocation7 + $0x38] sm:$0xff] %v1269
    %v1274 = vld [vmem:[#allocation2 + $0x20] sm:$0xff]
    %s1275 = scalar_lea.vmem [#allocation5], 4096
    %v1276 = vld [vmem:[%s1275] sm:$0xff]
    %v1277 = vld [vmem:[%s1275 + $0x8] sm:$0xff]
    %v1278 = vld [vmem:[%s1275 + $0x10] sm:$0xff]
    %v1279 = vld [vmem:[%s1275 + $0x18] sm:$0xff]
    %v1280 = vld [vmem:[%s1275 + $0x20] sm:$0xff]
    %v1281 = vld [vmem:[%s1275 + $0x28] sm:$0xff]
    %v1282 = vld [vmem:[%s1275 + $0x30] sm:$0xff]
    %v1283 = vld [vmem:[%s1275 + $0x38] sm:$0xff]
    %v1284 = vld [vmem:[%s1275 + $0x40] sm:$0xff]
    %v1285 = vld [vmem:[%s1275 + $0x48] sm:$0xff]
    %v1286 = vld [vmem:[%s1275 + $0x50] sm:$0xff]
    %v1287 = vld [vmem:[%s1275 + $0x58] sm:$0xff]
    %v1288 = vld [vmem:[%s1275 + $0x60] sm:$0xff]
    %v1289 = vld [vmem:[%s1275 + $0x68] sm:$0xff]
    %v1290 = vld [vmem:[%s1275 + $0x70] sm:$0xff]
    %v1291 = vld [vmem:[%s1275 + $0x78] sm:$0xff]
    %v1292 = vld [vmem:[%s1275 + $0x80] sm:$0xff]
    %v1293 = vld [vmem:[%s1275 + $0x88] sm:$0xff]
    %v1294 = vld [vmem:[%s1275 + $0x90] sm:$0xff]
    %v1295 = vld [vmem:[%s1275 + $0x98] sm:$0xff]
    %v1296 = vld [vmem:[%s1275 + $0xa0] sm:$0xff]
    %v1297 = vld [vmem:[%s1275 + $0xa8] sm:$0xff]
    %v1298 = vld [vmem:[%s1275 + $0xb0] sm:$0xff]
    %v1299 = vld [vmem:[%s1275 + $0xb8] sm:$0xff]
    %v1300 = vld [vmem:[%s1275 + $0xc0] sm:$0xff]
    %v1301 = vld [vmem:[%s1275 + $0xc8] sm:$0xff]
    %v1302 = vld [vmem:[%s1275 + $0xd0] sm:$0xff]
    %v1303 = vld [vmem:[%s1275 + $0xd8] sm:$0xff]
    %v1304 = vld [vmem:[%s1275 + $0xe0] sm:$0xff]
    %v1305 = vld [vmem:[%s1275 + $0xe8] sm:$0xff]
    %v1306 = vld [vmem:[%s1275 + $0xf0] sm:$0xff]
    %v1307 = vld [vmem:[%s1275 + $0xf8] sm:$0xff]
    %v1308 = vld [vmem:[%s1275 + $0x100] sm:$0xff]
    %v1309 = vld [vmem:[%s1275 + $0x108] sm:$0xff]
    %v1310 = vld [vmem:[%s1275 + $0x110] sm:$0xff]
    %v1311 = vld [vmem:[%s1275 + $0x118] sm:$0xff]
    %v1312 = vld [vmem:[%s1275 + $0x120] sm:$0xff]
    %v1313 = vld [vmem:[%s1275 + $0x128] sm:$0xff]
    %v1314 = vld [vmem:[%s1275 + $0x130] sm:$0xff]
    %v1315 = vld [vmem:[%s1275 + $0x138] sm:$0xff]
    %v1316 = vld [vmem:[%s1275 + $0x140] sm:$0xff]
    %v1317 = vld [vmem:[%s1275 + $0x148] sm:$0xff]
    %v1318 = vld [vmem:[%s1275 + $0x150] sm:$0xff]
    %v1319 = vld [vmem:[%s1275 + $0x158] sm:$0xff]
    %v1320 = vld [vmem:[%s1275 + $0x160] sm:$0xff]
    %v1321 = vld [vmem:[%s1275 + $0x168] sm:$0xff]
    %v1322 = vld [vmem:[%s1275 + $0x170] sm:$0xff]
    %v1323 = vld [vmem:[%s1275 + $0x178] sm:$0xff]
    %v1324 = vld [vmem:[%s1275 + $0x180] sm:$0xff]
    %v1325 = vld [vmem:[%s1275 + $0x188] sm:$0xff]
    %v1326 = vld [vmem:[%s1275 + $0x190] sm:$0xff]
    %v1327 = vld [vmem:[%s1275 + $0x198] sm:$0xff]
    %v1328 = vld [vmem:[%s1275 + $0x1a0] sm:$0xff]
    %v1329 = vld [vmem:[%s1275 + $0x1a8] sm:$0xff]
    %v1330 = vld [vmem:[%s1275 + $0x1b0] sm:$0xff]
    %v1331 = vld [vmem:[%s1275 + $0x1b8] sm:$0xff]
    %v1332 = vld [vmem:[%s1275 + $0x1c0] sm:$0xff]
    %v1333 = vld [vmem:[%s1275 + $0x1c8] sm:$0xff]
    %v1334 = vld [vmem:[%s1275 + $0x1d0] sm:$0xff]
    %v1335 = vld [vmem:[%s1275 + $0x1d8] sm:$0xff]
    %v1336 = vld [vmem:[%s1275 + $0x1e0] sm:$0xff]
    %v1337 = vld [vmem:[%s1275 + $0x1e8] sm:$0xff]
    %v1338 = vld [vmem:[%s1275 + $0x1f0] sm:$0xff]
    %v1339 = vld [vmem:[%s1275 + $0x1f8] sm:$0xff]
    %v1340 = vld [vmem:[%s1275 + $0x200] sm:$0xff]
    %v1341 = vld [vmem:[%s1275 + $0x208] sm:$0xff]
    %v1342 = vld [vmem:[%s1275 + $0x210] sm:$0xff]
    %v1343 = vld [vmem:[%s1275 + $0x218] sm:$0xff]
    %v1344 = vld [vmem:[%s1275 + $0x220] sm:$0xff]
    %v1345 = vld [vmem:[%s1275 + $0x228] sm:$0xff]
    %v1346 = vld [vmem:[%s1275 + $0x230] sm:$0xff]
    %v1347 = vld [vmem:[%s1275 + $0x238] sm:$0xff]
    %v1348 = vld [vmem:[%s1275 + $0x240] sm:$0xff]
    %v1349 = vld [vmem:[%s1275 + $0x248] sm:$0xff]
    %v1350 = vld [vmem:[%s1275 + $0x250] sm:$0xff]
    %v1351 = vld [vmem:[%s1275 + $0x258] sm:$0xff]
    %v1352 = vld [vmem:[%s1275 + $0x260] sm:$0xff]
    %v1353 = vld [vmem:[%s1275 + $0x268] sm:$0xff]
    %v1354 = vld [vmem:[%s1275 + $0x270] sm:$0xff]
    %v1355 = vld [vmem:[%s1275 + $0x278] sm:$0xff]
    %v1356 = vld [vmem:[%s1275 + $0x280] sm:$0xff]
    %v1357 = vld [vmem:[%s1275 + $0x288] sm:$0xff]
    %v1358 = vld [vmem:[%s1275 + $0x290] sm:$0xff]
    %v1359 = vld [vmem:[%s1275 + $0x298] sm:$0xff]
    %v1360 = vld [vmem:[%s1275 + $0x2a0] sm:$0xff]
    %v1361 = vld [vmem:[%s1275 + $0x2a8] sm:$0xff]
    %v1362 = vld [vmem:[%s1275 + $0x2b0] sm:$0xff]
    %v1363 = vld [vmem:[%s1275 + $0x2b8] sm:$0xff]
    %v1364 = vld [vmem:[%s1275 + $0x2c0] sm:$0xff]
    %v1365 = vld [vmem:[%s1275 + $0x2c8] sm:$0xff]
    %v1366 = vld [vmem:[%s1275 + $0x2d0] sm:$0xff]
    %v1367 = vld [vmem:[%s1275 + $0x2d8] sm:$0xff]
    %v1368 = vld [vmem:[%s1275 + $0x2e0] sm:$0xff]
    %v1369 = vld [vmem:[%s1275 + $0x2e8] sm:$0xff]
    %v1370 = vld [vmem:[%s1275 + $0x2f0] sm:$0xff]
    %v1371 = vld [vmem:[%s1275 + $0x2f8] sm:$0xff]
    %v1372 = vld [vmem:[%s1275 + $0x300] sm:$0xff]
    %v1373 = vld [vmem:[%s1275 + $0x308] sm:$0xff]
    %v1374 = vld [vmem:[%s1275 + $0x310] sm:$0xff]
    %v1375 = vld [vmem:[%s1275 + $0x318] sm:$0xff]
    %v1376 = vld [vmem:[%s1275 + $0x320] sm:$0xff]
    %v1377 = vld [vmem:[%s1275 + $0x328] sm:$0xff]
    %v1378 = vld [vmem:[%s1275 + $0x330] sm:$0xff]
    %v1379 = vld [vmem:[%s1275 + $0x338] sm:$0xff]
    %v1380 = vld [vmem:[%s1275 + $0x340] sm:$0xff]
    %v1381 = vld [vmem:[%s1275 + $0x348] sm:$0xff]
    %v1382 = vld [vmem:[%s1275 + $0x350] sm:$0xff]
    %v1383 = vld [vmem:[%s1275 + $0x358] sm:$0xff]
    %v1384 = vld [vmem:[%s1275 + $0x360] sm:$0xff]
    %v1385 = vld [vmem:[%s1275 + $0x368] sm:$0xff]
    %v1386 = vld [vmem:[%s1275 + $0x370] sm:$0xff]
    %v1387 = vld [vmem:[%s1275 + $0x378] sm:$0xff]
    %v1388 = vld [vmem:[%s1275 + $0x380] sm:$0xff]
    %v1389 = vld [vmem:[%s1275 + $0x388] sm:$0xff]
    %v1390 = vld [vmem:[%s1275 + $0x390] sm:$0xff]
    %v1391 = vld [vmem:[%s1275 + $0x398] sm:$0xff]
    %v1392 = vld [vmem:[%s1275 + $0x3a0] sm:$0xff]
    %v1393 = vld [vmem:[%s1275 + $0x3a8] sm:$0xff]
    %v1394 = vld [vmem:[%s1275 + $0x3b0] sm:$0xff]
    %v1395 = vld [vmem:[%s1275 + $0x3b8] sm:$0xff]
    %v1396 = vld [vmem:[%s1275 + $0x3c0] sm:$0xff]
    %v1397 = vld [vmem:[%s1275 + $0x3c8] sm:$0xff]
    %v1398 = vld [vmem:[%s1275 + $0x3d0] sm:$0xff]
    %v1399 = vld [vmem:[%s1275 + $0x3d8] sm:$0xff]
    %v1400 = vld [vmem:[%s1275 + $0x3e0] sm:$0xff]
    %v1401 = vld [vmem:[%s1275 + $0x3e8] sm:$0xff]
    %v1402 = vld [vmem:[%s1275 + $0x3f0] sm:$0xff]
    %v1403 = vld [vmem:[%s1275 + $0x3f8] sm:$0xff]
    %1405 = vst [vmem:[#allocation1] ss:$2 sm:$0xff] %v1274
    %v1406 = vld.sshfl [vmem:[#allocation1] sm:$0xff pattern:$0x75316420]
    %v1407 = vld.sshfl [vmem:[#allocation1 + $0x8] sm:$0xff pattern:$0x75316420]
    %1410 = vmatpush.msra.mxu0 %v1336
    %1411 = vmatpush.msra.mxu0 %v1332
    %1412 = vmatpush.msra.mxu0 %v1328
    %1413 = vmatpush.msra.mxu0 %v1324
    %1414 = vmatpush.msra.mxu0 %v1320
    %1415 = vmatpush.msra.mxu0 %v1316
    %1416 = vmatpush.msra.mxu0 %v1312
    %1417 = vmatpush.msra.mxu0 %v1308
    %1418 = vmatpush.msra.mxu0 %v1304
    %1419 = vmatpush.msra.mxu0 %v1300
    %1420 = vmatpush.msra.mxu0 %v1296
    %1421 = vmatpush.msra.mxu0 %v1292
    %1422 = vmatpush.msra.mxu0 %v1288
    %1423 = vmatpush.msra.mxu0 %v1284
    %1424 = vmatpush.msra.mxu0 %v1280
    %1425 = vmatpush.msra.mxu0 %v1276
    %1426 = vmatmul.f32.gmra.mxu0 %v1406
    %v1427 = vpop.f32.mrf.mxu0
    %v1428 = vadd.f32 0.0, %v1427
    %1429 = vdwg.mxu0
    %1430 = vmatpush.msra.mxu0 %v1400
    %1431 = vmatpush.msra.mxu0 %v1396
    %1432 = vmatpush.msra.mxu0 %v1392
    %1433 = vmatpush.msra.mxu0 %v1388
    %1434 = vmatpush.msra.mxu0 %v1384
    %1435 = vmatpush.msra.mxu0 %v1380
    %1436 = vmatpush.msra.mxu0 %v1376
    %1437 = vmatpush.msra.mxu0 %v1372
    %1438 = vmatpush.msra.mxu0 %v1368
    %1439 = vmatpush.msra.mxu0 %v1364
    %1440 = vmatpush.msra.mxu0 %v1360
    %1441 = vmatpush.msra.mxu0 %v1356
    %1442 = vmatpush.msra.mxu0 %v1352
    %1443 = vmatpush.msra.mxu0 %v1348
    %1444 = vmatpush.msra.mxu0 %v1344
    %1445 = vmatpush.msra.mxu0 %v1340
    %1446 = vmatmul.f32.gmra.mxu0 %v1407
    %v1447 = vpop.f32.mrf.mxu0
    %v1448 = vadd.f32 %v1428, %v1447
    %1449 = vdwg.mxu0
    %1450 = vmatpush.msra.mxu0 %v1337
    %1451 = vmatpush.msra.mxu0 %v1333
    %1452 = vmatpush.msra.mxu0 %v1329
    %1453 = vmatpush.msra.mxu0 %v1325
    %1454 = vmatpush.msra.mxu0 %v1321
    %1455 = vmatpush.msra.mxu0 %v1317
    %1456 = vmatpush.msra.mxu0 %v1313
    %1457 = vmatpush.msra.mxu0 %v1309
    %1458 = vmatpush.msra.mxu0 %v1305
    %1459 = vmatpush.msra.mxu0 %v1301
    %1460 = vmatpush.msra.mxu0 %v1297
    %1461 = vmatpush.msra.mxu0 %v1293
    %1462 = vmatpush.msra.mxu0 %v1289
    %1463 = vmatpush.msra.mxu0 %v1285
    %1464 = vmatpush.msra.mxu0 %v1281
    %1465 = vmatpush.msra.mxu0 %v1277
    %1466 = vmatmul.f32.gmra.mxu0 %v1406
    %v1467 = vpop.f32.mrf.mxu0
    %v1468 = vadd.f32 0.0, %v1467
    %1469 = vdwg.mxu0
    %1470 = vmatpush.msra.mxu0 %v1401
    %1471 = vmatpush.msra.mxu0 %v1397
    %1472 = vmatpush.msra.mxu0 %v1393
    %1473 = vmatpush.msra.mxu0 %v1389
    %1474 = vmatpush.msra.mxu0 %v1385
    %1475 = vmatpush.msra.mxu0 %v1381
    %1476 = vmatpush.msra.mxu0 %v1377
    %1477 = vmatpush.msra.mxu0 %v1373
    %1478 = vmatpush.msra.mxu0 %v1369
    %1479 = vmatpush.msra.mxu0 %v1365
    %1480 = vmatpush.msra.mxu0 %v1361
    %1481 = vmatpush.msra.mxu0 %v1357
    %1482 = vmatpush.msra.mxu0 %v1353
    %1483 = vmatpush.msra.mxu0 %v1349
    %1484 = vmatpush.msra.mxu0 %v1345
    %1485 = vmatpush.msra.mxu0 %v1341
    %1486 = vmatmul.f32.gmra.mxu0 %v1407
    %v1487 = vpop.f32.mrf.mxu0
    %v1488 = vadd.f32 %v1468, %v1487
    %1489 = vdwg.mxu0
    %1490 = vmatpush.msra.mxu0 %v1338
    %1491 = vmatpush.msra.mxu0 %v1334
    %1492 = vmatpush.msra.mxu0 %v1330
    %1493 = vmatpush.msra.mxu0 %v1326
    %1494 = vmatpush.msra.mxu0 %v1322
    %1495 = vmatpush.msra.mxu0 %v1318
    %1496 = vmatpush.msra.mxu0 %v1314
    %1497 = vmatpush.msra.mxu0 %v1310
    %1498 = vmatpush.msra.mxu0 %v1306
    %1499 = vmatpush.msra.mxu0 %v1302
    %1500 = vmatpush.msra.mxu0 %v1298
    %1501 = vmatpush.msra.mxu0 %v1294
    %1502 = vmatpush.msra.mxu0 %v1290
    %1503 = vmatpush.msra.mxu0 %v1286
    %1504 = vmatpush.msra.mxu0 %v1282
    %1505 = vmatpush.msra.mxu0 %v1278
    %1506 = vmatmul.f32.gmra.mxu0 %v1406
    %v1507 = vpop.f32.mrf.mxu0
    %v1508 = vadd.f32 0.0, %v1507
    %1509 = vdwg.mxu0
    %1510 = vmatpush.msra.mxu0 %v1402
    %1511 = vmatpush.msra.mxu0 %v1398
    %1512 = vmatpush.msra.mxu0 %v1394
    %1513 = vmatpush.msra.mxu0 %v1390
    %1514 = vmatpush.msra.mxu0 %v1386
    %1515 = vmatpush.msra.mxu0 %v1382
    %1516 = vmatpush.msra.mxu0 %v1378
    %1517 = vmatpush.msra.mxu0 %v1374
    %1518 = vmatpush.msra.mxu0 %v1370
    %1519 = vmatpush.msra.mxu0 %v1366
    %1520 = vmatpush.msra.mxu0 %v1362
    %1521 = vmatpush.msra.mxu0 %v1358
    %1522 = vmatpush.msra.mxu0 %v1354
    %1523 = vmatpush.msra.mxu0 %v1350
    %1524 = vmatpush.msra.mxu0 %v1346
    %1525 = vmatpush.msra.mxu0 %v1342
    %1526 = vmatmul.f32.gmra.mxu0 %v1407
    %v1527 = vpop.f32.mrf.mxu0
    %v1528 = vadd.f32 %v1508, %v1527
    %1529 = vdwg.mxu0
    %1530 = vmatpush.msra.mxu0 %v1339
    %1531 = vmatpush.msra.mxu0 %v1335
    %1532 = vmatpush.msra.mxu0 %v1331
    %1533 = vmatpush.msra.mxu0 %v1327
    %1534 = vmatpush.msra.mxu0 %v1323
    %1535 = vmatpush.msra.mxu0 %v1319
    %1536 = vmatpush.msra.mxu0 %v1315
    %1537 = vmatpush.msra.mxu0 %v1311
    %1538 = vmatpush.msra.mxu0 %v1307
    %1539 = vmatpush.msra.mxu0 %v1303
    %1540 = vmatpush.msra.mxu0 %v1299
    %1541 = vmatpush.msra.mxu0 %v1295
    %1542 = vmatpush.msra.mxu0 %v1291
    %1543 = vmatpush.msra.mxu0 %v1287
    %1544 = vmatpush.msra.mxu0 %v1283
    %1545 = vmatpush.msra.mxu0 %v1279
    %1546 = vmatmul.f32.gmra.mxu0 %v1406
    %v1547 = vpop.f32.mrf.mxu0
    %v1548 = vadd.f32 0.0, %v1547
    %1549 = vdwg.mxu0
    %1550 = vmatpush.msra.mxu0 %v1403
    %1551 = vmatpush.msra.mxu0 %v1399
    %1552 = vmatpush.msra.mxu0 %v1395
    %1553 = vmatpush.msra.mxu0 %v1391
    %1554 = vmatpush.msra.mxu0 %v1387
    %1555 = vmatpush.msra.mxu0 %v1383
    %1556 = vmatpush.msra.mxu0 %v1379
    %1557 = vmatpush.msra.mxu0 %v1375
    %1558 = vmatpush.msra.mxu0 %v1371
    %1559 = vmatpush.msra.mxu0 %v1367
    %1560 = vmatpush.msra.mxu0 %v1363
    %1561 = vmatpush.msra.mxu0 %v1359
    %1562 = vmatpush.msra.mxu0 %v1355
    %1563 = vmatpush.msra.mxu0 %v1351
    %1564 = vmatpush.msra.mxu0 %v1347
    %1565 = vmatpush.msra.mxu0 %v1343
    %1566 = vmatmul.f32.gmra.mxu0 %v1407
    %v1567 = vpop.f32.mrf.mxu0
    %v1568 = vadd.f32 %v1548, %v1567
    %1569 = vdwg.mxu0
    %v1574 = vrot.slane %v1488, 4
    %v1575 = vrot.slane %v1568, 4
    %v1576 = vsel %vm343, %v1448, %v1574
    %v1577 = vsel %vm343, %v1528, %v1575
    %1580 = vst [vmem:[#allocation7 + $0x40] sm:$0xff] %v1576
    %1581 = vst [vmem:[#allocation7 + $0x48] sm:$0xff] %v1577
    %v1582 = vld [vmem:[#allocation2 + $0x28] sm:$0xff]
    %s1583 = scalar_lea.vmem [#allocation5], 5120
    %v1584 = vld [vmem:[%s1583] sm:$0xff]
    %v1585 = vld [vmem:[%s1583 + $0x8] sm:$0xff]
    %v1586 = vld [vmem:[%s1583 + $0x10] sm:$0xff]
    %v1587 = vld [vmem:[%s1583 + $0x18] sm:$0xff]
    %v1588 = vld [vmem:[%s1583 + $0x20] sm:$0xff]
    %v1589 = vld [vmem:[%s1583 + $0x28] sm:$0xff]
    %v1590 = vld [vmem:[%s1583 + $0x30] sm:$0xff]
    %v1591 = vld [vmem:[%s1583 + $0x38] sm:$0xff]
    %v1592 = vld [vmem:[%s1583 + $0x40] sm:$0xff]
    %v1593 = vld [vmem:[%s1583 + $0x48] sm:$0xff]
    %v1594 = vld [vmem:[%s1583 + $0x50] sm:$0xff]
    %v1595 = vld [vmem:[%s1583 + $0x58] sm:$0xff]
    %v1596 = vld [vmem:[%s1583 + $0x60] sm:$0xff]
    %v1597 = vld [vmem:[%s1583 + $0x68] sm:$0xff]
    %v1598 = vld [vmem:[%s1583 + $0x70] sm:$0xff]
    %v1599 = vld [vmem:[%s1583 + $0x78] sm:$0xff]
    %v1600 = vld [vmem:[%s1583 + $0x80] sm:$0xff]
    %v1601 = vld [vmem:[%s1583 + $0x88] sm:$0xff]
    %v1602 = vld [vmem:[%s1583 + $0x90] sm:$0xff]
    %v1603 = vld [vmem:[%s1583 + $0x98] sm:$0xff]
    %v1604 = vld [vmem:[%s1583 + $0xa0] sm:$0xff]
    %v1605 = vld [vmem:[%s1583 + $0xa8] sm:$0xff]
    %v1606 = vld [vmem:[%s1583 + $0xb0] sm:$0xff]
    %v1607 = vld [vmem:[%s1583 + $0xb8] sm:$0xff]
    %v1608 = vld [vmem:[%s1583 + $0xc0] sm:$0xff]
    %v1609 = vld [vmem:[%s1583 + $0xc8] sm:$0xff]
    %v1610 = vld [vmem:[%s1583 + $0xd0] sm:$0xff]
    %v1611 = vld [vmem:[%s1583 + $0xd8] sm:$0xff]
    %v1612 = vld [vmem:[%s1583 + $0xe0] sm:$0xff]
    %v1613 = vld [vmem:[%s1583 + $0xe8] sm:$0xff]
    %v1614 = vld [vmem:[%s1583 + $0xf0] sm:$0xff]
    %v1615 = vld [vmem:[%s1583 + $0xf8] sm:$0xff]
    %v1616 = vld [vmem:[%s1583 + $0x100] sm:$0xff]
    %v1617 = vld [vmem:[%s1583 + $0x108] sm:$0xff]
    %v1618 = vld [vmem:[%s1583 + $0x110] sm:$0xff]
    %v1619 = vld [vmem:[%s1583 + $0x118] sm:$0xff]
    %v1620 = vld [vmem:[%s1583 + $0x120] sm:$0xff]
    %v1621 = vld [vmem:[%s1583 + $0x128] sm:$0xff]
    %v1622 = vld [vmem:[%s1583 + $0x130] sm:$0xff]
    %v1623 = vld [vmem:[%s1583 + $0x138] sm:$0xff]
    %v1624 = vld [vmem:[%s1583 + $0x140] sm:$0xff]
    %v1625 = vld [vmem:[%s1583 + $0x148] sm:$0xff]
    %v1626 = vld [vmem:[%s1583 + $0x150] sm:$0xff]
    %v1627 = vld [vmem:[%s1583 + $0x158] sm:$0xff]
    %v1628 = vld [vmem:[%s1583 + $0x160] sm:$0xff]
    %v1629 = vld [vmem:[%s1583 + $0x168] sm:$0xff]
    %v1630 = vld [vmem:[%s1583 + $0x170] sm:$0xff]
    %v1631 = vld [vmem:[%s1583 + $0x178] sm:$0xff]
    %v1632 = vld [vmem:[%s1583 + $0x180] sm:$0xff]
    %v1633 = vld [vmem:[%s1583 + $0x188] sm:$0xff]
    %v1634 = vld [vmem:[%s1583 + $0x190] sm:$0xff]
    %v1635 = vld [vmem:[%s1583 + $0x198] sm:$0xff]
    %v1636 = vld [vmem:[%s1583 + $0x1a0] sm:$0xff]
    %v1637 = vld [vmem:[%s1583 + $0x1a8] sm:$0xff]
    %v1638 = vld [vmem:[%s1583 + $0x1b0] sm:$0xff]
    %v1639 = vld [vmem:[%s1583 + $0x1b8] sm:$0xff]
    %v1640 = vld [vmem:[%s1583 + $0x1c0] sm:$0xff]
    %v1641 = vld [vmem:[%s1583 + $0x1c8] sm:$0xff]
    %v1642 = vld [vmem:[%s1583 + $0x1d0] sm:$0xff]
    %v1643 = vld [vmem:[%s1583 + $0x1d8] sm:$0xff]
    %v1644 = vld [vmem:[%s1583 + $0x1e0] sm:$0xff]
    %v1645 = vld [vmem:[%s1583 + $0x1e8] sm:$0xff]
    %v1646 = vld [vmem:[%s1583 + $0x1f0] sm:$0xff]
    %v1647 = vld [vmem:[%s1583 + $0x1f8] sm:$0xff]
    %v1648 = vld [vmem:[%s1583 + $0x200] sm:$0xff]
    %v1649 = vld [vmem:[%s1583 + $0x208] sm:$0xff]
    %v1650 = vld [vmem:[%s1583 + $0x210] sm:$0xff]
    %v1651 = vld [vmem:[%s1583 + $0x218] sm:$0xff]
    %v1652 = vld [vmem:[%s1583 + $0x220] sm:$0xff]
    %v1653 = vld [vmem:[%s1583 + $0x228] sm:$0xff]
    %v1654 = vld [vmem:[%s1583 + $0x230] sm:$0xff]
    %v1655 = vld [vmem:[%s1583 + $0x238] sm:$0xff]
    %v1656 = vld [vmem:[%s1583 + $0x240] sm:$0xff]
    %v1657 = vld [vmem:[%s1583 + $0x248] sm:$0xff]
    %v1658 = vld [vmem:[%s1583 + $0x250] sm:$0xff]
    %v1659 = vld [vmem:[%s1583 + $0x258] sm:$0xff]
    %v1660 = vld [vmem:[%s1583 + $0x260] sm:$0xff]
    %v1661 = vld [vmem:[%s1583 + $0x268] sm:$0xff]
    %v1662 = vld [vmem:[%s1583 + $0x270] sm:$0xff]
    %v1663 = vld [vmem:[%s1583 + $0x278] sm:$0xff]
    %v1664 = vld [vmem:[%s1583 + $0x280] sm:$0xff]
    %v1665 = vld [vmem:[%s1583 + $0x288] sm:$0xff]
    %v1666 = vld [vmem:[%s1583 + $0x290] sm:$0xff]
    %v1667 = vld [vmem:[%s1583 + $0x298] sm:$0xff]
    %v1668 = vld [vmem:[%s1583 + $0x2a0] sm:$0xff]
    %v1669 = vld [vmem:[%s1583 + $0x2a8] sm:$0xff]
    %v1670 = vld [vmem:[%s1583 + $0x2b0] sm:$0xff]
    %v1671 = vld [vmem:[%s1583 + $0x2b8] sm:$0xff]
    %v1672 = vld [vmem:[%s1583 + $0x2c0] sm:$0xff]
    %v1673 = vld [vmem:[%s1583 + $0x2c8] sm:$0xff]
    %v1674 = vld [vmem:[%s1583 + $0x2d0] sm:$0xff]
    %v1675 = vld [vmem:[%s1583 + $0x2d8] sm:$0xff]
    %v1676 = vld [vmem:[%s1583 + $0x2e0] sm:$0xff]
    %v1677 = vld [vmem:[%s1583 + $0x2e8] sm:$0xff]
    %v1678 = vld [vmem:[%s1583 + $0x2f0] sm:$0xff]
    %v1679 = vld [vmem:[%s1583 + $0x2f8] sm:$0xff]
    %v1680 = vld [vmem:[%s1583 + $0x300] sm:$0xff]
    %v1681 = vld [vmem:[%s1583 + $0x308] sm:$0xff]
    %v1682 = vld [vmem:[%s1583 + $0x310] sm:$0xff]
    %v1683 = vld [vmem:[%s1583 + $0x318] sm:$0xff]
    %v1684 = vld [vmem:[%s1583 + $0x320] sm:$0xff]
    %v1685 = vld [vmem:[%s1583 + $0x328] sm:$0xff]
    %v1686 = vld [vmem:[%s1583 + $0x330] sm:$0xff]
    %v1687 = vld [vmem:[%s1583 + $0x338] sm:$0xff]
    %v1688 = vld [vmem:[%s1583 + $0x340] sm:$0xff]
    %v1689 = vld [vmem:[%s1583 + $0x348] sm:$0xff]
    %v1690 = vld [vmem:[%s1583 + $0x350] sm:$0xff]
    %v1691 = vld [vmem:[%s1583 + $0x358] sm:$0xff]
    %v1692 = vld [vmem:[%s1583 + $0x360] sm:$0xff]
    %v1693 = vld [vmem:[%s1583 + $0x368] sm:$0xff]
    %v1694 = vld [vmem:[%s1583 + $0x370] sm:$0xff]
    %v1695 = vld [vmem:[%s1583 + $0x378] sm:$0xff]
    %v1696 = vld [vmem:[%s1583 + $0x380] sm:$0xff]
    %v1697 = vld [vmem:[%s1583 + $0x388] sm:$0xff]
    %v1698 = vld [vmem:[%s1583 + $0x390] sm:$0xff]
    %v1699 = vld [vmem:[%s1583 + $0x398] sm:$0xff]
    %v1700 = vld [vmem:[%s1583 + $0x3a0] sm:$0xff]
    %v1701 = vld [vmem:[%s1583 + $0x3a8] sm:$0xff]
    %v1702 = vld [vmem:[%s1583 + $0x3b0] sm:$0xff]
    %v1703 = vld [vmem:[%s1583 + $0x3b8] sm:$0xff]
    %v1704 = vld [vmem:[%s1583 + $0x3c0] sm:$0xff]
    %v1705 = vld [vmem:[%s1583 + $0x3c8] sm:$0xff]
    %v1706 = vld [vmem:[%s1583 + $0x3d0] sm:$0xff]
    %v1707 = vld [vmem:[%s1583 + $0x3d8] sm:$0xff]
    %v1708 = vld [vmem:[%s1583 + $0x3e0] sm:$0xff]
    %v1709 = vld [vmem:[%s1583 + $0x3e8] sm:$0xff]
    %v1710 = vld [vmem:[%s1583 + $0x3f0] sm:$0xff]
    %v1711 = vld [vmem:[%s1583 + $0x3f8] sm:$0xff]
    %1713 = vst [vmem:[#allocation1] ss:$2 sm:$0xff] %v1582
    %v1714 = vld.sshfl [vmem:[#allocation1] sm:$0xff pattern:$0x75316420]
    %v1715 = vld.sshfl [vmem:[#allocation1 + $0x8] sm:$0xff pattern:$0x75316420]
    %1718 = vmatpush.msra.mxu0 %v1644
    %1719 = vmatpush.msra.mxu0 %v1640
    %1720 = vmatpush.msra.mxu0 %v1636
    %1721 = vmatpush.msra.mxu0 %v1632
    %1722 = vmatpush.msra.mxu0 %v1628
    %1723 = vmatpush.msra.mxu0 %v1624
    %1724 = vmatpush.msra.mxu0 %v1620
    %1725 = vmatpush.msra.mxu0 %v1616
    %1726 = vmatpush.msra.mxu0 %v1612
    %1727 = vmatpush.msra.mxu0 %v1608
    %1728 = vmatpush.msra.mxu0 %v1604
    %1729 = vmatpush.msra.mxu0 %v1600
    %1730 = vmatpush.msra.mxu0 %v1596
    %1731 = vmatpush.msra.mxu0 %v1592
    %1732 = vmatpush.msra.mxu0 %v1588
    %1733 = vmatpush.msra.mxu0 %v1584
    %1734 = vmatmul.f32.gmra.mxu0 %v1714
    %v1735 = vpop.f32.mrf.mxu0
    %v1736 = vadd.f32 0.0, %v1735
    %1737 = vdwg.mxu0
    %1738 = vmatpush.msra.mxu0 %v1708
    %1739 = vmatpush.msra.mxu0 %v1704
    %1740 = vmatpush.msra.mxu0 %v1700
    %1741 = vmatpush.msra.mxu0 %v1696
    %1742 = vmatpush.msra.mxu0 %v1692
    %1743 = vmatpush.msra.mxu0 %v1688
    %1744 = vmatpush.msra.mxu0 %v1684
    %1745 = vmatpush.msra.mxu0 %v1680
    %1746 = vmatpush.msra.mxu0 %v1676
    %1747 = vmatpush.msra.mxu0 %v1672
    %1748 = vmatpush.msra.mxu0 %v1668
    %1749 = vmatpush.msra.mxu0 %v1664
    %1750 = vmatpush.msra.mxu0 %v1660
    %1751 = vmatpush.msra.mxu0 %v1656
    %1752 = vmatpush.msra.mxu0 %v1652
    %1753 = vmatpush.msra.mxu0 %v1648
    %1754 = vmatmul.f32.gmra.mxu0 %v1715
    %v1755 = vpop.f32.mrf.mxu0
    %v1756 = vadd.f32 %v1736, %v1755
    %1757 = vdwg.mxu0
    %1758 = vmatpush.msra.mxu0 %v1645
    %1759 = vmatpush.msra.mxu0 %v1641
    %1760 = vmatpush.msra.mxu0 %v1637
    %1761 = vmatpush.msra.mxu0 %v1633
    %1762 = vmatpush.msra.mxu0 %v1629
    %1763 = vmatpush.msra.mxu0 %v1625
    %1764 = vmatpush.msra.mxu0 %v1621
    %1765 = vmatpush.msra.mxu0 %v1617
    %1766 = vmatpush.msra.mxu0 %v1613
    %1767 = vmatpush.msra.mxu0 %v1609
    %1768 = vmatpush.msra.mxu0 %v1605
    %1769 = vmatpush.msra.mxu0 %v1601
    %1770 = vmatpush.msra.mxu0 %v1597
    %1771 = vmatpush.msra.mxu0 %v1593
    %1772 = vmatpush.msra.mxu0 %v1589
    %1773 = vmatpush.msra.mxu0 %v1585
    %1774 = vmatmul.f32.gmra.mxu0 %v1714
    %v1775 = vpop.f32.mrf.mxu0
    %v1776 = vadd.f32 0.0, %v1775
    %1777 = vdwg.mxu0
    %1778 = vmatpush.msra.mxu0 %v1709
    %1779 = vmatpush.msra.mxu0 %v1705
    %1780 = vmatpush.msra.mxu0 %v1701
    %1781 = vmatpush.msra.mxu0 %v1697
    %1782 = vmatpush.msra.mxu0 %v1693
    %1783 = vmatpush.msra.mxu0 %v1689
    %1784 = vmatpush.msra.mxu0 %v1685
    %1785 = vmatpush.msra.mxu0 %v1681
    %1786 = vmatpush.msra.mxu0 %v1677
    %1787 = vmatpush.msra.mxu0 %v1673
    %1788 = vmatpush.msra.mxu0 %v1669
    %1789 = vmatpush.msra.mxu0 %v1665
    %1790 = vmatpush.msra.mxu0 %v1661
    %1791 = vmatpush.msra.mxu0 %v1657
    %1792 = vmatpush.msra.mxu0 %v1653
    %1793 = vmatpush.msra.mxu0 %v1649
    %1794 = vmatmul.f32.gmra.mxu0 %v1715
    %v1795 = vpop.f32.mrf.mxu0
    %v1796 = vadd.f32 %v1776, %v1795
    %1797 = vdwg.mxu0
    %1798 = vmatpush.msra.mxu0 %v1646
    %1799 = vmatpush.msra.mxu0 %v1642
    %1800 = vmatpush.msra.mxu0 %v1638
    %1801 = vmatpush.msra.mxu0 %v1634
    %1802 = vmatpush.msra.mxu0 %v1630
    %1803 = vmatpush.msra.mxu0 %v1626
    %1804 = vmatpush.msra.mxu0 %v1622
    %1805 = vmatpush.msra.mxu0 %v1618
    %1806 = vmatpush.msra.mxu0 %v1614
    %1807 = vmatpush.msra.mxu0 %v1610
    %1808 = vmatpush.msra.mxu0 %v1606
    %1809 = vmatpush.msra.mxu0 %v1602
    %1810 = vmatpush.msra.mxu0 %v1598
    %1811 = vmatpush.msra.mxu0 %v1594
    %1812 = vmatpush.msra.mxu0 %v1590
    %1813 = vmatpush.msra.mxu0 %v1586
    %1814 = vmatmul.f32.gmra.mxu0 %v1714
    %v1815 = vpop.f32.mrf.mxu0
    %v1816 = vadd.f32 0.0, %v1815
    %1817 = vdwg.mxu0
    %1818 = vmatpush.msra.mxu0 %v1710
    %1819 = vmatpush.msra.mxu0 %v1706
    %1820 = vmatpush.msra.mxu0 %v1702
    %1821 = vmatpush.msra.mxu0 %v1698
    %1822 = vmatpush.msra.mxu0 %v1694
    %1823 = vmatpush.msra.mxu0 %v1690
    %1824 = vmatpush.msra.mxu0 %v1686
    %1825 = vmatpush.msra.mxu0 %v1682
    %1826 = vmatpush.msra.mxu0 %v1678
    %1827 = vmatpush.msra.mxu0 %v1674
    %1828 = vmatpush.msra.mxu0 %v1670
    %1829 = vmatpush.msra.mxu0 %v1666
    %1830 = vmatpush.msra.mxu0 %v1662
    %1831 = vmatpush.msra.mxu0 %v1658
    %1832 = vmatpush.msra.mxu0 %v1654
    %1833 = vmatpush.msra.mxu0 %v1650
    %1834 = vmatmul.f32.gmra.mxu0 %v1715
    %v1835 = vpop.f32.mrf.mxu0
    %v1836 = vadd.f32 %v1816, %v1835
    %1837 = vdwg.mxu0
    %1838 = vmatpush.msra.mxu0 %v1647
    %1839 = vmatpush.msra.mxu0 %v1643
    %1840 = vmatpush.msra.mxu0 %v1639
    %1841 = vmatpush.msra.mxu0 %v1635
    %1842 = vmatpush.msra.mxu0 %v1631
    %1843 = vmatpush.msra.mxu0 %v1627
    %1844 = vmatpush.msra.mxu0 %v1623
    %1845 = vmatpush.msra.mxu0 %v1619
    %1846 = vmatpush.msra.mxu0 %v1615
    %1847 = vmatpush.msra.mxu0 %v1611
    %1848 = vmatpush.msra.mxu0 %v1607
    %1849 = vmatpush.msra.mxu0 %v1603
    %1850 = vmatpush.msra.mxu0 %v1599
    %1851 = vmatpush.msra.mxu0 %v1595
    %1852 = vmatpush.msra.mxu0 %v1591
    %1853 = vmatpush.msra.mxu0 %v1587
    %1854 = vmatmul.f32.gmra.mxu0 %v1714
    %v1855 = vpop.f32.mrf.mxu0
    %v1856 = vadd.f32 0.0, %v1855
    %1857 = vdwg.mxu0
    %1858 = vmatpush.msra.mxu0 %v1711
    %1859 = vmatpush.msra.mxu0 %v1707
    %1860 = vmatpush.msra.mxu0 %v1703
    %1861 = vmatpush.msra.mxu0 %v1699
    %1862 = vmatpush.msra.mxu0 %v1695
    %1863 = vmatpush.msra.mxu0 %v1691
    %1864 = vmatpush.msra.mxu0 %v1687
    %1865 = vmatpush.msra.mxu0 %v1683
    %1866 = vmatpush.msra.mxu0 %v1679
    %1867 = vmatpush.msra.mxu0 %v1675
    %1868 = vmatpush.msra.mxu0 %v1671
    %1869 = vmatpush.msra.mxu0 %v1667
    %1870 = vmatpush.msra.mxu0 %v1663
    %1871 = vmatpush.msra.mxu0 %v1659
    %1872 = vmatpush.msra.mxu0 %v1655
    %1873 = vmatpush.msra.mxu0 %v1651
    %1874 = vmatmul.f32.gmra.mxu0 %v1715
    %v1875 = vpop.f32.mrf.mxu0
    %v1876 = vadd.f32 %v1856, %v1875
    %1877 = vdwg.mxu0
    %v1882 = vrot.slane %v1796, 4
    %v1883 = vrot.slane %v1876, 4
    %v1884 = vsel %vm343, %v1756, %v1882
    %v1885 = vsel %vm343, %v1836, %v1883
    %1888 = vst [vmem:[#allocation7 + $0x50] sm:$0xff] %v1884
    %1889 = vst [vmem:[#allocation7 + $0x58] sm:$0xff] %v1885
    %v1890 = vld [vmem:[#allocation2 + $0x30] sm:$0xff]
    %s1891 = scalar_lea.vmem [#allocation5], 6144
    %v1892 = vld [vmem:[%s1891] sm:$0xff]
    %v1893 = vld [vmem:[%s1891 + $0x8] sm:$0xff]
    %v1894 = vld [vmem:[%s1891 + $0x10] sm:$0xff]
    %v1895 = vld [vmem:[%s1891 + $0x18] sm:$0xff]
    %v1896 = vld [vmem:[%s1891 + $0x20] sm:$0xff]
    %v1897 = vld [vmem:[%s1891 + $0x28] sm:$0xff]
    %v1898 = vld [vmem:[%s1891 + $0x30] sm:$0xff]
    %v1899 = vld [vmem:[%s1891 + $0x38] sm:$0xff]
    %v1900 = vld [vmem:[%s1891 + $0x40] sm:$0xff]
    %v1901 = vld [vmem:[%s1891 + $0x48] sm:$0xff]
    %v1902 = vld [vmem:[%s1891 + $0x50] sm:$0xff]
    %v1903 = vld [vmem:[%s1891 + $0x58] sm:$0xff]
    %v1904 = vld [vmem:[%s1891 + $0x60] sm:$0xff]
    %v1905 = vld [vmem:[%s1891 + $0x68] sm:$0xff]
    %v1906 = vld [vmem:[%s1891 + $0x70] sm:$0xff]
    %v1907 = vld [vmem:[%s1891 + $0x78] sm:$0xff]
    %v1908 = vld [vmem:[%s1891 + $0x80] sm:$0xff]
    %v1909 = vld [vmem:[%s1891 + $0x88] sm:$0xff]
    %v1910 = vld [vmem:[%s1891 + $0x90] sm:$0xff]
    %v1911 = vld [vmem:[%s1891 + $0x98] sm:$0xff]
    %v1912 = vld [vmem:[%s1891 + $0xa0] sm:$0xff]
    %v1913 = vld [vmem:[%s1891 + $0xa8] sm:$0xff]
    %v1914 = vld [vmem:[%s1891 + $0xb0] sm:$0xff]
    %v1915 = vld [vmem:[%s1891 + $0xb8] sm:$0xff]
    %v1916 = vld [vmem:[%s1891 + $0xc0] sm:$0xff]
    %v1917 = vld [vmem:[%s1891 + $0xc8] sm:$0xff]
    %v1918 = vld [vmem:[%s1891 + $0xd0] sm:$0xff]
    %v1919 = vld [vmem:[%s1891 + $0xd8] sm:$0xff]
    %v1920 = vld [vmem:[%s1891 + $0xe0] sm:$0xff]
    %v1921 = vld [vmem:[%s1891 + $0xe8] sm:$0xff]
    %v1922 = vld [vmem:[%s1891 + $0xf0] sm:$0xff]
    %v1923 = vld [vmem:[%s1891 + $0xf8] sm:$0xff]
    %v1924 = vld [vmem:[%s1891 + $0x100] sm:$0xff]
    %v1925 = vld [vmem:[%s1891 + $0x108] sm:$0xff]
    %v1926 = vld [vmem:[%s1891 + $0x110] sm:$0xff]
    %v1927 = vld [vmem:[%s1891 + $0x118] sm:$0xff]
    %v1928 = vld [vmem:[%s1891 + $0x120] sm:$0xff]
    %v1929 = vld [vmem:[%s1891 + $0x128] sm:$0xff]
    %v1930 = vld [vmem:[%s1891 + $0x130] sm:$0xff]
    %v1931 = vld [vmem:[%s1891 + $0x138] sm:$0xff]
    %v1932 = vld [vmem:[%s1891 + $0x140] sm:$0xff]
    %v1933 = vld [vmem:[%s1891 + $0x148] sm:$0xff]
    %v1934 = vld [vmem:[%s1891 + $0x150] sm:$0xff]
    %v1935 = vld [vmem:[%s1891 + $0x158] sm:$0xff]
    %v1936 = vld [vmem:[%s1891 + $0x160] sm:$0xff]
    %v1937 = vld [vmem:[%s1891 + $0x168] sm:$0xff]
    %v1938 = vld [vmem:[%s1891 + $0x170] sm:$0xff]
    %v1939 = vld [vmem:[%s1891 + $0x178] sm:$0xff]
    %v1940 = vld [vmem:[%s1891 + $0x180] sm:$0xff]
    %v1941 = vld [vmem:[%s1891 + $0x188] sm:$0xff]
    %v1942 = vld [vmem:[%s1891 + $0x190] sm:$0xff]
    %v1943 = vld [vmem:[%s1891 + $0x198] sm:$0xff]
    %v1944 = vld [vmem:[%s1891 + $0x1a0] sm:$0xff]
    %v1945 = vld [vmem:[%s1891 + $0x1a8] sm:$0xff]
    %v1946 = vld [vmem:[%s1891 + $0x1b0] sm:$0xff]
    %v1947 = vld [vmem:[%s1891 + $0x1b8] sm:$0xff]
    %v1948 = vld [vmem:[%s1891 + $0x1c0] sm:$0xff]
    %v1949 = vld [vmem:[%s1891 + $0x1c8] sm:$0xff]
    %v1950 = vld [vmem:[%s1891 + $0x1d0] sm:$0xff]
    %v1951 = vld [vmem:[%s1891 + $0x1d8] sm:$0xff]
    %v1952 = vld [vmem:[%s1891 + $0x1e0] sm:$0xff]
    %v1953 = vld [vmem:[%s1891 + $0x1e8] sm:$0xff]
    %v1954 = vld [vmem:[%s1891 + $0x1f0] sm:$0xff]
    %v1955 = vld [vmem:[%s1891 + $0x1f8] sm:$0xff]
    %v1956 = vld [vmem:[%s1891 + $0x200] sm:$0xff]
    %v1957 = vld [vmem:[%s1891 + $0x208] sm:$0xff]
    %v1958 = vld [vmem:[%s1891 + $0x210] sm:$0xff]
    %v1959 = vld [vmem:[%s1891 + $0x218] sm:$0xff]
    %v1960 = vld [vmem:[%s1891 + $0x220] sm:$0xff]
    %v1961 = vld [vmem:[%s1891 + $0x228] sm:$0xff]
    %v1962 = vld [vmem:[%s1891 + $0x230] sm:$0xff]
    %v1963 = vld [vmem:[%s1891 + $0x238] sm:$0xff]
    %v1964 = vld [vmem:[%s1891 + $0x240] sm:$0xff]
    %v1965 = vld [vmem:[%s1891 + $0x248] sm:$0xff]
    %v1966 = vld [vmem:[%s1891 + $0x250] sm:$0xff]
    %v1967 = vld [vmem:[%s1891 + $0x258] sm:$0xff]
    %v1968 = vld [vmem:[%s1891 + $0x260] sm:$0xff]
    %v1969 = vld [vmem:[%s1891 + $0x268] sm:$0xff]
    %v1970 = vld [vmem:[%s1891 + $0x270] sm:$0xff]
    %v1971 = vld [vmem:[%s1891 + $0x278] sm:$0xff]
    %v1972 = vld [vmem:[%s1891 + $0x280] sm:$0xff]
    %v1973 = vld [vmem:[%s1891 + $0x288] sm:$0xff]
    %v1974 = vld [vmem:[%s1891 + $0x290] sm:$0xff]
    %v1975 = vld [vmem:[%s1891 + $0x298] sm:$0xff]
    %v1976 = vld [vmem:[%s1891 + $0x2a0] sm:$0xff]
    %v1977 = vld [vmem:[%s1891 + $0x2a8] sm:$0xff]
    %v1978 = vld [vmem:[%s1891 + $0x2b0] sm:$0xff]
    %v1979 = vld [vmem:[%s1891 + $0x2b8] sm:$0xff]
    %v1980 = vld [vmem:[%s1891 + $0x2c0] sm:$0xff]
    %v1981 = vld [vmem:[%s1891 + $0x2c8] sm:$0xff]
    %v1982 = vld [vmem:[%s1891 + $0x2d0] sm:$0xff]
    %v1983 = vld [vmem:[%s1891 + $0x2d8] sm:$0xff]
    %v1984 = vld [vmem:[%s1891 + $0x2e0] sm:$0xff]
    %v1985 = vld [vmem:[%s1891 + $0x2e8] sm:$0xff]
    %v1986 = vld [vmem:[%s1891 + $0x2f0] sm:$0xff]
    %v1987 = vld [vmem:[%s1891 + $0x2f8] sm:$0xff]
    %v1988 = vld [vmem:[%s1891 + $0x300] sm:$0xff]
    %v1989 = vld [vmem:[%s1891 + $0x308] sm:$0xff]
    %v1990 = vld [vmem:[%s1891 + $0x310] sm:$0xff]
    %v1991 = vld [vmem:[%s1891 + $0x318] sm:$0xff]
    %v1992 = vld [vmem:[%s1891 + $0x320] sm:$0xff]
    %v1993 = vld [vmem:[%s1891 + $0x328] sm:$0xff]
    %v1994 = vld [vmem:[%s1891 + $0x330] sm:$0xff]
    %v1995 = vld [vmem:[%s1891 + $0x338] sm:$0xff]
    %v1996 = vld [vmem:[%s1891 + $0x340] sm:$0xff]
    %v1997 = vld [vmem:[%s1891 + $0x348] sm:$0xff]
    %v1998 = vld [vmem:[%s1891 + $0x350] sm:$0xff]
    %v1999 = vld [vmem:[%s1891 + $0x358] sm:$0xff]
    %v2000 = vld [vmem:[%s1891 + $0x360] sm:$0xff]
    %v2001 = vld [vmem:[%s1891 + $0x368] sm:$0xff]
    %v2002 = vld [vmem:[%s1891 + $0x370] sm:$0xff]
    %v2003 = vld [vmem:[%s1891 + $0x378] sm:$0xff]
    %v2004 = vld [vmem:[%s1891 + $0x380] sm:$0xff]
    %v2005 = vld [vmem:[%s1891 + $0x388] sm:$0xff]
    %v2006 = vld [vmem:[%s1891 + $0x390] sm:$0xff]
    %v2007 = vld [vmem:[%s1891 + $0x398] sm:$0xff]
    %v2008 = vld [vmem:[%s1891 + $0x3a0] sm:$0xff]
    %v2009 = vld [vmem:[%s1891 + $0x3a8] sm:$0xff]
    %v2010 = vld [vmem:[%s1891 + $0x3b0] sm:$0xff]
    %v2011 = vld [vmem:[%s1891 + $0x3b8] sm:$0xff]
    %v2012 = vld [vmem:[%s1891 + $0x3c0] sm:$0xff]
    %v2013 = vld [vmem:[%s1891 + $0x3c8] sm:$0xff]
    %v2014 = vld [vmem:[%s1891 + $0x3d0] sm:$0xff]
    %v2015 = vld [vmem:[%s1891 + $0x3d8] sm:$0xff]
    %v2016 = vld [vmem:[%s1891 + $0x3e0] sm:$0xff]
    %v2017 = vld [vmem:[%s1891 + $0x3e8] sm:$0xff]
    %v2018 = vld [vmem:[%s1891 + $0x3f0] sm:$0xff]
    %v2019 = vld [vmem:[%s1891 + $0x3f8] sm:$0xff]
    %2021 = vst [vmem:[#allocation1] ss:$2 sm:$0xff] %v1890
    %v2022 = vld.sshfl [vmem:[#allocation1] sm:$0xff pattern:$0x75316420]
    %v2023 = vld.sshfl [vmem:[#allocation1 + $0x8] sm:$0xff pattern:$0x75316420]
    %2026 = vmatpush.msra.mxu0 %v1952
    %2027 = vmatpush.msra.mxu0 %v1948
    %2028 = vmatpush.msra.mxu0 %v1944
    %2029 = vmatpush.msra.mxu0 %v1940
    %2030 = vmatpush.msra.mxu0 %v1936
    %2031 = vmatpush.msra.mxu0 %v1932
    %2032 = vmatpush.msra.mxu0 %v1928
    %2033 = vmatpush.msra.mxu0 %v1924
    %2034 = vmatpush.msra.mxu0 %v1920
    %2035 = vmatpush.msra.mxu0 %v1916
    %2036 = vmatpush.msra.mxu0 %v1912
    %2037 = vmatpush.msra.mxu0 %v1908
    %2038 = vmatpush.msra.mxu0 %v1904
    %2039 = vmatpush.msra.mxu0 %v1900
    %2040 = vmatpush.msra.mxu0 %v1896
    %2041 = vmatpush.msra.mxu0 %v1892
    %2042 = vmatmul.f32.gmra.mxu0 %v2022
    %v2043 = vpop.f32.mrf.mxu0
    %v2044 = vadd.f32 0.0, %v2043
    %2045 = vdwg.mxu0
    %2046 = vmatpush.msra.mxu0 %v2016
    %2047 = vmatpush.msra.mxu0 %v2012
    %2048 = vmatpush.msra.mxu0 %v2008
    %2049 = vmatpush.msra.mxu0 %v2004
    %2050 = vmatpush.msra.mxu0 %v2000
    %2051 = vmatpush.msra.mxu0 %v1996
    %2052 = vmatpush.msra.mxu0 %v1992
    %2053 = vmatpush.msra.mxu0 %v1988
    %2054 = vmatpush.msra.mxu0 %v1984
    %2055 = vmatpush.msra.mxu0 %v1980
    %2056 = vmatpush.msra.mxu0 %v1976
    %2057 = vmatpush.msra.mxu0 %v1972
    %2058 = vmatpush.msra.mxu0 %v1968
    %2059 = vmatpush.msra.mxu0 %v1964
    %2060 = vmatpush.msra.mxu0 %v1960
    %2061 = vmatpush.msra.mxu0 %v1956
    %2062 = vmatmul.f32.gmra.mxu0 %v2023
    %v2063 = vpop.f32.mrf.mxu0
    %v2064 = vadd.f32 %v2044, %v2063
    %2065 = vdwg.mxu0
    %2066 = vmatpush.msra.mxu0 %v1953
    %2067 = vmatpush.msra.mxu0 %v1949
    %2068 = vmatpush.msra.mxu0 %v1945
    %2069 = vmatpush.msra.mxu0 %v1941
    %2070 = vmatpush.msra.mxu0 %v1937
    %2071 = vmatpush.msra.mxu0 %v1933
    %2072 = vmatpush.msra.mxu0 %v1929
    %2073 = vmatpush.msra.mxu0 %v1925
    %2074 = vmatpush.msra.mxu0 %v1921
    %2075 = vmatpush.msra.mxu0 %v1917
    %2076 = vmatpush.msra.mxu0 %v1913
    %2077 = vmatpush.msra.mxu0 %v1909
    %2078 = vmatpush.msra.mxu0 %v1905
    %2079 = vmatpush.msra.mxu0 %v1901
    %2080 = vmatpush.msra.mxu0 %v1897
    %2081 = vmatpush.msra.mxu0 %v1893
    %2082 = vmatmul.f32.gmra.mxu0 %v2022
    %v2083 = vpop.f32.mrf.mxu0
    %v2084 = vadd.f32 0.0, %v2083
    %2085 = vdwg.mxu0
    %2086 = vmatpush.msra.mxu0 %v2017
    %2087 = vmatpush.msra.mxu0 %v2013
    %2088 = vmatpush.msra.mxu0 %v2009
    %2089 = vmatpush.msra.mxu0 %v2005
    %2090 = vmatpush.msra.mxu0 %v2001
    %2091 = vmatpush.msra.mxu0 %v1997
    %2092 = vmatpush.msra.mxu0 %v1993
    %2093 = vmatpush.msra.mxu0 %v1989
    %2094 = vmatpush.msra.mxu0 %v1985
    %2095 = vmatpush.msra.mxu0 %v1981
    %2096 = vmatpush.msra.mxu0 %v1977
    %2097 = vmatpush.msra.mxu0 %v1973
    %2098 = vmatpush.msra.mxu0 %v1969
    %2099 = vmatpush.msra.mxu0 %v1965
    %2100 = vmatpush.msra.mxu0 %v1961
    %2101 = vmatpush.msra.mxu0 %v1957
    %2102 = vmatmul.f32.gmra.mxu0 %v2023
    %v2103 = vpop.f32.mrf.mxu0
    %v2104 = vadd.f32 %v2084, %v2103
    %2105 = vdwg.mxu0
    %2106 = vmatpush.msra.mxu0 %v1954
    %2107 = vmatpush.msra.mxu0 %v1950
    %2108 = vmatpush.msra.mxu0 %v1946
    %2109 = vmatpush.msra.mxu0 %v1942
    %2110 = vmatpush.msra.mxu0 %v1938
    %2111 = vmatpush.msra.mxu0 %v1934
    %2112 = vmatpush.msra.mxu0 %v1930
    %2113 = vmatpush.msra.mxu0 %v1926
    %2114 = vmatpush.msra.mxu0 %v1922
    %2115 = vmatpush.msra.mxu0 %v1918
    %2116 = vmatpush.msra.mxu0 %v1914
    %2117 = vmatpush.msra.mxu0 %v1910
    %2118 = vmatpush.msra.mxu0 %v1906
    %2119 = vmatpush.msra.mxu0 %v1902
    %2120 = vmatpush.msra.mxu0 %v1898
    %2121 = vmatpush.msra.mxu0 %v1894
    %2122 = vmatmul.f32.gmra.mxu0 %v2022
    %v2123 = vpop.f32.mrf.mxu0
    %v2124 = vadd.f32 0.0, %v2123
    %2125 = vdwg.mxu0
    %2126 = vmatpush.msra.mxu0 %v2018
    %2127 = vmatpush.msra.mxu0 %v2014
    %2128 = vmatpush.msra.mxu0 %v2010
    %2129 = vmatpush.msra.mxu0 %v2006
    %2130 = vmatpush.msra.mxu0 %v2002
    %2131 = vmatpush.msra.mxu0 %v1998
    %2132 = vmatpush.msra.mxu0 %v1994
    %2133 = vmatpush.msra.mxu0 %v1990
    %2134 = vmatpush.msra.mxu0 %v1986
    %2135 = vmatpush.msra.mxu0 %v1982
    %2136 = vmatpush.msra.mxu0 %v1978
    %2137 = vmatpush.msra.mxu0 %v1974
    %2138 = vmatpush.msra.mxu0 %v1970
    %2139 = vmatpush.msra.mxu0 %v1966
    %2140 = vmatpush.msra.mxu0 %v1962
    %2141 = vmatpush.msra.mxu0 %v1958
    %2142 = vmatmul.f32.gmra.mxu0 %v2023
    %v2143 = vpop.f32.mrf.mxu0
    %v2144 = vadd.f32 %v2124, %v2143
    %2145 = vdwg.mxu0
    %2146 = vmatpush.msra.mxu0 %v1955
    %2147 = vmatpush.msra.mxu0 %v1951
    %2148 = vmatpush.msra.mxu0 %v1947
    %2149 = vmatpush.msra.mxu0 %v1943
    %2150 = vmatpush.msra.mxu0 %v1939
    %2151 = vmatpush.msra.mxu0 %v1935
    %2152 = vmatpush.msra.mxu0 %v1931
    %2153 = vmatpush.msra.mxu0 %v1927
    %2154 = vmatpush.msra.mxu0 %v1923
    %2155 = vmatpush.msra.mxu0 %v1919
    %2156 = vmatpush.msra.mxu0 %v1915
    %2157 = vmatpush.msra.mxu0 %v1911
    %2158 = vmatpush.msra.mxu0 %v1907
    %2159 = vmatpush.msra.mxu0 %v1903
    %2160 = vmatpush.msra.mxu0 %v1899
    %2161 = vmatpush.msra.mxu0 %v1895
    %2162 = vmatmul.f32.gmra.mxu0 %v2022
    %v2163 = vpop.f32.mrf.mxu0
    %v2164 = vadd.f32 0.0, %v2163
    %2165 = vdwg.mxu0
    %2166 = vmatpush.msra.mxu0 %v2019
    %2167 = vmatpush.msra.mxu0 %v2015
    %2168 = vmatpush.msra.mxu0 %v2011
    %2169 = vmatpush.msra.mxu0 %v2007
    %2170 = vmatpush.msra.mxu0 %v2003
    %2171 = vmatpush.msra.mxu0 %v1999
    %2172 = vmatpush.msra.mxu0 %v1995
    %2173 = vmatpush.msra.mxu0 %v1991
    %2174 = vmatpush.msra.mxu0 %v1987
    %2175 = vmatpush.msra.mxu0 %v1983
    %2176 = vmatpush.msra.mxu0 %v1979
    %2177 = vmatpush.msra.mxu0 %v1975
    %2178 = vmatpush.msra.mxu0 %v1971
    %2179 = vmatpush.msra.mxu0 %v1967
    %2180 = vmatpush.msra.mxu0 %v1963
    %2181 = vmatpush.msra.mxu0 %v1959
    %2182 = vmatmul.f32.gmra.mxu0 %v2023
    %v2183 = vpop.f32.mrf.mxu0
    %v2184 = vadd.f32 %v2164, %v2183
    %2185 = vdwg.mxu0
    %v2190 = vrot.slane %v2104, 4
    %v2191 = vrot.slane %v2184, 4
    %v2192 = vsel %vm343, %v2064, %v2190
    %v2193 = vsel %vm343, %v2144, %v2191
    %2196 = vst [vmem:[#allocation7 + $0x60] sm:$0xff] %v2192
    %2197 = vst [vmem:[#allocation7 + $0x68] sm:$0xff] %v2193
    %v2198 = vld [vmem:[#allocation2 + $0x38] sm:$0xff]
    %s2199 = scalar_lea.vmem [#allocation5], 7168
    %v2200 = vld [vmem:[%s2199] sm:$0xff]
    %v2201 = vld [vmem:[%s2199 + $0x8] sm:$0xff]
    %v2202 = vld [vmem:[%s2199 + $0x10] sm:$0xff]
    %v2203 = vld [vmem:[%s2199 + $0x18] sm:$0xff]
    %v2204 = vld [vmem:[%s2199 + $0x20] sm:$0xff]
    %v2205 = vld [vmem:[%s2199 + $0x28] sm:$0xff]
    %v2206 = vld [vmem:[%s2199 + $0x30] sm:$0xff]
    %v2207 = vld [vmem:[%s2199 + $0x38] sm:$0xff]
    %v2208 = vld [vmem:[%s2199 + $0x40] sm:$0xff]
    %v2209 = vld [vmem:[%s2199 + $0x48] sm:$0xff]
    %v2210 = vld [vmem:[%s2199 + $0x50] sm:$0xff]
    %v2211 = vld [vmem:[%s2199 + $0x58] sm:$0xff]
    %v2212 = vld [vmem:[%s2199 + $0x60] sm:$0xff]
    %v2213 = vld [vmem:[%s2199 + $0x68] sm:$0xff]
    %v2214 = vld [vmem:[%s2199 + $0x70] sm:$0xff]
    %v2215 = vld [vmem:[%s2199 + $0x78] sm:$0xff]
    %v2216 = vld [vmem:[%s2199 + $0x80] sm:$0xff]
    %v2217 = vld [vmem:[%s2199 + $0x88] sm:$0xff]
    %v2218 = vld [vmem:[%s2199 + $0x90] sm:$0xff]
    %v2219 = vld [vmem:[%s2199 + $0x98] sm:$0xff]
    %v2220 = vld [vmem:[%s2199 + $0xa0] sm:$0xff]
    %v2221 = vld [vmem:[%s2199 + $0xa8] sm:$0xff]
    %v2222 = vld [vmem:[%s2199 + $0xb0] sm:$0xff]
    %v2223 = vld [vmem:[%s2199 + $0xb8] sm:$0xff]
    %v2224 = vld [vmem:[%s2199 + $0xc0] sm:$0xff]
    %v2225 = vld [vmem:[%s2199 + $0xc8] sm:$0xff]
    %v2226 = vld [vmem:[%s2199 + $0xd0] sm:$0xff]
    %v2227 = vld [vmem:[%s2199 + $0xd8] sm:$0xff]
    %v2228 = vld [vmem:[%s2199 + $0xe0] sm:$0xff]
    %v2229 = vld [vmem:[%s2199 + $0xe8] sm:$0xff]
    %v2230 = vld [vmem:[%s2199 + $0xf0] sm:$0xff]
    %v2231 = vld [vmem:[%s2199 + $0xf8] sm:$0xff]
    %v2232 = vld [vmem:[%s2199 + $0x100] sm:$0xff]
    %v2233 = vld [vmem:[%s2199 + $0x108] sm:$0xff]
    %v2234 = vld [vmem:[%s2199 + $0x110] sm:$0xff]
    %v2235 = vld [vmem:[%s2199 + $0x118] sm:$0xff]
    %v2236 = vld [vmem:[%s2199 + $0x120] sm:$0xff]
    %v2237 = vld [vmem:[%s2199 + $0x128] sm:$0xff]
    %v2238 = vld [vmem:[%s2199 + $0x130] sm:$0xff]
    %v2239 = vld [vmem:[%s2199 + $0x138] sm:$0xff]
    %v2240 = vld [vmem:[%s2199 + $0x140] sm:$0xff]
    %v2241 = vld [vmem:[%s2199 + $0x148] sm:$0xff]
    %v2242 = vld [vmem:[%s2199 + $0x150] sm:$0xff]
    %v2243 = vld [vmem:[%s2199 + $0x158] sm:$0xff]
    %v2244 = vld [vmem:[%s2199 + $0x160] sm:$0xff]
    %v2245 = vld [vmem:[%s2199 + $0x168] sm:$0xff]
    %v2246 = vld [vmem:[%s2199 + $0x170] sm:$0xff]
    %v2247 = vld [vmem:[%s2199 + $0x178] sm:$0xff]
    %v2248 = vld [vmem:[%s2199 + $0x180] sm:$0xff]
    %v2249 = vld [vmem:[%s2199 + $0x188] sm:$0xff]
    %v2250 = vld [vmem:[%s2199 + $0x190] sm:$0xff]
    %v2251 = vld [vmem:[%s2199 + $0x198] sm:$0xff]
    %v2252 = vld [vmem:[%s2199 + $0x1a0] sm:$0xff]
    %v2253 = vld [vmem:[%s2199 + $0x1a8] sm:$0xff]
    %v2254 = vld [vmem:[%s2199 + $0x1b0] sm:$0xff]
    %v2255 = vld [vmem:[%s2199 + $0x1b8] sm:$0xff]
    %v2256 = vld [vmem:[%s2199 + $0x1c0] sm:$0xff]
    %v2257 = vld [vmem:[%s2199 + $0x1c8] sm:$0xff]
    %v2258 = vld [vmem:[%s2199 + $0x1d0] sm:$0xff]
    %v2259 = vld [vmem:[%s2199 + $0x1d8] sm:$0xff]
    %v2260 = vld [vmem:[%s2199 + $0x1e0] sm:$0xff]
    %v2261 = vld [vmem:[%s2199 + $0x1e8] sm:$0xff]
    %v2262 = vld [vmem:[%s2199 + $0x1f0] sm:$0xff]
    %v2263 = vld [vmem:[%s2199 + $0x1f8] sm:$0xff]
    %v2264 = vld [vmem:[%s2199 + $0x200] sm:$0xff]
    %v2265 = vld [vmem:[%s2199 + $0x208] sm:$0xff]
    %v2266 = vld [vmem:[%s2199 + $0x210] sm:$0xff]
    %v2267 = vld [vmem:[%s2199 + $0x218] sm:$0xff]
    %v2268 = vld [vmem:[%s2199 + $0x220] sm:$0xff]
    %v2269 = vld [vmem:[%s2199 + $0x228] sm:$0xff]
    %v2270 = vld [vmem:[%s2199 + $0x230] sm:$0xff]
    %v2271 = vld [vmem:[%s2199 + $0x238] sm:$0xff]
    %v2272 = vld [vmem:[%s2199 + $0x240] sm:$0xff]
    %v2273 = vld [vmem:[%s2199 + $0x248] sm:$0xff]
    %v2274 = vld [vmem:[%s2199 + $0x250] sm:$0xff]
    %v2275 = vld [vmem:[%s2199 + $0x258] sm:$0xff]
    %v2276 = vld [vmem:[%s2199 + $0x260] sm:$0xff]
    %v2277 = vld [vmem:[%s2199 + $0x268] sm:$0xff]
    %v2278 = vld [vmem:[%s2199 + $0x270] sm:$0xff]
    %v2279 = vld [vmem:[%s2199 + $0x278] sm:$0xff]
    %v2280 = vld [vmem:[%s2199 + $0x280] sm:$0xff]
    %v2281 = vld [vmem:[%s2199 + $0x288] sm:$0xff]
    %v2282 = vld [vmem:[%s2199 + $0x290] sm:$0xff]
    %v2283 = vld [vmem:[%s2199 + $0x298] sm:$0xff]
    %v2284 = vld [vmem:[%s2199 + $0x2a0] sm:$0xff]
    %v2285 = vld [vmem:[%s2199 + $0x2a8] sm:$0xff]
    %v2286 = vld [vmem:[%s2199 + $0x2b0] sm:$0xff]
    %v2287 = vld [vmem:[%s2199 + $0x2b8] sm:$0xff]
    %v2288 = vld [vmem:[%s2199 + $0x2c0] sm:$0xff]
    %v2289 = vld [vmem:[%s2199 + $0x2c8] sm:$0xff]
    %v2290 = vld [vmem:[%s2199 + $0x2d0] sm:$0xff]
    %v2291 = vld [vmem:[%s2199 + $0x2d8] sm:$0xff]
    %v2292 = vld [vmem:[%s2199 + $0x2e0] sm:$0xff]
    %v2293 = vld [vmem:[%s2199 + $0x2e8] sm:$0xff]
    %v2294 = vld [vmem:[%s2199 + $0x2f0] sm:$0xff]
    %v2295 = vld [vmem:[%s2199 + $0x2f8] sm:$0xff]
    %v2296 = vld [vmem:[%s2199 + $0x300] sm:$0xff]
    %v2297 = vld [vmem:[%s2199 + $0x308] sm:$0xff]
    %v2298 = vld [vmem:[%s2199 + $0x310] sm:$0xff]
    %v2299 = vld [vmem:[%s2199 + $0x318] sm:$0xff]
    %v2300 = vld [vmem:[%s2199 + $0x320] sm:$0xff]
    %v2301 = vld [vmem:[%s2199 + $0x328] sm:$0xff]
    %v2302 = vld [vmem:[%s2199 + $0x330] sm:$0xff]
    %v2303 = vld [vmem:[%s2199 + $0x338] sm:$0xff]
    %v2304 = vld [vmem:[%s2199 + $0x340] sm:$0xff]
    %v2305 = vld [vmem:[%s2199 + $0x348] sm:$0xff]
    %v2306 = vld [vmem:[%s2199 + $0x350] sm:$0xff]
    %v2307 = vld [vmem:[%s2199 + $0x358] sm:$0xff]
    %v2308 = vld [vmem:[%s2199 + $0x360] sm:$0xff]
    %v2309 = vld [vmem:[%s2199 + $0x368] sm:$0xff]
    %v2310 = vld [vmem:[%s2199 + $0x370] sm:$0xff]
    %v2311 = vld [vmem:[%s2199 + $0x378] sm:$0xff]
    %v2312 = vld [vmem:[%s2199 + $0x380] sm:$0xff]
    %v2313 = vld [vmem:[%s2199 + $0x388] sm:$0xff]
    %v2314 = vld [vmem:[%s2199 + $0x390] sm:$0xff]
    %v2315 = vld [vmem:[%s2199 + $0x398] sm:$0xff]
    %v2316 = vld [vmem:[%s2199 + $0x3a0] sm:$0xff]
    %v2317 = vld [vmem:[%s2199 + $0x3a8] sm:$0xff]
    %v2318 = vld [vmem:[%s2199 + $0x3b0] sm:$0xff]
    %v2319 = vld [vmem:[%s2199 + $0x3b8] sm:$0xff]
    %v2320 = vld [vmem:[%s2199 + $0x3c0] sm:$0xff]
    %v2321 = vld [vmem:[%s2199 + $0x3c8] sm:$0xff]
    %v2322 = vld [vmem:[%s2199 + $0x3d0] sm:$0xff]
    %v2323 = vld [vmem:[%s2199 + $0x3d8] sm:$0xff]
    %v2324 = vld [vmem:[%s2199 + $0x3e0] sm:$0xff]
    %v2325 = vld [vmem:[%s2199 + $0x3e8] sm:$0xff]
    %v2326 = vld [vmem:[%s2199 + $0x3f0] sm:$0xff]
    %v2327 = vld [vmem:[%s2199 + $0x3f8] sm:$0xff]
    %2329 = vst [vmem:[#allocation1] ss:$2 sm:$0xff] %v2198
    %v2330 = vld.sshfl [vmem:[#allocation1] sm:$0xff pattern:$0x75316420]
    %v2331 = vld.sshfl [vmem:[#allocation1 + $0x8] sm:$0xff pattern:$0x75316420]
    %2334 = vmatpush.msra.mxu0 %v2260
    %2335 = vmatpush.msra.mxu0 %v2256
    %2336 = vmatpush.msra.mxu0 %v2252
    %2337 = vmatpush.msra.mxu0 %v2248
    %2338 = vmatpush.msra.mxu0 %v2244
    %2339 = vmatpush.msra.mxu0 %v2240
    %2340 = vmatpush.msra.mxu0 %v2236
    %2341 = vmatpush.msra.mxu0 %v2232
    %2342 = vmatpush.msra.mxu0 %v2228
    %2343 = vmatpush.msra.mxu0 %v2224
    %2344 = vmatpush.msra.mxu0 %v2220
    %2345 = vmatpush.msra.mxu0 %v2216
    %2346 = vmatpush.msra.mxu0 %v2212
    %2347 = vmatpush.msra.mxu0 %v2208
    %2348 = vmatpush.msra.mxu0 %v2204
    %2349 = vmatpush.msra.mxu0 %v2200
    %2350 = vmatmul.f32.gmra.mxu0 %v2330
    %v2351 = vpop.f32.mrf.mxu0
    %v2352 = vadd.f32 0.0, %v2351
    %2353 = vdwg.mxu0
    %2354 = vmatpush.msra.mxu0 %v2324
    %2355 = vmatpush.msra.mxu0 %v2320
    %2356 = vmatpush.msra.mxu0 %v2316
    %2357 = vmatpush.msra.mxu0 %v2312
    %2358 = vmatpush.msra.mxu0 %v2308
    %2359 = vmatpush.msra.mxu0 %v2304
    %2360 = vmatpush.msra.mxu0 %v2300
    %2361 = vmatpush.msra.mxu0 %v2296
    %2362 = vmatpush.msra.mxu0 %v2292
    %2363 = vmatpush.msra.mxu0 %v2288
    %2364 = vmatpush.msra.mxu0 %v2284
    %2365 = vmatpush.msra.mxu0 %v2280
    %2366 = vmatpush.msra.mxu0 %v2276
    %2367 = vmatpush.msra.mxu0 %v2272
    %2368 = vmatpush.msra.mxu0 %v2268
    %2369 = vmatpush.msra.mxu0 %v2264
    %2370 = vmatmul.f32.gmra.mxu0 %v2331
    %v2371 = vpop.f32.mrf.mxu0
    %v2372 = vadd.f32 %v2352, %v2371
    %2373 = vdwg.mxu0
    %2374 = vmatpush.msra.mxu0 %v2261
    %2375 = vmatpush.msra.mxu0 %v2257
    %2376 = vmatpush.msra.mxu0 %v2253
    %2377 = vmatpush.msra.mxu0 %v2249
    %2378 = vmatpush.msra.mxu0 %v2245
    %2379 = vmatpush.msra.mxu0 %v2241
    %2380 = vmatpush.msra.mxu0 %v2237
    %2381 = vmatpush.msra.mxu0 %v2233
    %2382 = vmatpush.msra.mxu0 %v2229
    %2383 = vmatpush.msra.mxu0 %v2225
    %2384 = vmatpush.msra.mxu0 %v2221
    %2385 = vmatpush.msra.mxu0 %v2217
    %2386 = vmatpush.msra.mxu0 %v2213
    %2387 = vmatpush.msra.mxu0 %v2209
    %2388 = vmatpush.msra.mxu0 %v2205
    %2389 = vmatpush.msra.mxu0 %v2201
    %2390 = vmatmul.f32.gmra.mxu0 %v2330
    %v2391 = vpop.f32.mrf.mxu0
    %v2392 = vadd.f32 0.0, %v2391
    %2393 = vdwg.mxu0
    %2394 = vmatpush.msra.mxu0 %v2325
    %2395 = vmatpush.msra.mxu0 %v2321
    %2396 = vmatpush.msra.mxu0 %v2317
    %2397 = vmatpush.msra.mxu0 %v2313
    %2398 = vmatpush.msra.mxu0 %v2309
    %2399 = vmatpush.msra.mxu0 %v2305
    %2400 = vmatpush.msra.mxu0 %v2301
    %2401 = vmatpush.msra.mxu0 %v2297
    %2402 = vmatpush.msra.mxu0 %v2293
    %2403 = vmatpush.msra.mxu0 %v2289
    %2404 = vmatpush.msra.mxu0 %v2285
    %2405 = vmatpush.msra.mxu0 %v2281
    %2406 = vmatpush.msra.mxu0 %v2277
    %2407 = vmatpush.msra.mxu0 %v2273
    %2408 = vmatpush.msra.mxu0 %v2269
    %2409 = vmatpush.msra.mxu0 %v2265
    %2410 = vmatmul.f32.gmra.mxu0 %v2331
    %v2411 = vpop.f32.mrf.mxu0
    %v2412 = vadd.f32 %v2392, %v2411
    %2413 = vdwg.mxu0
    %2414 = vmatpush.msra.mxu0 %v2262
    %2415 = vmatpush.msra.mxu0 %v2258
    %2416 = vmatpush.msra.mxu0 %v2254
    %2417 = vmatpush.msra.mxu0 %v2250
    %2418 = vmatpush.msra.mxu0 %v2246
    %2419 = vmatpush.msra.mxu0 %v2242
    %2420 = vmatpush.msra.mxu0 %v2238
    %2421 = vmatpush.msra.mxu0 %v2234
    %2422 = vmatpush.msra.mxu0 %v2230
    %2423 = vmatpush.msra.mxu0 %v2226
    %2424 = vmatpush.msra.mxu0 %v2222
    %2425 = vmatpush.msra.mxu0 %v2218
    %2426 = vmatpush.msra.mxu0 %v2214
    %2427 = vmatpush.msra.mxu0 %v2210
    %2428 = vmatpush.msra.mxu0 %v2206
    %2429 = vmatpush.msra.mxu0 %v2202
    %2430 = vmatmul.f32.gmra.mxu0 %v2330
    %v2431 = vpop.f32.mrf.mxu0
    %v2432 = vadd.f32 0.0, %v2431
    %2433 = vdwg.mxu0
    %2434 = vmatpush.msra.mxu0 %v2326
    %2435 = vmatpush.msra.mxu0 %v2322
    %2436 = vmatpush.msra.mxu0 %v2318
    %2437 = vmatpush.msra.mxu0 %v2314
    %2438 = vmatpush.msra.mxu0 %v2310
    %2439 = vmatpush.msra.mxu0 %v2306
    %2440 = vmatpush.msra.mxu0 %v2302
    %2441 = vmatpush.msra.mxu0 %v2298
    %2442 = vmatpush.msra.mxu0 %v2294
    %2443 = vmatpush.msra.mxu0 %v2290
    %2444 = vmatpush.msra.mxu0 %v2286
    %2445 = vmatpush.msra.mxu0 %v2282
    %2446 = vmatpush.msra.mxu0 %v2278
    %2447 = vmatpush.msra.mxu0 %v2274
    %2448 = vmatpush.msra.mxu0 %v2270
    %2449 = vmatpush.msra.mxu0 %v2266
    %2450 = vmatmul.f32.gmra.mxu0 %v2331
    %v2451 = vpop.f32.mrf.mxu0
    %v2452 = vadd.f32 %v2432, %v2451
    %2453 = vdwg.mxu0
    %2454 = vmatpush.msra.mxu0 %v2263
    %2455 = vmatpush.msra.mxu0 %v2259
    %2456 = vmatpush.msra.mxu0 %v2255
    %2457 = vmatpush.msra.mxu0 %v2251
    %2458 = vmatpush.msra.mxu0 %v2247
    %2459 = vmatpush.msra.mxu0 %v2243
    %2460 = vmatpush.msra.mxu0 %v2239
    %2461 = vmatpush.msra.mxu0 %v2235
    %2462 = vmatpush.msra.mxu0 %v2231
    %2463 = vmatpush.msra.mxu0 %v2227
    %2464 = vmatpush.msra.mxu0 %v2223
    %2465 = vmatpush.msra.mxu0 %v2219
    %2466 = vmatpush.msra.mxu0 %v2215
    %2467 = vmatpush.msra.mxu0 %v2211
    %2468 = vmatpush.msra.mxu0 %v2207
    %2469 = vmatpush.msra.mxu0 %v2203
    %2470 = vmatmul.f32.gmra.mxu0 %v2330
    %v2471 = vpop.f32.mrf.mxu0
    %v2472 = vadd.f32 0.0, %v2471
    %2473 = vdwg.mxu0
    %2474 = vmatpush.msra.mxu0 %v2327
    %2475 = vmatpush.msra.mxu0 %v2323
    %2476 = vmatpush.msra.mxu0 %v2319
    %2477 = vmatpush.msra.mxu0 %v2315
    %2478 = vmatpush.msra.mxu0 %v2311
    %2479 = vmatpush.msra.mxu0 %v2307
    %2480 = vmatpush.msra.mxu0 %v2303
    %2481 = vmatpush.msra.mxu0 %v2299
    %2482 = vmatpush.msra.mxu0 %v2295
    %2483 = vmatpush.msra.mxu0 %v2291
    %2484 = vmatpush.msra.mxu0 %v2287
    %2485 = vmatpush.msra.mxu0 %v2283
    %2486 = vmatpush.msra.mxu0 %v2279
    %2487 = vmatpush.msra.mxu0 %v2275
    %2488 = vmatpush.msra.mxu0 %v2271
    %2489 = vmatpush.msra.mxu0 %v2267
    %2490 = vmatmul.f32.gmra.mxu0 %v2331
    %v2491 = vpop.f32.mrf.mxu0
    %v2492 = vadd.f32 %v2472, %v2491
    %2493 = vdwg.mxu0
    %v2498 = vrot.slane %v2412, 4
    %v2499 = vrot.slane %v2492, 4
    %v2500 = vsel %vm343, %v2372, %v2498
    %v2501 = vsel %vm343, %v2452, %v2499
    %2504 = vst [vmem:[#allocation7 + $0x70] sm:$0xff] %v2500
    %2505 = vst [vmem:[#allocation7 + $0x78] sm:$0xff] %v2501
    // Predicated region
    $region18: #{tpu_custom_call.1} parent=1 // pred_check
      _
    $region19: #{tpu_custom_call.1} parent=1 // pred_check_branch
      %2507 = sbr.rel (0) target = $region21
    $region20: #{tpu_custom_call.1} parent=1 // pred_region
      %2509 = vsyncadd [#allocation4], 0
      %s2511 = sshll.u32 [#allocation7], 4
      %s2512 = int_to_ptr.vmem [resolvable:$true] %s2511
      %s2513 = sshll.u32 %s2, 4
      %s2514 = int_to_ptr.hbm [resolvable:$true] %s2513
      %2516 = dma.vmem_to_hbm [thread:$0]  %s2512, 2048, %s2514, [#allocation4]
    $region21: #{tpu_custom_call.1} parent=1 // pred_fallthru
      _
    // Predicated region
    $region22: #{tpu_custom_call.1} parent=1 // pred_check
      _
    $region23: #{tpu_custom_call.1} parent=1 // pred_check_branch
      %2518 = sbr.rel (0) target = $region25
    $region24: #{tpu_custom_call.1} parent=1 // pred_region
      %2520 = dma.done [#allocation4], 2048
    $region25: #{tpu_custom_call.1} parent=1 // pred_fallthru
      _
    %2521 = vsyncpa [#allocation3], 1
    %2522 = vsyncpa [#allocation6], 1
    %2523 = vsyncpa [#allocation4], 1

</llo_original>
